<compile_context>
chip_gen: v5e
topology: v5e:2x2
jax: 0.10.0
libtpu: 0.0.40
codegen_flags: <defaults>
</compile_context>

<pallas_src>
import functools

import jax
import jax.numpy as jnp
from jax import lax
from jax.experimental import pallas as pl
from jax.experimental.pallas import tpu as pltpu

_DILATION = 2   # both convs in DBlock_inv2 use dilation=2
_K = 3          # kernel_size


def _zero_halo(pad_ref, H, W, d):
    """Zero only the halo strips of a (H+2d, W+2d, C) VMEM pad buffer.

    The interior (H, W, C) window is always fully overwritten afterwards, so
    together every element is defined each grid step (safe even when the
    batch grid is megacore-split and scratch starts uninitialized per core).
    """
    Hp, Wp = H + 2 * d, W + 2 * d
    c = pad_ref.shape[-1]
    pad_ref[0:d, :, :] = jnp.zeros((d, Wp, c), jnp.float32)            # top
    pad_ref[d + H:Hp, :, :] = jnp.zeros((d, Wp, c), jnp.float32)       # bottom
    pad_ref[d:d + H, 0:d, :] = jnp.zeros((H, d, c), jnp.float32)       # left
    pad_ref[d:d + H, d + W:Wp, :] = jnp.zeros((H, d, c), jnp.float32)  # right


def _conv3x3_bias_relu_from_padded(xpad_ref, w_ref, b_ref, H, W, dilation):
    """Dilated 3x3 conv read from an already zero-padded VMEM ref, + bias + ReLU.

    xpad_ref : VMEM ref (H + 2d, W + 2d, Cin), zero halo already in place.
    w_ref    : VMEM ref (3, 3, Cin, Cout).
    b_ref    : VMEM ref (1, Cout).
    returns  : (H, W, Cout) float32 value.
    """
    cout = w_ref.shape[-1]
    # Fold the bias into the accumulator init.
    acc = jnp.broadcast_to(b_ref[0][None, None, :], (H, W, cout)).astype(jnp.float32)
    # 3x3 dilated conv = 9 shifted (H, W, Cin) x (Cin, Cout) MXU contractions.
    for kh in range(_K):
        for kw in range(_K):
            patch = xpad_ref[pl.ds(kh * dilation, H), pl.ds(kw * dilation, W), :]
            acc = acc + lax.dot_general(
                patch, w_ref[kh, kw],
                dimension_numbers=(((2,), (0,)), ((), ())),
                preferred_element_type=jnp.float32)
    return jnp.maximum(acc, 0.0)   # ReLU(inplace=True)


def _dblock_inv2_kernel(x_ref, w1_ref, b1_ref, w2_ref, b2_ref, o_ref,
                        xpad_ref, ypad_ref, *, H, W):
    """One grid step = one batch element; both conv stages fused on-chip.

    x_ref  : (1, H, W, Cin)        input tile (VMEM, auto-DMA'd)
    w*_ref : (3, 3, Cin, Cout)     weights (VMEM-resident across grid)
    b*_ref : (1, Cout)             biases
    o_ref  : (1, H, W, Cout)       output tile
    xpad_ref, ypad_ref : VMEM scratch holding the zero-padded stage inputs.
    """
    d = _DILATION

    # ---- stage 1: zero halo strips, fill interior, conv(d=2)+bias+ReLU -----
    _zero_halo(xpad_ref, H, W, d)
    xpad_ref[pl.ds(d, H), pl.ds(d, W), :] = x_ref[0].astype(jnp.float32)
    y1 = _conv3x3_bias_relu_from_padded(xpad_ref, w1_ref, b1_ref, H, W, d)

    # ---- stage 2: intermediate stays on-chip, conv(d=2)+bias+ReLU ----------
    _zero_halo(ypad_ref, H, W, d)
    ypad_ref[pl.ds(d, H), pl.ds(d, W), :] = y1
    y2 = _conv3x3_bias_relu_from_padded(ypad_ref, w2_ref, b2_ref, H, W, d)

    o_ref[0] = y2.astype(o_ref.dtype)


def dblock_inv2_forward_nhwc(x_nhwc, params):
    """Fused DBlock_inv2 forward, NHWC in / NHWC out (transpose-free path)."""
    N, H, W, Cin = x_nhwc.shape
    w1, b1, w2, b2 = params["w1"], params["b1"], params["w2"], params["b2"]
    Cmid = w1.shape[-1]
    Cout = w2.shape[-1]
    assert w1.shape == (_K, _K, Cin, Cmid)
    assert w2.shape == (_K, _K, Cmid, Cout)

    d = _DILATION
    Hp, Wp = H + 2 * d, W + 2 * d

    kernel = functools.partial(_dblock_inv2_kernel, H=H, W=W)

    return pl.pallas_call(
        kernel,
        out_shape=jax.ShapeDtypeStruct((N, H, W, Cout), x_nhwc.dtype),
        grid_spec=pltpu.PrefetchScalarGridSpec(
            num_scalar_prefetch=0,
            grid=(N,),
            in_specs=[
                pl.BlockSpec((1, H, W, Cin), lambda n: (n, 0, 0, 0)),
                pl.BlockSpec((_K, _K, Cin, Cmid), lambda n: (0, 0, 0, 0)),
                pl.BlockSpec((1, Cmid), lambda n: (0, 0)),
                pl.BlockSpec((_K, _K, Cmid, Cout), lambda n: (0, 0, 0, 0)),
                pl.BlockSpec((1, Cout), lambda n: (0, 0)),
            ],
            out_specs=pl.BlockSpec((1, H, W, Cout), lambda n: (n, 0, 0, 0)),
            scratch_shapes=[
                pltpu.VMEM((Hp, Wp, Cin), jnp.float32),   # padded input
                pltpu.VMEM((Hp, Wp, Cmid), jnp.float32),  # padded stage-1 out
            ],
        ),
        compiler_params=pltpu.CompilerParams(
            dimension_semantics=("parallel",)),
    )(x_nhwc, w1, b1.reshape(1, Cmid), w2, b2.reshape(1, Cout))


def dblock_inv2_forward(x_nchw, params):
    """DBlock_inv2 forward with PyTorch-compatible NCHW I/O."""
    x = jnp.transpose(x_nchw, (0, 2, 3, 1))        # -> NHWC (drop if model is NHWC)
    y = dblock_inv2_forward_nhwc(x, params)
    return jnp.transpose(y, (0, 3, 1, 2))          # -> NCHW


def _reference_forward(x_nchw, params):
    """Pure-JAX reference (lax.conv_general_dilated) for verification."""
    x = x_nchw
    for w, b in ((params["w1"], params["b1"]), (params["w2"], params["b2"])):
        d = _DILATION
        y = lax.conv_general_dilated(
            x, w, window_strides=(1, 1), padding=((d, d), (d, d)),
            rhs_dilation=(d, d),
            dimension_numbers=("NCHW", "HWIO", "NCHW"))
        x = jnp.maximum(y + b[None, :, None, None], 0.0)
    return x


def init_params(key, in_channels, out_channels, kernel_size=3):
    """Deterministic synthetic params. PyTorch conv weight (O,I,kh,kw) is stored
    here directly in HWIO = (kh, kw, I, O)."""
    # The PyTorch module builds conv2 as conv(in_channels, out_channels) even
    # though it receives the first conv's output -> only valid if equal.
    assert in_channels == out_channels, "DBlock_inv2 requires in_channels == out_channels"
    k1, k2, k3, k4 = jax.random.split(key, 4)
    scale = 0.1
    return {
        "w1": scale * jax.random.normal(
            k1, (kernel_size, kernel_size, in_channels, out_channels), jnp.float32),
        "b1": scale * jax.random.normal(k2, (out_channels,), jnp.float32),
        "w2": scale * jax.random.normal(
            k3, (kernel_size, kernel_size, in_channels, out_channels), jnp.float32),
        "b2": scale * jax.random.normal(k4, (out_channels,), jnp.float32),
    }


if __name__ == "__main__":
    key = jax.random.PRNGKey(0)
    kx, kp = jax.random.split(key)

    N, C, H, W = 2, 4, 16, 16
    x = jax.random.normal(kx, (N, C, H, W), jnp.float32)
    params = init_params(kp, in_channels=C, out_channels=C, kernel_size=3)

    out = dblock_inv2_forward(x, params)
    out = jax.block_until_ready(out)

    ref = _reference_forward(x, params)
    assert out.shape == (N, C, H, W)
    assert jnp.allclose(out, ref, atol=1e-4, rtol=1e-4), "mismatch vs reference"

    print("KERNEL_OK")
</pallas_src>

<mosaic_0001>
module attributes {stable_mosaic.version = 11 : i64} {
  func.func @_dblock_inv2_kernel(%arg0: i32, %arg1: memref<1x16x16x4xf32, #tpu.memory_space<vmem>>, %arg2: memref<3x3x4x4xf32, #tpu.memory_space<vmem>>, %arg3: memref<1x4xf32, #tpu.memory_space<vmem>>, %arg4: memref<3x3x4x4xf32, #tpu.memory_space<vmem>>, %arg5: memref<1x4xf32, #tpu.memory_space<vmem>>, %arg6: memref<1x16x16x4xf32, #tpu.memory_space<vmem>>, %arg7: memref<20x20x4xf32, #tpu.memory_space<vmem>>, %arg8: memref<20x20x4xf32, #tpu.memory_space<vmem>>) attributes {dimension_semantics = [#tpu.dimension_semantics<parallel>], iteration_bounds = array<i64: 2>, scalar_prefetch = 0 : i64, scratch_operands = 2 : i64, tpu.core_type = #tpu.core_type<tc>, window_params = [{transform_indices = @transform_0, window_bounds = array<i64: 1, 16, 16, 4>}, {pipeline_mode = #tpu.pipeline_mode<synchronous>, transform_indices = @transform_1, window_bounds = array<i64: 3, 3, 4, 4>}, {pipeline_mode = #tpu.pipeline_mode<synchronous>, transform_indices = @transform_2, window_bounds = array<i64: 1, 4>}, {pipeline_mode = #tpu.pipeline_mode<synchronous>, transform_indices = @transform_3, window_bounds = array<i64: 3, 3, 4, 4>}, {pipeline_mode = #tpu.pipeline_mode<synchronous>, transform_indices = @transform_4, window_bounds = array<i64: 1, 4>}, {transform_indices = @transform_5, window_bounds = array<i64: 1, 16, 16, 4>}]} {
    %cst = arith.constant 0.000000e+00 : f32
    %0 = vector.broadcast %cst : f32 to vector<2x20x4xf32>
    %c0 = arith.constant 0 : index
    %c0_0 = arith.constant 0 : index
    %c0_1 = arith.constant 0 : index
    %1 = vector.load %arg7[%c0, %c0_0, %c0_1] : memref<20x20x4xf32, #tpu.memory_space<vmem>>, vector<2x20x4xf32>
    tpu.vector_store %arg7[%c0, %c0_0, %c0_1], %0 {strides = array<i32>} : memref<20x20x4xf32, #tpu.memory_space<vmem>>, vector<2x20x4xf32>,
    %cst_2 = arith.constant 0.000000e+00 : f32
    %2 = vector.broadcast %cst_2 : f32 to vector<2x20x4xf32>
    %c18 = arith.constant 18 : index
    %c0_3 = arith.constant 0 : index
    %c0_4 = arith.constant 0 : index
    %3 = vector.load %arg7[%c18, %c0_3, %c0_4] : memref<20x20x4xf32, #tpu.memory_space<vmem>>, vector<2x20x4xf32>
    tpu.vector_store %arg7[%c18, %c0_3, %c0_4], %2 {strides = array<i32>} : memref<20x20x4xf32, #tpu.memory_space<vmem>>, vector<2x20x4xf32>,
    %cst_5 = arith.constant 0.000000e+00 : f32
    %4 = vector.broadcast %cst_5 : f32 to vector<16x2x4xf32>
    %c2 = arith.constant 2 : index
    %c0_6 = arith.constant 0 : index
    %c0_7 = arith.constant 0 : index
    %5 = vector.load %arg7[%c2, %c0_6, %c0_7] : memref<20x20x4xf32, #tpu.memory_space<vmem>>, vector<16x2x4xf32>
    tpu.vector_store %arg7[%c2, %c0_6, %c0_7], %4 {strides = array<i32>} : memref<20x20x4xf32, #tpu.memory_space<vmem>>, vector<16x2x4xf32>,
    %cst_8 = arith.constant 0.000000e+00 : f32
    %6 = vector.broadcast %cst_8 : f32 to vector<16x2x4xf32>
    %c2_9 = arith.constant 2 : index
    %c18_10 = arith.constant 18 : index
    %c0_11 = arith.constant 0 : index
    %7 = vector.load %arg7[%c2_9, %c18_10, %c0_11] : memref<20x20x4xf32, #tpu.memory_space<vmem>>, vector<16x2x4xf32>
    tpu.vector_store %arg7[%c2_9, %c18_10, %c0_11], %6 {strides = array<i32>} : memref<20x20x4xf32, #tpu.memory_space<vmem>>, vector<16x2x4xf32>,
    %c0_12 = arith.constant 0 : index
    %c0_13 = arith.constant 0 : index
    %c0_14 = arith.constant 0 : index
    %c0_15 = arith.constant 0 : index
    %8 = vector.load %arg1[%c0_12, %c0_13, %c0_14, %c0_15] : memref<1x16x16x4xf32, #tpu.memory_space<vmem>>, vector<1x16x16x4xf32>
    %9 = vector.shape_cast %8 : vector<1x16x16x4xf32> to vector<16x16x4xf32>
    %c2_16 = arith.constant 2 : index
    %c2_17 = arith.constant 2 : index
    %c0_18 = arith.constant 0 : index
    %10 = vector.load %arg7[%c2_16, %c2_17, %c0_18] : memref<20x20x4xf32, #tpu.memory_space<vmem>>, vector<16x16x4xf32>
    tpu.vector_store %arg7[%c2_16, %c2_17, %c0_18], %9 {strides = array<i32>} : memref<20x20x4xf32, #tpu.memory_space<vmem>>, vector<16x16x4xf32>,
    %c0_19 = arith.constant 0 : index
    %c0_20 = arith.constant 0 : index
    %11 = vector.load %arg3[%c0_19, %c0_20] : memref<1x4xf32, #tpu.memory_space<vmem>>, vector<1x4xf32>
    %12 = vector.shape_cast %11 : vector<1x4xf32> to vector<4xf32>
    %13 = vector.shape_cast %12 : vector<4xf32> to vector<1x1x4xf32>
    %14 = vector.shape_cast %13 : vector<1x1x4xf32> to vector<1x1x4xf32>
    %15 = vector.broadcast %14 : vector<1x1x4xf32> to vector<16x16x4xf32>
    %c0_21 = arith.constant 0 : index
    %c0_22 = arith.constant 0 : index
    %c0_23 = arith.constant 0 : index
    %16 = vector.load %arg7[%c0_21, %c0_22, %c0_23] : memref<20x20x4xf32, #tpu.memory_space<vmem>>, vector<16x16x4xf32>
    %c0_24 = arith.constant 0 : index
    %c0_25 = arith.constant 0 : index
    %c0_26 = arith.constant 0 : index
    %c0_27 = arith.constant 0 : index
    %17 = vector.load %arg2[%c0_24, %c0_25, %c0_26, %c0_27] : memref<3x3x4x4xf32, #tpu.memory_space<vmem>>, vector<1x1x4x4xf32>
    %18 = vector.shape_cast %17 : vector<1x1x4x4xf32> to vector<4x4xf32>
    %cst_28 = arith.constant dense<0.000000e+00> : vector<16x16x4xf32>
    %19 = tpu.matmul %16, %18, %cst_28 {dimension_numbers = #tpu.dot_dimension_numbers<[2], [0], [0, 1], [1], [0, 0, 0, 1, 1, 1], [], []>} : vector<16x16x4xf32>, vector<4x4xf32>, vector<16x16x4xf32> -> vector<16x16x4xf32>
    %20 = arith.addf %15, %19 : vector<16x16x4xf32>
    %c0_29 = arith.constant 0 : index
    %c2_30 = arith.constant 2 : index
    %c0_31 = arith.constant 0 : index
    %21 = vector.load %arg7[%c0_29, %c2_30, %c0_31] : memref<20x20x4xf32, #tpu.memory_space<vmem>>, vector<16x16x4xf32>
    %c0_32 = arith.constant 0 : index
    %c1 = arith.constant 1 : index
    %c0_33 = arith.constant 0 : index
    %c0_34 = arith.constant 0 : index
    %22 = vector.load %arg2[%c0_32, %c1, %c0_33, %c0_34] : memref<3x3x4x4xf32, #tpu.memory_space<vmem>>, vector<1x1x4x4xf32>
    %23 = vector.shape_cast %22 : vector<1x1x4x4xf32> to vector<4x4xf32>
    %cst_35 = arith.constant dense<0.000000e+00> : vector<16x16x4xf32>
    %24 = tpu.matmul %21, %23, %cst_35 {dimension_numbers = #tpu.dot_dimension_numbers<[2], [0], [0, 1], [1], [0, 0, 0, 1, 1, 1], [], []>} : vector<16x16x4xf32>, vector<4x4xf32>, vector<16x16x4xf32> -> vector<16x16x4xf32>
    %25 = arith.addf %20, %24 : vector<16x16x4xf32>
    %c0_36 = arith.constant 0 : index
    %c4 = arith.constant 4 : index
    %c0_37 = arith.constant 0 : index
    %26 = vector.load %arg7[%c0_36, %c4, %c0_37] : memref<20x20x4xf32, #tpu.memory_space<vmem>>, vector<16x16x4xf32>
    %c0_38 = arith.constant 0 : index
    %c2_39 = arith.constant 2 : index
    %c0_40 = arith.constant 0 : index
    %c0_41 = arith.constant 0 : index
    %27 = vector.load %arg2[%c0_38, %c2_39, %c0_40, %c0_41] : memref<3x3x4x4xf32, #tpu.memory_space<vmem>>, vector<1x1x4x4xf32>
    %28 = vector.shape_cast %27 : vector<1x1x4x4xf32> to vector<4x4xf32>
    %cst_42 = arith.constant dense<0.000000e+00> : vector<16x16x4xf32>
    %29 = tpu.matmul %26, %28, %cst_42 {dimension_numbers = #tpu.dot_dimension_numbers<[2], [0], [0, 1], [1], [0, 0, 0, 1, 1, 1], [], []>} : vector<16x16x4xf32>, vector<4x4xf32>, vector<16x16x4xf32> -> vector<16x16x4xf32>
    %30 = arith.addf %25, %29 : vector<16x16x4xf32>
    %c2_43 = arith.constant 2 : index
    %c0_44 = arith.constant 0 : index
    %c0_45 = arith.constant 0 : index
    %31 = vector.load %arg7[%c2_43, %c0_44, %c0_45] : memref<20x20x4xf32, #tpu.memory_space<vmem>>, vector<16x16x4xf32>
    %c1_46 = arith.constant 1 : index
    %c0_47 = arith.constant 0 : index
    %c0_48 = arith.constant 0 : index
    %c0_49 = arith.constant 0 : index
    %32 = vector.load %arg2[%c1_46, %c0_47, %c0_48, %c0_49] : memref<3x3x4x4xf32, #tpu.memory_space<vmem>>, vector<1x1x4x4xf32>
    %33 = vector.shape_cast %32 : vector<1x1x4x4xf32> to vector<4x4xf32>
    %cst_50 = arith.constant dense<0.000000e+00> : vector<16x16x4xf32>
    %34 = tpu.matmul %31, %33, %cst_50 {dimension_numbers = #tpu.dot_dimension_numbers<[2], [0], [0, 1], [1], [0, 0, 0, 1, 1, 1], [], []>} : vector<16x16x4xf32>, vector<4x4xf32>, vector<16x16x4xf32> -> vector<16x16x4xf32>
    %35 = arith.addf %30, %34 : vector<16x16x4xf32>
    %c2_51 = arith.constant 2 : index
    %c2_52 = arith.constant 2 : index
    %c0_53 = arith.constant 0 : index
    %36 = vector.load %arg7[%c2_51, %c2_52, %c0_53] : memref<20x20x4xf32, #tpu.memory_space<vmem>>, vector<16x16x4xf32>
    %c1_54 = arith.constant 1 : index
    %c1_55 = arith.constant 1 : index
    %c0_56 = arith.constant 0 : index
    %c0_57 = arith.constant 0 : index
    %37 = vector.load %arg2[%c1_54, %c1_55, %c0_56, %c0_57] : memref<3x3x4x4xf32, #tpu.memory_space<vmem>>, vector<1x1x4x4xf32>
    %38 = vector.shape_cast %37 : vector<1x1x4x4xf32> to vector<4x4xf32>
    %cst_58 = arith.constant dense<0.000000e+00> : vector<16x16x4xf32>
    %39 = tpu.matmul %36, %38, %cst_58 {dimension_numbers = #tpu.dot_dimension_numbers<[2], [0], [0, 1], [1], [0, 0, 0, 1, 1, 1], [], []>} : vector<16x16x4xf32>, vector<4x4xf32>, vector<16x16x4xf32> -> vector<16x16x4xf32>
    %40 = arith.addf %35, %39 : vector<16x16x4xf32>
    %c2_59 = arith.constant 2 : index
    %c4_60 = arith.constant 4 : index
    %c0_61 = arith.constant 0 : index
    %41 = vector.load %arg7[%c2_59, %c4_60, %c0_61] : memref<20x20x4xf32, #tpu.memory_space<vmem>>, vector<16x16x4xf32>
    %c1_62 = arith.constant 1 : index
    %c2_63 = arith.constant 2 : index
    %c0_64 = arith.constant 0 : index
    %c0_65 = arith.constant 0 : index
    %42 = vector.load %arg2[%c1_62, %c2_63, %c0_64, %c0_65] : memref<3x3x4x4xf32, #tpu.memory_space<vmem>>, vector<1x1x4x4xf32>
    %43 = vector.shape_cast %42 : vector<1x1x4x4xf32> to vector<4x4xf32>
    %cst_66 = arith.constant dense<0.000000e+00> : vector<16x16x4xf32>
    %44 = tpu.matmul %41, %43, %cst_66 {dimension_numbers = #tpu.dot_dimension_numbers<[2], [0], [0, 1], [1], [0, 0, 0, 1, 1, 1], [], []>} : vector<16x16x4xf32>, vector<4x4xf32>, vector<16x16x4xf32> -> vector<16x16x4xf32>
    %45 = arith.addf %40, %44 : vector<16x16x4xf32>
    %c4_67 = arith.constant 4 : index
    %c0_68 = arith.constant 0 : index
    %c0_69 = arith.constant 0 : index
    %46 = vector.load %arg7[%c4_67, %c0_68, %c0_69] : memref<20x20x4xf32, #tpu.memory_space<vmem>>, vector<16x16x4xf32>
    %c2_70 = arith.constant 2 : index
    %c0_71 = arith.constant 0 : index
    %c0_72 = arith.constant 0 : index
    %c0_73 = arith.constant 0 : index
    %47 = vector.load %arg2[%c2_70, %c0_71, %c0_72, %c0_73] : memref<3x3x4x4xf32, #tpu.memory_space<vmem>>, vector<1x1x4x4xf32>
    %48 = vector.shape_cast %47 : vector<1x1x4x4xf32> to vector<4x4xf32>
    %cst_74 = arith.constant dense<0.000000e+00> : vector<16x16x4xf32>
    %49 = tpu.matmul %46, %48, %cst_74 {dimension_numbers = #tpu.dot_dimension_numbers<[2], [0], [0, 1], [1], [0, 0, 0, 1, 1, 1], [], []>} : vector<16x16x4xf32>, vector<4x4xf32>, vector<16x16x4xf32> -> vector<16x16x4xf32>
    %50 = arith.addf %45, %49 : vector<16x16x4xf32>
    %c4_75 = arith.constant 4 : index
    %c2_76 = arith.constant 2 : index
    %c0_77 = arith.constant 0 : index
    %51 = vector.load %arg7[%c4_75, %c2_76, %c0_77] : memref<20x20x4xf32, #tpu.memory_space<vmem>>, vector<16x16x4xf32>
    %c2_78 = arith.constant 2 : index
    %c1_79 = arith.constant 1 : index
    %c0_80 = arith.constant 0 : index
    %c0_81 = arith.constant 0 : index
    %52 = vector.load %arg2[%c2_78, %c1_79, %c0_80, %c0_81] : memref<3x3x4x4xf32, #tpu.memory_space<vmem>>, vector<1x1x4x4xf32>
    %53 = vector.shape_cast %52 : vector<1x1x4x4xf32> to vector<4x4xf32>
    %cst_82 = arith.constant dense<0.000000e+00> : vector<16x16x4xf32>
    %54 = tpu.matmul %51, %53, %cst_82 {dimension_numbers = #tpu.dot_dimension_numbers<[2], [0], [0, 1], [1], [0, 0, 0, 1, 1, 1], [], []>} : vector<16x16x4xf32>, vector<4x4xf32>, vector<16x16x4xf32> -> vector<16x16x4xf32>
    %55 = arith.addf %50, %54 : vector<16x16x4xf32>
    %c4_83 = arith.constant 4 : index
    %c4_84 = arith.constant 4 : index
    %c0_85 = arith.constant 0 : index
    %56 = vector.load %arg7[%c4_83, %c4_84, %c0_85] : memref<20x20x4xf32, #tpu.memory_space<vmem>>, vector<16x16x4xf32>
    %c2_86 = arith.constant 2 : index
    %c2_87 = arith.constant 2 : index
    %c0_88 = arith.constant 0 : index
    %c0_89 = arith.constant 0 : index
    %57 = vector.load %arg2[%c2_86, %c2_87, %c0_88, %c0_89] : memref<3x3x4x4xf32, #tpu.memory_space<vmem>>, vector<1x1x4x4xf32>
    %58 = vector.shape_cast %57 : vector<1x1x4x4xf32> to vector<4x4xf32>
    %cst_90 = arith.constant dense<0.000000e+00> : vector<16x16x4xf32>
    %59 = tpu.matmul %56, %58, %cst_90 {dimension_numbers = #tpu.dot_dimension_numbers<[2], [0], [0, 1], [1], [0, 0, 0, 1, 1, 1], [], []>} : vector<16x16x4xf32>, vector<4x4xf32>, vector<16x16x4xf32> -> vector<16x16x4xf32>
    %60 = arith.addf %55, %59 : vector<16x16x4xf32>
    %cst_91 = arith.constant 0.000000e+00 : f32
    %61 = vector.broadcast %cst_91 : f32 to vector<16x16x4xf32>
    %62 = arith.maximumf %60, %61 : vector<16x16x4xf32>
    %cst_92 = arith.constant 0.000000e+00 : f32
    %63 = vector.broadcast %cst_92 : f32 to vector<2x20x4xf32>
    %c0_93 = arith.constant 0 : index
    %c0_94 = arith.constant 0 : index
    %c0_95 = arith.constant 0 : index
    %64 = vector.load %arg8[%c0_93, %c0_94, %c0_95] : memref<20x20x4xf32, #tpu.memory_space<vmem>>, vector<2x20x4xf32>
    tpu.vector_store %arg8[%c0_93, %c0_94, %c0_95], %63 {strides = array<i32>} : memref<20x20x4xf32, #tpu.memory_space<vmem>>, vector<2x20x4xf32>,
    %cst_96 = arith.constant 0.000000e+00 : f32
    %65 = vector.broadcast %cst_96 : f32 to vector<2x20x4xf32>
    %c18_97 = arith.constant 18 : index
    %c0_98 = arith.constant 0 : index
    %c0_99 = arith.constant 0 : index
    %66 = vector.load %arg8[%c18_97, %c0_98, %c0_99] : memref<20x20x4xf32, #tpu.memory_space<vmem>>, vector<2x20x4xf32>
    tpu.vector_store %arg8[%c18_97, %c0_98, %c0_99], %65 {strides = array<i32>} : memref<20x20x4xf32, #tpu.memory_space<vmem>>, vector<2x20x4xf32>,
    %cst_100 = arith.constant 0.000000e+00 : f32
    %67 = vector.broadcast %cst_100 : f32 to vector<16x2x4xf32>
    %c2_101 = arith.constant 2 : index
    %c0_102 = arith.constant 0 : index
    %c0_103 = arith.constant 0 : index
    %68 = vector.load %arg8[%c2_101, %c0_102, %c0_103] : memref<20x20x4xf32, #tpu.memory_space<vmem>>, vector<16x2x4xf32>
    tpu.vector_store %arg8[%c2_101, %c0_102, %c0_103], %67 {strides = array<i32>} : memref<20x20x4xf32, #tpu.memory_space<vmem>>, vector<16x2x4xf32>,
    %cst_104 = arith.constant 0.000000e+00 : f32
    %69 = vector.broadcast %cst_104 : f32 to vector<16x2x4xf32>
    %c2_105 = arith.constant 2 : index
    %c18_106 = arith.constant 18 : index
    %c0_107 = arith.constant 0 : index
    %70 = vector.load %arg8[%c2_105, %c18_106, %c0_107] : memref<20x20x4xf32, #tpu.memory_space<vmem>>, vector<16x2x4xf32>
    tpu.vector_store %arg8[%c2_105, %c18_106, %c0_107], %69 {strides = array<i32>} : memref<20x20x4xf32, #tpu.memory_space<vmem>>, vector<16x2x4xf32>,
    %c2_108 = arith.constant 2 : index
    %c2_109 = arith.constant 2 : index
    %c0_110 = arith.constant 0 : index
    %71 = vector.load %arg8[%c2_108, %c2_109, %c0_110] : memref<20x20x4xf32, #tpu.memory_space<vmem>>, vector<16x16x4xf32>
    tpu.vector_store %arg8[%c2_108, %c2_109, %c0_110], %62 {strides = array<i32>} : memref<20x20x4xf32, #tpu.memory_space<vmem>>, vector<16x16x4xf32>,
    %c0_111 = arith.constant 0 : index
    %c0_112 = arith.constant 0 : index
    %72 = vector.load %arg5[%c0_111, %c0_112] : memref<1x4xf32, #tpu.memory_space<vmem>>, vector<1x4xf32>
    %73 = vector.shape_cast %72 : vector<1x4xf32> to vector<4xf32>
    %74 = vector.shape_cast %73 : vector<4xf32> to vector<1x1x4xf32>
    %75 = vector.shape_cast %74 : vector<1x1x4xf32> to vector<1x1x4xf32>
    %76 = vector.broadcast %75 : vector<1x1x4xf32> to vector<16x16x4xf32>
    %c0_113 = arith.constant 0 : index
    %c0_114 = arith.constant 0 : index
    %c0_115 = arith.constant 0 : index
    %77 = vector.load %arg8[%c0_113, %c0_114, %c0_115] : memref<20x20x4xf32, #tpu.memory_space<vmem>>, vector<16x16x4xf32>
    %c0_116 = arith.constant 0 : index
    %c0_117 = arith.constant 0 : index
    %c0_118 = arith.constant 0 : index
    %c0_119 = arith.constant 0 : index
    %78 = vector.load %arg4[%c0_116, %c0_117, %c0_118, %c0_119] : memref<3x3x4x4xf32, #tpu.memory_space<vmem>>, vector<1x1x4x4xf32>
    %79 = vector.shape_cast %78 : vector<1x1x4x4xf32> to vector<4x4xf32>
    %cst_120 = arith.constant dense<0.000000e+00> : vector<16x16x4xf32>
    %80 = tpu.matmul %77, %79, %cst_120 {dimension_numbers = #tpu.dot_dimension_numbers<[2], [0], [0, 1], [1], [0, 0, 0, 1, 1, 1], [], []>} : vector<16x16x4xf32>, vector<4x4xf32>, vector<16x16x4xf32> -> vector<16x16x4xf32>
    %81 = arith.addf %76, %80 : vector<16x16x4xf32>
    %c0_121 = arith.constant 0 : index
    %c2_122 = arith.constant 2 : index
    %c0_123 = arith.constant 0 : index
    %82 = vector.load %arg8[%c0_121, %c2_122, %c0_123] : memref<20x20x4xf32, #tpu.memory_space<vmem>>, vector<16x16x4xf32>
    %c0_124 = arith.constant 0 : index
    %c1_125 = arith.constant 1 : index
    %c0_126 = arith.constant 0 : index
    %c0_127 = arith.constant 0 : index
    %83 = vector.load %arg4[%c0_124, %c1_125, %c0_126, %c0_127] : memref<3x3x4x4xf32, #tpu.memory_space<vmem>>, vector<1x1x4x4xf32>
    %84 = vector.shape_cast %83 : vector<1x1x4x4xf32> to vector<4x4xf32>
    %cst_128 = arith.constant dense<0.000000e+00> : vector<16x16x4xf32>
    %85 = tpu.matmul %82, %84, %cst_128 {dimension_numbers = #tpu.dot_dimension_numbers<[2], [0], [0, 1], [1], [0, 0, 0, 1, 1, 1], [], []>} : vector<16x16x4xf32>, vector<4x4xf32>, vector<16x16x4xf32> -> vector<16x16x4xf32>
    %86 = arith.addf %81, %85 : vector<16x16x4xf32>
    %c0_129 = arith.constant 0 : index
    %c4_130 = arith.constant 4 : index
    %c0_131 = arith.constant 0 : index
    %87 = vector.load %arg8[%c0_129, %c4_130, %c0_131] : memref<20x20x4xf32, #tpu.memory_space<vmem>>, vector<16x16x4xf32>
    %c0_132 = arith.constant 0 : index
    %c2_133 = arith.constant 2 : index
    %c0_134 = arith.constant 0 : index
    %c0_135 = arith.constant 0 : index
    %88 = vector.load %arg4[%c0_132, %c2_133, %c0_134, %c0_135] : memref<3x3x4x4xf32, #tpu.memory_space<vmem>>, vector<1x1x4x4xf32>
    %89 = vector.shape_cast %88 : vector<1x1x4x4xf32> to vector<4x4xf32>
    %cst_136 = arith.constant dense<0.000000e+00> : vector<16x16x4xf32>
    %90 = tpu.matmul %87, %89, %cst_136 {dimension_numbers = #tpu.dot_dimension_numbers<[2], [0], [0, 1], [1], [0, 0, 0, 1, 1, 1], [], []>} : vector<16x16x4xf32>, vector<4x4xf32>, vector<16x16x4xf32> -> vector<16x16x4xf32>
    %91 = arith.addf %86, %90 : vector<16x16x4xf32>
    %c2_137 = arith.constant 2 : index
    %c0_138 = arith.constant 0 : index
    %c0_139 = arith.constant 0 : index
    %92 = vector.load %arg8[%c2_137, %c0_138, %c0_139] : memref<20x20x4xf32, #tpu.memory_space<vmem>>, vector<16x16x4xf32>
    %c1_140 = arith.constant 1 : index
    %c0_141 = arith.constant 0 : index
    %c0_142 = arith.constant 0 : index
    %c0_143 = arith.constant 0 : index
    %93 = vector.load %arg4[%c1_140, %c0_141, %c0_142, %c0_143] : memref<3x3x4x4xf32, #tpu.memory_space<vmem>>, vector<1x1x4x4xf32>
    %94 = vector.shape_cast %93 : vector<1x1x4x4xf32> to vector<4x4xf32>
    %cst_144 = arith.constant dense<0.000000e+00> : vector<16x16x4xf32>
    %95 = tpu.matmul %92, %94, %cst_144 {dimension_numbers = #tpu.dot_dimension_numbers<[2], [0], [0, 1], [1], [0, 0, 0, 1, 1, 1], [], []>} : vector<16x16x4xf32>, vector<4x4xf32>, vector<16x16x4xf32> -> vector<16x16x4xf32>
    %96 = arith.addf %91, %95 : vector<16x16x4xf32>
    %c2_145 = arith.constant 2 : index
    %c2_146 = arith.constant 2 : index
    %c0_147 = arith.constant 0 : index
    %97 = vector.load %arg8[%c2_145, %c2_146, %c0_147] : memref<20x20x4xf32, #tpu.memory_space<vmem>>, vector<16x16x4xf32>
    %c1_148 = arith.constant 1 : index
    %c1_149 = arith.constant 1 : index
    %c0_150 = arith.constant 0 : index
    %c0_151 = arith.constant 0 : index
    %98 = vector.load %arg4[%c1_148, %c1_149, %c0_150, %c0_151] : memref<3x3x4x4xf32, #tpu.memory_space<vmem>>, vector<1x1x4x4xf32>
    %99 = vector.shape_cast %98 : vector<1x1x4x4xf32> to vector<4x4xf32>
    %cst_152 = arith.constant dense<0.000000e+00> : vector<16x16x4xf32>
    %100 = tpu.matmul %97, %99, %cst_152 {dimension_numbers = #tpu.dot_dimension_numbers<[2], [0], [0, 1], [1], [0, 0, 0, 1, 1, 1], [], []>} : vector<16x16x4xf32>, vector<4x4xf32>, vector<16x16x4xf32> -> vector<16x16x4xf32>
    %101 = arith.addf %96, %100 : vector<16x16x4xf32>
    %c2_153 = arith.constant 2 : index
    %c4_154 = arith.constant 4 : index
    %c0_155 = arith.constant 0 : index
    %102 = vector.load %arg8[%c2_153, %c4_154, %c0_155] : memref<20x20x4xf32, #tpu.memory_space<vmem>>, vector<16x16x4xf32>
    %c1_156 = arith.constant 1 : index
    %c2_157 = arith.constant 2 : index
    %c0_158 = arith.constant 0 : index
    %c0_159 = arith.constant 0 : index
    %103 = vector.load %arg4[%c1_156, %c2_157, %c0_158, %c0_159] : memref<3x3x4x4xf32, #tpu.memory_space<vmem>>, vector<1x1x4x4xf32>
    %104 = vector.shape_cast %103 : vector<1x1x4x4xf32> to vector<4x4xf32>
    %cst_160 = arith.constant dense<0.000000e+00> : vector<16x16x4xf32>
    %105 = tpu.matmul %102, %104, %cst_160 {dimension_numbers = #tpu.dot_dimension_numbers<[2], [0], [0, 1], [1], [0, 0, 0, 1, 1, 1], [], []>} : vector<16x16x4xf32>, vector<4x4xf32>, vector<16x16x4xf32> -> vector<16x16x4xf32>
    %106 = arith.addf %101, %105 : vector<16x16x4xf32>
    %c4_161 = arith.constant 4 : index
    %c0_162 = arith.constant 0 : index
    %c0_163 = arith.constant 0 : index
    %107 = vector.load %arg8[%c4_161, %c0_162, %c0_163] : memref<20x20x4xf32, #tpu.memory_space<vmem>>, vector<16x16x4xf32>
    %c2_164 = arith.constant 2 : index
    %c0_165 = arith.constant 0 : index
    %c0_166 = arith.constant 0 : index
    %c0_167 = arith.constant 0 : index
    %108 = vector.load %arg4[%c2_164, %c0_165, %c0_166, %c0_167] : memref<3x3x4x4xf32, #tpu.memory_space<vmem>>, vector<1x1x4x4xf32>
    %109 = vector.shape_cast %108 : vector<1x1x4x4xf32> to vector<4x4xf32>
    %cst_168 = arith.constant dense<0.000000e+00> : vector<16x16x4xf32>
    %110 = tpu.matmul %107, %109, %cst_168 {dimension_numbers = #tpu.dot_dimension_numbers<[2], [0], [0, 1], [1], [0, 0, 0, 1, 1, 1], [], []>} : vector<16x16x4xf32>, vector<4x4xf32>, vector<16x16x4xf32> -> vector<16x16x4xf32>
    %111 = arith.addf %106, %110 : vector<16x16x4xf32>
    %c4_169 = arith.constant 4 : index
    %c2_170 = arith.constant 2 : index
    %c0_171 = arith.constant 0 : index
    %112 = vector.load %arg8[%c4_169, %c2_170, %c0_171] : memref<20x20x4xf32, #tpu.memory_space<vmem>>, vector<16x16x4xf32>
    %c2_172 = arith.constant 2 : index
    %c1_173 = arith.constant 1 : index
    %c0_174 = arith.constant 0 : index
    %c0_175 = arith.constant 0 : index
    %113 = vector.load %arg4[%c2_172, %c1_173, %c0_174, %c0_175] : memref<3x3x4x4xf32, #tpu.memory_space<vmem>>, vector<1x1x4x4xf32>
    %114 = vector.shape_cast %113 : vector<1x1x4x4xf32> to vector<4x4xf32>
    %cst_176 = arith.constant dense<0.000000e+00> : vector<16x16x4xf32>
    %115 = tpu.matmul %112, %114, %cst_176 {dimension_numbers = #tpu.dot_dimension_numbers<[2], [0], [0, 1], [1], [0, 0, 0, 1, 1, 1], [], []>} : vector<16x16x4xf32>, vector<4x4xf32>, vector<16x16x4xf32> -> vector<16x16x4xf32>
    %116 = arith.addf %111, %115 : vector<16x16x4xf32>
    %c4_177 = arith.constant 4 : index
    %c4_178 = arith.constant 4 : index
    %c0_179 = arith.constant 0 : index
    %117 = vector.load %arg8[%c4_177, %c4_178, %c0_179] : memref<20x20x4xf32, #tpu.memory_space<vmem>>, vector<16x16x4xf32>
    %c2_180 = arith.constant 2 : index
    %c2_181 = arith.constant 2 : index
    %c0_182 = arith.constant 0 : index
    %c0_183 = arith.constant 0 : index
    %118 = vector.load %arg4[%c2_180, %c2_181, %c0_182, %c0_183] : memref<3x3x4x4xf32, #tpu.memory_space<vmem>>, vector<1x1x4x4xf32>
    %119 = vector.shape_cast %118 : vector<1x1x4x4xf32> to vector<4x4xf32>
    %cst_184 = arith.constant dense<0.000000e+00> : vector<16x16x4xf32>
    %120 = tpu.matmul %117, %119, %cst_184 {dimension_numbers = #tpu.dot_dimension_numbers<[2], [0], [0, 1], [1], [0, 0, 0, 1, 1, 1], [], []>} : vector<16x16x4xf32>, vector<4x4xf32>, vector<16x16x4xf32> -> vector<16x16x4xf32>
    %121 = arith.addf %116, %120 : vector<16x16x4xf32>
    %cst_185 = arith.constant 0.000000e+00 : f32
    %122 = vector.broadcast %cst_185 : f32 to vector<16x16x4xf32>
    %123 = arith.maximumf %121, %122 : vector<16x16x4xf32>
    %c0_186 = arith.constant 0 : index
    %c0_187 = arith.constant 0 : index
    %c0_188 = arith.constant 0 : index
    %c0_189 = arith.constant 0 : index
    %124 = vector.load %arg6[%c0_186, %c0_187, %c0_188, %c0_189] : memref<1x16x16x4xf32, #tpu.memory_space<vmem>>, vector<1x16x16x4xf32>
    %125 = vector.shape_cast %124 : vector<1x16x16x4xf32> to vector<16x16x4xf32>
    %126 = vector.shape_cast %123 : vector<16x16x4xf32> to vector<1x16x16x4xf32>
    tpu.vector_store %arg6[%c0_186, %c0_187, %c0_188, %c0_189], %126 {strides = array<i32>} : memref<1x16x16x4xf32, #tpu.memory_space<vmem>>, vector<1x16x16x4xf32>,
    return
  }
  func.func @transform_0(%arg0: i32) -> (i32, i32, i32, i32) {
    %c0_i32 = arith.constant 0 : i32
    %c0_i32_0 = arith.constant 0 : i32
    %c0_i32_1 = arith.constant 0 : i32
    %c0_i32_2 = arith.constant 0 : i32
    return %arg0, %c0_i32, %c0_i32_0, %c0_i32_1 : i32, i32, i32, i32
  }
  func.func @transform_1(%arg0: i32) -> (i32, i32, i32, i32) {
    %c0_i32 = arith.constant 0 : i32
    %c0_i32_0 = arith.constant 0 : i32
    %c0_i32_1 = arith.constant 0 : i32
    %c0_i32_2 = arith.constant 0 : i32
    %c0_i32_3 = arith.constant 0 : i32
    return %c0_i32, %c0_i32_0, %c0_i32_1, %c0_i32_2 : i32, i32, i32, i32
  }
  func.func @transform_2(%arg0: i32) -> (i32, i32) {
    %c0_i32 = arith.constant 0 : i32
    %c0_i32_0 = arith.constant 0 : i32
    %c0_i32_1 = arith.constant 0 : i32
    return %c0_i32, %c0_i32_0 : i32, i32
  }
  func.func @transform_3(%arg0: i32) -> (i32, i32, i32, i32) {
    %c0_i32 = arith.constant 0 : i32
    %c0_i32_0 = arith.constant 0 : i32
    %c0_i32_1 = arith.constant 0 : i32
    %c0_i32_2 = arith.constant 0 : i32
    %c0_i32_3 = arith.constant 0 : i32
    return %c0_i32, %c0_i32_0, %c0_i32_1, %c0_i32_2 : i32, i32, i32, i32
  }
  func.func @transform_4(%arg0: i32) -> (i32, i32) {
    %c0_i32 = arith.constant 0 : i32
    %c0_i32_0 = arith.constant 0 : i32
    %c0_i32_1 = arith.constant 0 : i32
    return %c0_i32, %c0_i32_0 : i32, i32
  }
  func.func @transform_5(%arg0: i32) -> (i32, i32, i32, i32) {
    %c0_i32 = arith.constant 0 : i32
    %c0_i32_0 = arith.constant 0 : i32
    %c0_i32_1 = arith.constant 0 : i32
    %c0_i32_2 = arith.constant 0 : i32
    return %arg0, %c0_i32, %c0_i32_0, %c0_i32_1 : i32, i32, i32, i32
  }
}

</mosaic_0001>

<llo_original>
// kernel: tpu_custom_call.1
$region0: #{tpu_custom_call.1}
  #allocation0 [shape = 'u32[]', space=smem, size = 0x4, offset = 0x4, fixed_abs, tag = 'smem constant byte address 0x4 - core index']
  #allocation1 [shape = 'u32[72,128]{1,0:T(1,128)}', space=vmem, size = 0x9000, scoped, tag = 'internal scratch']
  #allocation2 [shape = 'f32[20,20,4]{2,1,0:T(8,128)}', space=vmem, size = 0x3c000, scoped, tag = 'scratch operand']
  #allocation3 [shape = 'f32[20,20,4]{2,1,0:T(8,128)}', space=vmem, size = 0x3c000, scoped, tag = 'scratch operand']
  %s0 = inlined_call_operand.vmem [shape: f32[2,16,16,4], index: 0, kind: input, shape index: {}]
  %s1 = inlined_call_operand.vmem [shape: f32[3,3,4,4], index: 1, kind: input, shape index: {}]
  %s2 = inlined_call_operand.vmem [shape: f32[1,4], index: 2, kind: input, shape index: {}]
  %s3 = inlined_call_operand.vmem [shape: f32[3,3,4,4], index: 3, kind: input, shape index: {}]
  %s4 = inlined_call_operand.vmem [shape: f32[1,4], index: 4, kind: input, shape index: {}]
  %s5 = inlined_call_operand.vmem [shape: f32[2,16,16,4], index: 5, kind: output, shape index: {}]
  %s6 = sld [smem:[#allocation0]]
  $region53: #{tpu_custom_call.1} parent=0
    _
  %s8 = ssub.s32 1, %s6
  %s9 = scalar_select 0, %s8, %s6
  loop: start=0, step=1, limit=4
  $region2: #{tpu_custom_call.1} parent=0 // loop_pre_header
    _
  $region3: #{tpu_custom_call.1} parent=0 // loop_header
    %s11 = sphi 0, %s15
    %p12 = scmp.ge.s32.totalorder %s11, 4
    %s21 = sphi 0, %s23
    %s24 = sphi 0, %s21
    %s25 = sphi 0, %s24
    %s41 = sphi 0, %s25
    %s45 = sphi 0, %s45
    %s47 = sphi 0, %s45
    %s48 = sphi 0, %s47
    %s62 = sphi 0, %s48
    %s66 = sphi 0, %s66
    %s68 = sphi 0, %s66
    %s69 = sphi 0, %s68
    %s83 = sphi 0, %s69
    %s87 = sphi 0, %s87
    %s89 = sphi 0, %s87
    %s90 = sphi 0, %s89
    %s104 = sphi 0, %s90
    %s108 = sphi 0, %s108
    %s110 = sphi 0, %s108
    %s111 = sphi 0, %s110
    %s125 = sphi 0, %s111
    %s131 = sphi 0, %s133
    %s134 = sphi 0, %s131
    %s135 = sphi 0, %s134
    %s151 = sphi 0, %s135
  $region4: #{tpu_custom_call.1} parent=0 // loop_header_branch
    %14 = sbr.rel (%p12) target = $region8
  $region5: #{tpu_custom_call.1} parent=0 // loop_body
    %s16 = ssub.s32 %s11, 1
    %s17 = ssub.s32 %s11, 2
    %s18 = sadd.s32 %s11, 1
    %s19 = ssub.s32 %s11, %s18
    %p20 = scmp.eq.s32.totalorder %s19, 0
    %s22 = sadd.s32 %s21, 1
    %s23 = scalar_select %p20, %s21, %s22
    %p26 = pneg %p20
    %p27 = scmp.eq.s32.totalorder %s11, 1
    %p28 = por %p26, %p27
    %p29 = scmp.ne.s32.totalorder %s21, %s24
    %p30 = scmp.eq.s32.totalorder %s11, 0
    %p31 = por %p29, %p30
    %p32 = scmp.ne.s32.totalorder %s21, %s24
    %p33 = scmp.eq.s32.totalorder %s16, 1
    %p34 = por %p32, %p33
    %p35 = scmp.ne.s32.totalorder %s24, %s25
    %p36 = scmp.eq.s32.totalorder %s16, 0
    %p37 = por %p35, %p36
    %p38 = scmp.ne.s32.totalorder %s24, %s25
    %p39 = scmp.eq.s32.totalorder %s17, 1
    %p40 = por %p38, %p39
    %p42 = scmp.ne.s32.totalorder %s25, %s41
    %p43 = scmp.eq.s32.totalorder %s17, 0
    %p44 = por %p42, %p43
    %s46 = sadd.s32 %s45, 1
    %p49 = scmp.eq.s32.totalorder %s11, 1
    %p50 = scmp.ne.s32.totalorder %s45, %s47
    %p51 = scmp.eq.s32.totalorder %s11, 0
    %p52 = por %p50, %p51
    %p53 = scmp.ne.s32.totalorder %s45, %s47
    %p54 = scmp.eq.s32.totalorder %s16, 1
    %p55 = por %p53, %p54
    %p56 = scmp.ne.s32.totalorder %s47, %s48
    %p57 = scmp.eq.s32.totalorder %s16, 0
    %p58 = por %p56, %p57
    %p59 = scmp.ne.s32.totalorder %s47, %s48
    %p60 = scmp.eq.s32.totalorder %s17, 1
    %p61 = por %p59, %p60
    %p63 = scmp.ne.s32.totalorder %s48, %s62
    %p64 = scmp.eq.s32.totalorder %s17, 0
    %p65 = por %p63, %p64
    %s67 = sadd.s32 %s66, 1
    %p70 = scmp.eq.s32.totalorder %s11, 1
    %p71 = scmp.ne.s32.totalorder %s66, %s68
    %p72 = scmp.eq.s32.totalorder %s11, 0
    %p73 = por %p71, %p72
    %p74 = scmp.ne.s32.totalorder %s66, %s68
    %p75 = scmp.eq.s32.totalorder %s16, 1
    %p76 = por %p74, %p75
    %p77 = scmp.ne.s32.totalorder %s68, %s69
    %p78 = scmp.eq.s32.totalorder %s16, 0
    %p79 = por %p77, %p78
    %p80 = scmp.ne.s32.totalorder %s68, %s69
    %p81 = scmp.eq.s32.totalorder %s17, 1
    %p82 = por %p80, %p81
    %p84 = scmp.ne.s32.totalorder %s69, %s83
    %p85 = scmp.eq.s32.totalorder %s17, 0
    %p86 = por %p84, %p85
    %s88 = sadd.s32 %s87, 1
    %p91 = scmp.eq.s32.totalorder %s11, 1
    %p92 = scmp.ne.s32.totalorder %s87, %s89
    %p93 = scmp.eq.s32.totalorder %s11, 0
    %p94 = por %p92, %p93
    %p95 = scmp.ne.s32.totalorder %s87, %s89
    %p96 = scmp.eq.s32.totalorder %s16, 1
    %p97 = por %p95, %p96
    %p98 = scmp.ne.s32.totalorder %s89, %s90
    %p99 = scmp.eq.s32.totalorder %s16, 0
    %p100 = por %p98, %p99
    %p101 = scmp.ne.s32.totalorder %s89, %s90
    %p102 = scmp.eq.s32.totalorder %s17, 1
    %p103 = por %p101, %p102
    %p105 = scmp.ne.s32.totalorder %s90, %s104
    %p106 = scmp.eq.s32.totalorder %s17, 0
    %p107 = por %p105, %p106
    %s109 = sadd.s32 %s108, 1
    %p112 = scmp.eq.s32.totalorder %s11, 1
    %p113 = scmp.ne.s32.totalorder %s108, %s110
    %p114 = scmp.eq.s32.totalorder %s11, 0
    %p115 = por %p113, %p114
    %p116 = scmp.ne.s32.totalorder %s108, %s110
    %p117 = scmp.eq.s32.totalorder %s16, 1
    %p118 = por %p116, %p117
    %p119 = scmp.ne.s32.totalorder %s110, %s111
    %p120 = scmp.eq.s32.totalorder %s16, 0
    %p121 = por %p119, %p120
    %p122 = scmp.ne.s32.totalorder %s110, %s111
    %p123 = scmp.eq.s32.totalorder %s17, 1
    %p124 = por %p122, %p123
    %p126 = scmp.ne.s32.totalorder %s111, %s125
    %p127 = scmp.eq.s32.totalorder %s17, 0
    %p128 = por %p126, %p127
    %s129 = ssub.s32 %s11, %s18
    %p130 = scmp.eq.s32.totalorder %s129, 0
    %s132 = sadd.s32 %s131, 1
    %s133 = scalar_select %p130, %s131, %s132
    %p136 = pneg %p130
    %p137 = scmp.eq.s32.totalorder %s11, 1
    %p138 = por %p136, %p137
    %p139 = scmp.ne.s32.totalorder %s131, %s134
    %p140 = scmp.eq.s32.totalorder %s11, 0
    %p141 = por %p139, %p140
    %p142 = scmp.ne.s32.totalorder %s131, %s134
    %p143 = scmp.eq.s32.totalorder %s16, 1
    %p144 = por %p142, %p143
    %p145 = scmp.ne.s32.totalorder %s134, %s135
    %p146 = scmp.eq.s32.totalorder %s16, 0
    %p147 = por %p145, %p146
    %p148 = scmp.ne.s32.totalorder %s134, %s135
    %p149 = scmp.eq.s32.totalorder %s17, 1
    %p150 = por %p148, %p149
    %p152 = scmp.ne.s32.totalorder %s135, %s151
    %p153 = scmp.eq.s32.totalorder %s17, 0
    %p154 = por %p152, %p153
    %p155 = scmp.le.s32.totalorder 1, %s11
    %p156 = scmp.lt.s32.totalorder %s11, 3
    %p157 = pnand %p155, %p156
    %p158 = pneg %p157
    // Predicated region
    $region9: #{tpu_custom_call.1} parent=5 // pred_check
      _
    $region10: #{tpu_custom_call.1} parent=5 // pred_check_branch
      %160 = sbr.rel (%p157) target = $region12
    $region11: #{tpu_custom_call.1} parent=5 // pred_region
      %s161 = ssub.s32 %s11, 1
      // Predicated region
      $region13: #{tpu_custom_call.1} parent=11 // pred_check
        %p162 = pneg %p58
      $region14: #{tpu_custom_call.1} parent=11 // pred_check_branch
        %164 = sbr.rel (%p162) target = $region16
      $region15: #{tpu_custom_call.1} parent=11 // pred_region
        _
      $region16: #{tpu_custom_call.1} parent=11 // pred_fallthru
        _
      // Predicated region
      $region17: #{tpu_custom_call.1} parent=11 // pred_check
        %p165 = pneg %p79
      $region18: #{tpu_custom_call.1} parent=11 // pred_check_branch
        %167 = sbr.rel (%p165) target = $region20
      $region19: #{tpu_custom_call.1} parent=11 // pred_region
        _
      $region20: #{tpu_custom_call.1} parent=11 // pred_fallthru
        _
      // Predicated region
      $region21: #{tpu_custom_call.1} parent=11 // pred_check
        %p168 = pneg %p100
      $region22: #{tpu_custom_call.1} parent=11 // pred_check_branch
        %170 = sbr.rel (%p168) target = $region24
      $region23: #{tpu_custom_call.1} parent=11 // pred_region
        _
      $region24: #{tpu_custom_call.1} parent=11 // pred_fallthru
        _
      // Predicated region
      $region25: #{tpu_custom_call.1} parent=11 // pred_check
        %p171 = pneg %p121
      $region26: #{tpu_custom_call.1} parent=11 // pred_check_branch
        %173 = sbr.rel (%p171) target = $region28
      $region27: #{tpu_custom_call.1} parent=11 // pred_region
        _
      $region28: #{tpu_custom_call.1} parent=11 // pred_fallthru
        _
    $region12: #{tpu_custom_call.1} parent=5 // pred_fallthru
      _
    %p174 = scmp.lt.s32.totalorder %s11, 2
    // Predicated region
    $region29: #{tpu_custom_call.1} parent=5 // pred_check
      %p175 = pneg %p174
    $region30: #{tpu_custom_call.1} parent=5 // pred_check_branch
      %177 = sbr.rel (%p175) target = $region32
    $region31: #{tpu_custom_call.1} parent=5 // pred_region
      // Predicated region
      $region33: #{tpu_custom_call.1} parent=31 // pred_check
        %p178 = pneg %p31
      $region34: #{tpu_custom_call.1} parent=31 // pred_check_branch
        %180 = sbr.rel (%p178) target = $region36
      $region35: #{tpu_custom_call.1} parent=31 // pred_region
        %p181 = scmp.lt.s32.totalorder %s11, 1
        %s182 = scalar_select %p181, %s11, 1
        %s183 = smul.addr %s182, 32
        %s184 = smul.addr %s183, 8
        %s185 = scalar_lea.vmem %s0, %s184
      $region36: #{tpu_custom_call.1} parent=31 // pred_fallthru
        _
    $region32: #{tpu_custom_call.1} parent=5 // pred_fallthru
      _
    %p186 = scmp.le.s32.totalorder 1, %s11
    %p187 = scmp.lt.s32.totalorder %s11, 3
    %p188 = pnand %p186, %p187
    %p189 = pneg %p188
    // Predicated region
    $region37: #{tpu_custom_call.1} parent=5 // pred_check
      _
    $region38: #{tpu_custom_call.1} parent=5 // pred_check_branch
      %191 = sbr.rel (%p188) target = $region40
    $region39: #{tpu_custom_call.1} parent=5 // pred_region
      %s192 = ssub.s32 %s11, 1
      %p193 = scmp.lt.s32.totalorder %s16, 1
      %s194 = scalar_select %p193, %s16, 1
      %s195 = smul.addr %s194, 32
      %s196 = smul.addr %s195, 8
      %s197 = scalar_lea.vmem %s0, %s196
      %p198 = pneg %p37
      %p199 = pneg %p34
      %p200 = pneg %p58
      %p201 = pneg %p55
      %p202 = pneg %p79
      %p203 = pneg %p76
      %p204 = pneg %p100
      %p205 = pneg %p97
      %p206 = pneg %p121
      %p207 = pneg %p118
      %p208 = pneg %p147
      %p209 = pneg %p144
      %p210 = scmp.lt.s32.totalorder %s16, 1
      %s211 = scalar_select %p210, %s16, 1
      %s212 = smul.addr %s211, 32
      %s213 = smul.addr %s212, 8
      %s214 = scalar_lea.vmem %s5, %s213
      %p215 = scmp.lt.s32.totalorder %s16, 1
      %s216 = scalar_select %p215, %s16, 1
      %s217 = smul.addr %s216, 32
      %s218 = smul.addr %s217, 8
      %s219 = scalar_lea.vmem %s0, %s218
      %p220 = scmp.lt.s32.totalorder %s16, 1
      %s221 = scalar_select %p220, %s16, 1
      %s222 = smul.addr %s221, 32
      %s223 = smul.addr %s222, 8
      %s224 = scalar_lea.vmem %s5, %s223
      %vm225 = vcmask 31744
      %226 = vst.msk [vmem:[#allocation2] sm:$0xff] %vm225, 0.0
      %227 = vst.msk [vmem:[#allocation2 + $0x8] sm:$0xff] %vm225, 0.0
      %vm228 = vcmask 27648
      %229 = vst.msk [vmem:[#allocation2 + $0x10] sm:$0xf] %vm228, 0.0
      %230 = vst.msk [vmem:[#allocation2 + $0x18] sm:$0xff] %vm225, 0.0
      %231 = vst.msk [vmem:[#allocation2 + $0x20] sm:$0xff] %vm225, 0.0
      %232 = vst.msk [vmem:[#allocation2 + $0x28] sm:$0xf] %vm228, 0.0
      %s233 = scalar_lea.vmem [#allocation2], 432
      %234 = vst.msk [vmem:[%s233] sm:$0xff] %vm225, 0.0
      %235 = vst.msk [vmem:[%s233 + $0x8] sm:$0xff] %vm225, 0.0
      %236 = vst.msk [vmem:[%s233 + $0x10] sm:$0xf] %vm228, 0.0
      %237 = vst.msk [vmem:[%s233 + $0x18] sm:$0xff] %vm225, 0.0
      %238 = vst.msk [vmem:[%s233 + $0x20] sm:$0xff] %vm225, 0.0
      %239 = vst.msk [vmem:[%s233 + $0x28] sm:$0xf] %vm228, 0.0
      %s240 = scalar_lea.vmem [#allocation2], 48
      %vm241 = vcmask 25600
      %242 = vst.msk [vmem:[%s240] sm:$0x3] %vm241, 0.0
      %243 = vst.msk [vmem:[%s240 + $0x18] sm:$0x3] %vm241, 0.0
      %244 = vst.msk [vmem:[%s240 + $0x30] sm:$0x3] %vm241, 0.0
      %245 = vst.msk [vmem:[%s240 + $0x48] sm:$0x3] %vm241, 0.0
      %246 = vst.msk [vmem:[%s240 + $0x60] sm:$0x3] %vm241, 0.0
      %247 = vst.msk [vmem:[%s240 + $0x78] sm:$0x3] %vm241, 0.0
      %248 = vst.msk [vmem:[%s240 + $0x90] sm:$0x3] %vm241, 0.0
      %249 = vst.msk [vmem:[%s240 + $0xa8] sm:$0x3] %vm241, 0.0
      %250 = vst.msk [vmem:[%s240 + $0xc0] sm:$0x3] %vm241, 0.0
      %251 = vst.msk [vmem:[%s240 + $0xd8] sm:$0x3] %vm241, 0.0
      %252 = vst.msk [vmem:[%s240 + $0xf0] sm:$0x3] %vm241, 0.0
      %253 = vst.msk [vmem:[%s240 + $0x108] sm:$0x3] %vm241, 0.0
      %254 = vst.msk [vmem:[%s240 + $0x120] sm:$0x3] %vm241, 0.0
      %255 = vst.msk [vmem:[%s240 + $0x138] sm:$0x3] %vm241, 0.0
      %256 = vst.msk [vmem:[%s240 + $0x150] sm:$0x3] %vm241, 0.0
      %257 = vst.msk [vmem:[%s240 + $0x168] sm:$0x3] %vm241, 0.0
      %258 = vst.msk [vmem:[%s240 + $0x12] sm:$0x3] %vm241, 0.0
      %259 = vst.msk [vmem:[%s240 + $0x2a] sm:$0x3] %vm241, 0.0
      %260 = vst.msk [vmem:[%s240 + $0x42] sm:$0x3] %vm241, 0.0
      %261 = vst.msk [vmem:[%s240 + $0x5a] sm:$0x3] %vm241, 0.0
      %262 = vst.msk [vmem:[%s240 + $0x72] sm:$0x3] %vm241, 0.0
      %263 = vst.msk [vmem:[%s240 + $0x8a] sm:$0x3] %vm241, 0.0
      %264 = vst.msk [vmem:[%s240 + $0xa2] sm:$0x3] %vm241, 0.0
      %265 = vst.msk [vmem:[%s240 + $0xba] sm:$0x3] %vm241, 0.0
      %266 = vst.msk [vmem:[%s240 + $0xd2] sm:$0x3] %vm241, 0.0
      %267 = vst.msk [vmem:[%s240 + $0xea] sm:$0x3] %vm241, 0.0
      %268 = vst.msk [vmem:[%s240 + $0x102] sm:$0x3] %vm241, 0.0
      %269 = vst.msk [vmem:[%s240 + $0x11a] sm:$0x3] %vm241, 0.0
      %270 = vst.msk [vmem:[%s240 + $0x132] sm:$0x3] %vm241, 0.0
      %271 = vst.msk [vmem:[%s240 + $0x14a] sm:$0x3] %vm241, 0.0
      %272 = vst.msk [vmem:[%s240 + $0x162] sm:$0x3] %vm241, 0.0
      %273 = vst.msk [vmem:[%s240 + $0x17a] sm:$0x3] %vm241, 0.0
      %v274 = vld [vmem:[%s219] sm:$0xff]
      %v275 = vld [vmem:[%s219 + $0x8] sm:$0xff]
      %v276 = vld [vmem:[%s219 + $0x10] sm:$0xff]
      %v277 = vld [vmem:[%s219 + $0x18] sm:$0xff]
      %v278 = vld [vmem:[%s219 + $0x20] sm:$0xff]
      %v279 = vld [vmem:[%s219 + $0x28] sm:$0xff]
      %v280 = vld [vmem:[%s219 + $0x30] sm:$0xff]
      %v281 = vld [vmem:[%s219 + $0x38] sm:$0xff]
      %v282 = vld [vmem:[%s219 + $0x40] sm:$0xff]
      %v283 = vld [vmem:[%s219 + $0x48] sm:$0xff]
      %v284 = vld [vmem:[%s219 + $0x50] sm:$0xff]
      %v285 = vld [vmem:[%s219 + $0x58] sm:$0xff]
      %v286 = vld [vmem:[%s219 + $0x60] sm:$0xff]
      %v287 = vld [vmem:[%s219 + $0x68] sm:$0xff]
      %v288 = vld [vmem:[%s219 + $0x70] sm:$0xff]
      %v289 = vld [vmem:[%s219 + $0x78] sm:$0xff]
      %v290 = vld [vmem:[%s219 + $0x80] sm:$0xff]
      %v291 = vld [vmem:[%s219 + $0x88] sm:$0xff]
      %v292 = vld [vmem:[%s219 + $0x90] sm:$0xff]
      %v293 = vld [vmem:[%s219 + $0x98] sm:$0xff]
      %v294 = vld [vmem:[%s219 + $0xa0] sm:$0xff]
      %v295 = vld [vmem:[%s219 + $0xa8] sm:$0xff]
      %v296 = vld [vmem:[%s219 + $0xb0] sm:$0xff]
      %v297 = vld [vmem:[%s219 + $0xb8] sm:$0xff]
      %v298 = vld [vmem:[%s219 + $0xc0] sm:$0xff]
      %v299 = vld [vmem:[%s219 + $0xc8] sm:$0xff]
      %v300 = vld [vmem:[%s219 + $0xd0] sm:$0xff]
      %v301 = vld [vmem:[%s219 + $0xd8] sm:$0xff]
      %v302 = vld [vmem:[%s219 + $0xe0] sm:$0xff]
      %v303 = vld [vmem:[%s219 + $0xe8] sm:$0xff]
      %v304 = vld [vmem:[%s219 + $0xf0] sm:$0xff]
      %v305 = vld [vmem:[%s219 + $0xf8] sm:$0xff]
      %306 = vst.msk [vmem:[%s240 + $0x2] sm:$0xff] %vm225, %v274
      %307 = vst.msk [vmem:[%s240 + $0xa] sm:$0xff] %vm225, %v275
      %308 = vst.msk [vmem:[%s240 + $0x1a] sm:$0xff] %vm225, %v276
      %309 = vst.msk [vmem:[%s240 + $0x22] sm:$0xff] %vm225, %v277
      %310 = vst.msk [vmem:[%s240 + $0x32] sm:$0xff] %vm225, %v278
      %311 = vst.msk [vmem:[%s240 + $0x3a] sm:$0xff] %vm225, %v279
      %312 = vst.msk [vmem:[%s240 + $0x4a] sm:$0xff] %vm225, %v280
      %313 = vst.msk [vmem:[%s240 + $0x52] sm:$0xff] %vm225, %v281
      %314 = vst.msk [vmem:[%s240 + $0x62] sm:$0xff] %vm225, %v282
      %315 = vst.msk [vmem:[%s240 + $0x6a] sm:$0xff] %vm225, %v283
      %316 = vst.msk [vmem:[%s240 + $0x7a] sm:$0xff] %vm225, %v284
      %317 = vst.msk [vmem:[%s240 + $0x82] sm:$0xff] %vm225, %v285
      %318 = vst.msk [vmem:[%s240 + $0x92] sm:$0xff] %vm225, %v286
      %319 = vst.msk [vmem:[%s240 + $0x9a] sm:$0xff] %vm225, %v287
      %320 = vst.msk [vmem:[%s240 + $0xaa] sm:$0xff] %vm225, %v288
      %321 = vst.msk [vmem:[%s240 + $0xb2] sm:$0xff] %vm225, %v289
      %322 = vst.msk [vmem:[%s240 + $0xc2] sm:$0xff] %vm225, %v290
      %323 = vst.msk [vmem:[%s240 + $0xca] sm:$0xff] %vm225, %v291
      %324 = vst.msk [vmem:[%s240 + $0xda] sm:$0xff] %vm225, %v292
      %325 = vst.msk [vmem:[%s240 + $0xe2] sm:$0xff] %vm225, %v293
      %326 = vst.msk [vmem:[%s240 + $0xf2] sm:$0xff] %vm225, %v294
      %327 = vst.msk [vmem:[%s240 + $0xfa] sm:$0xff] %vm225, %v295
      %328 = vst.msk [vmem:[%s240 + $0x10a] sm:$0xff] %vm225, %v296
      %329 = vst.msk [vmem:[%s240 + $0x112] sm:$0xff] %vm225, %v297
      %330 = vst.msk [vmem:[%s240 + $0x122] sm:$0xff] %vm225, %v298
      %331 = vst.msk [vmem:[%s240 + $0x12a] sm:$0xff] %vm225, %v299
      %332 = vst.msk [vmem:[%s240 + $0x13a] sm:$0xff] %vm225, %v300
      %333 = vst.msk [vmem:[%s240 + $0x142] sm:$0xff] %vm225, %v301
      %334 = vst.msk [vmem:[%s240 + $0x152] sm:$0xff] %vm225, %v302
      %335 = vst.msk [vmem:[%s240 + $0x15a] sm:$0xff] %vm225, %v303
      %336 = vst.msk [vmem:[%s240 + $0x16a] sm:$0xff] %vm225, %v304
      %337 = vst.msk [vmem:[%s240 + $0x172] sm:$0xff] %vm225, %v305
      %v338 = vld [vmem:[%s2] sm:$0x1]
      %v340 = vperm.slane %v338, 0
      %v342 = vld [vmem:[#allocation2] sm:$0xff]
      %v343 = vld [vmem:[#allocation2 + $0x8] sm:$0xff]
      %v344 = vld [vmem:[#allocation2 + $0x18] sm:$0xff]
      %v345 = vld [vmem:[#allocation2 + $0x20] sm:$0xff]
      %v346 = vld [vmem:[#allocation2 + $0x30] sm:$0xff]
      %v347 = vld [vmem:[#allocation2 + $0x38] sm:$0xff]
      %v348 = vld [vmem:[#allocation2 + $0x48] sm:$0xff]
      %v349 = vld [vmem:[#allocation2 + $0x50] sm:$0xff]
      %v350 = vld [vmem:[#allocation2 + $0x60] sm:$0xff]
      %v351 = vld [vmem:[#allocation2 + $0x68] sm:$0xff]
      %v352 = vld [vmem:[#allocation2 + $0x78] sm:$0xff]
      %v353 = vld [vmem:[#allocation2 + $0x80] sm:$0xff]
      %v354 = vld [vmem:[#allocation2 + $0x90] sm:$0xff]
      %v355 = vld [vmem:[#allocation2 + $0x98] sm:$0xff]
      %v356 = vld [vmem:[#allocation2 + $0xa8] sm:$0xff]
      %v357 = vld [vmem:[#allocation2 + $0xb0] sm:$0xff]
      %v358 = vld [vmem:[#allocation2 + $0xc0] sm:$0xff]
      %v359 = vld [vmem:[#allocation2 + $0xc8] sm:$0xff]
      %v360 = vld [vmem:[#allocation2 + $0xd8] sm:$0xff]
      %v361 = vld [vmem:[#allocation2 + $0xe0] sm:$0xff]
      %v362 = vld [vmem:[#allocation2 + $0xf0] sm:$0xff]
      %v363 = vld [vmem:[#allocation2 + $0xf8] sm:$0xff]
      %v364 = vld [vmem:[#allocation2 + $0x108] sm:$0xff]
      %v365 = vld [vmem:[#allocation2 + $0x110] sm:$0xff]
      %v366 = vld [vmem:[#allocation2 + $0x120] sm:$0xff]
      %v367 = vld [vmem:[#allocation2 + $0x128] sm:$0xff]
      %v368 = vld [vmem:[#allocation2 + $0x138] sm:$0xff]
      %v369 = vld [vmem:[#allocation2 + $0x140] sm:$0xff]
      %v370 = vld [vmem:[#allocation2 + $0x150] sm:$0xff]
      %v371 = vld [vmem:[#allocation2 + $0x158] sm:$0xff]
      %v372 = vld [vmem:[#allocation2 + $0x168] sm:$0xff]
      %v373 = vld [vmem:[#allocation2 + $0x170] sm:$0xff]
      %v374 = vld [vmem:[%s1] sm:$0xf]
      %v376 = vsel %vm225, %v342, 0
      %v379 = vsel %vm225, %v343, 0
      %v382 = vsel %vm225, %v344, 0
      %v385 = vsel %vm225, %v345, 0
      %v388 = vsel %vm225, %v346, 0
      %v391 = vsel %vm225, %v347, 0
      %v394 = vsel %vm225, %v348, 0
      %v397 = vsel %vm225, %v349, 0
      %v400 = vsel %vm225, %v350, 0
      %v403 = vsel %vm225, %v351, 0
      %v406 = vsel %vm225, %v352, 0
      %v409 = vsel %vm225, %v353, 0
      %v412 = vsel %vm225, %v354, 0
      %v415 = vsel %vm225, %v355, 0
      %v418 = vsel %vm225, %v356, 0
      %v421 = vsel %vm225, %v357, 0
      %v424 = vsel %vm225, %v358, 0
      %v427 = vsel %vm225, %v359, 0
      %v430 = vsel %vm225, %v360, 0
      %v433 = vsel %vm225, %v361, 0
      %v436 = vsel %vm225, %v362, 0
      %v439 = vsel %vm225, %v363, 0
      %v442 = vsel %vm225, %v364, 0
      %v445 = vsel %vm225, %v365, 0
      %v448 = vsel %vm225, %v366, 0
      %v451 = vsel %vm225, %v367, 0
      %v454 = vsel %vm225, %v368, 0
      %v457 = vsel %vm225, %v369, 0
      %v460 = vsel %vm225, %v370, 0
      %v463 = vsel %vm225, %v371, 0
      %v466 = vsel %vm225, %v372, 0
      %v469 = vsel %vm225, %v373, 0
      %vm471 = vcmask 1043456
      %v473 = vsel %vm471, %v374, 0
      %475 = vmatpush.msra.mxu0 0.0
      %476 = vmatpush.msra.mxu0 0.0
      %477 = vmatpush.msra.mxu0 0.0
      %478 = vmatpush.msra.mxu0 0.0
      %479 = vmatpush.msra.mxu0 0.0
      %480 = vmatpush.msra.mxu0 0.0
      %481 = vmatpush.msra.mxu0 0.0
      %482 = vmatpush.msra.mxu0 0.0
      %483 = vmatpush.msra.mxu0 0.0
      %484 = vmatpush.msra.mxu0 0.0
      %485 = vmatpush.msra.mxu0 0.0
      %486 = vmatpush.msra.mxu0 0.0
      %487 = vmatpush.msra.mxu0 0.0
      %488 = vmatpush.msra.mxu0 0.0
      %489 = vmatpush.msra.mxu0 0.0
      %490 = vmatpush.msra.mxu0 %v473
      %491 = vmatmul.f32.gmra.mxu0 %v376
      %v492 = vpop.f32.mrf.mxu0
      %v493 = vadd.f32 0.0, %v492
      %494 = vmatmul.f32.gmra.mxu0 %v379
      %v495 = vpop.f32.mrf.mxu0
      %v496 = vadd.f32 0.0, %v495
      %497 = vmatmul.f32.gmra.mxu0 %v382
      %v498 = vpop.f32.mrf.mxu0
      %v499 = vadd.f32 0.0, %v498
      %500 = vmatmul.f32.gmra.mxu0 %v385
      %v501 = vpop.f32.mrf.mxu0
      %v502 = vadd.f32 0.0, %v501
      %503 = vmatmul.f32.gmra.mxu0 %v388
      %v504 = vpop.f32.mrf.mxu0
      %v505 = vadd.f32 0.0, %v504
      %506 = vmatmul.f32.gmra.mxu0 %v391
      %v507 = vpop.f32.mrf.mxu0
      %v508 = vadd.f32 0.0, %v507
      %509 = vmatmul.f32.gmra.mxu0 %v394
      %v510 = vpop.f32.mrf.mxu0
      %v511 = vadd.f32 0.0, %v510
      %512 = vmatmul.f32.gmra.mxu0 %v397
      %v513 = vpop.f32.mrf.mxu0
      %v514 = vadd.f32 0.0, %v513
      %515 = vmatmul.f32.gmra.mxu0 %v400
      %v516 = vpop.f32.mrf.mxu0
      %v517 = vadd.f32 0.0, %v516
      %518 = vmatmul.f32.gmra.mxu0 %v403
      %v519 = vpop.f32.mrf.mxu0
      %v520 = vadd.f32 0.0, %v519
      %521 = vmatmul.f32.gmra.mxu0 %v406
      %v522 = vpop.f32.mrf.mxu0
      %v523 = vadd.f32 0.0, %v522
      %524 = vmatmul.f32.gmra.mxu0 %v409
      %v525 = vpop.f32.mrf.mxu0
      %v526 = vadd.f32 0.0, %v525
      %527 = vmatmul.f32.gmra.mxu0 %v412
      %v528 = vpop.f32.mrf.mxu0
      %v529 = vadd.f32 0.0, %v528
      %530 = vmatmul.f32.gmra.mxu0 %v415
      %v531 = vpop.f32.mrf.mxu0
      %v532 = vadd.f32 0.0, %v531
      %533 = vmatmul.f32.gmra.mxu0 %v418
      %v534 = vpop.f32.mrf.mxu0
      %v535 = vadd.f32 0.0, %v534
      %536 = vmatmul.f32.gmra.mxu0 %v421
      %v537 = vpop.f32.mrf.mxu0
      %v538 = vadd.f32 0.0, %v537
      %539 = vmatmul.f32.gmra.mxu0 %v424
      %v540 = vpop.f32.mrf.mxu0
      %v541 = vadd.f32 0.0, %v540
      %542 = vmatmul.f32.gmra.mxu0 %v427
      %v543 = vpop.f32.mrf.mxu0
      %v544 = vadd.f32 0.0, %v543
      %545 = vmatmul.f32.gmra.mxu0 %v430
      %v546 = vpop.f32.mrf.mxu0
      %v547 = vadd.f32 0.0, %v546
      %548 = vmatmul.f32.gmra.mxu0 %v433
      %v549 = vpop.f32.mrf.mxu0
      %v550 = vadd.f32 0.0, %v549
      %551 = vmatmul.f32.gmra.mxu0 %v436
      %v552 = vpop.f32.mrf.mxu0
      %v553 = vadd.f32 0.0, %v552
      %554 = vmatmul.f32.gmra.mxu0 %v439
      %v555 = vpop.f32.mrf.mxu0
      %v556 = vadd.f32 0.0, %v555
      %557 = vmatmul.f32.gmra.mxu0 %v442
      %v558 = vpop.f32.mrf.mxu0
      %v559 = vadd.f32 0.0, %v558
      %560 = vmatmul.f32.gmra.mxu0 %v445
      %v561 = vpop.f32.mrf.mxu0
      %v562 = vadd.f32 0.0, %v561
      %563 = vmatmul.f32.gmra.mxu0 %v448
      %v564 = vpop.f32.mrf.mxu0
      %v565 = vadd.f32 0.0, %v564
      %566 = vmatmul.f32.gmra.mxu0 %v451
      %v567 = vpop.f32.mrf.mxu0
      %v568 = vadd.f32 0.0, %v567
      %569 = vmatmul.f32.gmra.mxu0 %v454
      %v570 = vpop.f32.mrf.mxu0
      %v571 = vadd.f32 0.0, %v570
      %572 = vmatmul.f32.gmra.mxu0 %v457
      %v573 = vpop.f32.mrf.mxu0
      %v574 = vadd.f32 0.0, %v573
      %575 = vmatmul.f32.gmra.mxu0 %v460
      %v576 = vpop.f32.mrf.mxu0
      %v577 = vadd.f32 0.0, %v576
      %578 = vmatmul.f32.gmra.mxu0 %v463
      %v579 = vpop.f32.mrf.mxu0
      %v580 = vadd.f32 0.0, %v579
      %581 = vmatmul.f32.gmra.mxu0 %v466
      %v582 = vpop.f32.mrf.mxu0
      %v583 = vadd.f32 0.0, %v582
      %584 = vmatmul.f32.gmra.mxu0 %v469
      %v585 = vpop.f32.mrf.mxu0
      %v586 = vadd.f32 0.0, %v585
      %587 = vdwg.mxu0
      %v588 = vadd.f32 %v340, %v493
      %v589 = vadd.f32 %v340, %v496
      %v590 = vadd.f32 %v340, %v499
      %v591 = vadd.f32 %v340, %v502
      %v592 = vadd.f32 %v340, %v505
      %v593 = vadd.f32 %v340, %v508
      %v594 = vadd.f32 %v340, %v511
      %v595 = vadd.f32 %v340, %v514
      %v596 = vadd.f32 %v340, %v517
      %v597 = vadd.f32 %v340, %v520
      %v598 = vadd.f32 %v340, %v523
      %v599 = vadd.f32 %v340, %v526
      %v600 = vadd.f32 %v340, %v529
      %v601 = vadd.f32 %v340, %v532
      %v602 = vadd.f32 %v340, %v535
      %v603 = vadd.f32 %v340, %v538
      %v604 = vadd.f32 %v340, %v541
      %v605 = vadd.f32 %v340, %v544
      %v606 = vadd.f32 %v340, %v547
      %v607 = vadd.f32 %v340, %v550
      %v608 = vadd.f32 %v340, %v553
      %v609 = vadd.f32 %v340, %v556
      %v610 = vadd.f32 %v340, %v559
      %v611 = vadd.f32 %v340, %v562
      %v612 = vadd.f32 %v340, %v565
      %v613 = vadd.f32 %v340, %v568
      %v614 = vadd.f32 %v340, %v571
      %v615 = vadd.f32 %v340, %v574
      %v616 = vadd.f32 %v340, %v577
      %v617 = vadd.f32 %v340, %v580
      %v618 = vadd.f32 %v340, %v583
      %v619 = vadd.f32 %v340, %v586
      %v620 = vld [vmem:[#allocation2 + $0x2] sm:$0xff]
      %v621 = vld [vmem:[#allocation2 + $0xa] sm:$0xff]
      %v622 = vld [vmem:[#allocation2 + $0x1a] sm:$0xff]
      %v623 = vld [vmem:[#allocation2 + $0x22] sm:$0xff]
      %v624 = vld [vmem:[#allocation2 + $0x32] sm:$0xff]
      %v625 = vld [vmem:[#allocation2 + $0x3a] sm:$0xff]
      %v626 = vld [vmem:[#allocation2 + $0x4a] sm:$0xff]
      %v627 = vld [vmem:[#allocation2 + $0x52] sm:$0xff]
      %v628 = vld [vmem:[#allocation2 + $0x62] sm:$0xff]
      %v629 = vld [vmem:[#allocation2 + $0x6a] sm:$0xff]
      %v630 = vld [vmem:[#allocation2 + $0x7a] sm:$0xff]
      %v631 = vld [vmem:[#allocation2 + $0x82] sm:$0xff]
      %v632 = vld [vmem:[#allocation2 + $0x92] sm:$0xff]
      %v633 = vld [vmem:[#allocation2 + $0x9a] sm:$0xff]
      %v634 = vld [vmem:[#allocation2 + $0xaa] sm:$0xff]
      %v635 = vld [vmem:[#allocation2 + $0xb2] sm:$0xff]
      %v636 = vld [vmem:[#allocation2 + $0xc2] sm:$0xff]
      %v637 = vld [vmem:[#allocation2 + $0xca] sm:$0xff]
      %v638 = vld [vmem:[#allocation2 + $0xda] sm:$0xff]
      %v639 = vld [vmem:[#allocation2 + $0xe2] sm:$0xff]
      %v640 = vld [vmem:[#allocation2 + $0xf2] sm:$0xff]
      %v641 = vld [vmem:[#allocation2 + $0xfa] sm:$0xff]
      %v642 = vld [vmem:[#allocation2 + $0x10a] sm:$0xff]
      %v643 = vld [vmem:[#allocation2 + $0x112] sm:$0xff]
      %v644 = vld [vmem:[#allocation2 + $0x122] sm:$0xff]
      %v645 = vld [vmem:[#allocation2 + $0x12a] sm:$0xff]
      %v646 = vld [vmem:[#allocation2 + $0x13a] sm:$0xff]
      %v647 = vld [vmem:[#allocation2 + $0x142] sm:$0xff]
      %v648 = vld [vmem:[#allocation2 + $0x152] sm:$0xff]
      %v649 = vld [vmem:[#allocation2 + $0x15a] sm:$0xff]
      %v650 = vld [vmem:[#allocation2 + $0x16a] sm:$0xff]
      %v651 = vld [vmem:[#allocation2 + $0x172] sm:$0xff]
      %s652 = scalar_lea.vmem %s1, 4
      %v653 = vld [vmem:[%s652] sm:$0xf]
      %v655 = vsel %vm225, %v620, 0
      %v658 = vsel %vm225, %v621, 0
      %v661 = vsel %vm225, %v622, 0
      %v664 = vsel %vm225, %v623, 0
      %v667 = vsel %vm225, %v624, 0
      %v670 = vsel %vm225, %v625, 0
      %v673 = vsel %vm225, %v626, 0
      %v676 = vsel %vm225, %v627, 0
      %v679 = vsel %vm225, %v628, 0
      %v682 = vsel %vm225, %v629, 0
      %v685 = vsel %vm225, %v630, 0
      %v688 = vsel %vm225, %v631, 0
      %v691 = vsel %vm225, %v632, 0
      %v694 = vsel %vm225, %v633, 0
      %v697 = vsel %vm225, %v634, 0
      %v700 = vsel %vm225, %v635, 0
      %v703 = vsel %vm225, %v636, 0
      %v706 = vsel %vm225, %v637, 0
      %v709 = vsel %vm225, %v638, 0
      %v712 = vsel %vm225, %v639, 0
      %v715 = vsel %vm225, %v640, 0
      %v718 = vsel %vm225, %v641, 0
      %v721 = vsel %vm225, %v642, 0
      %v724 = vsel %vm225, %v643, 0
      %v727 = vsel %vm225, %v644, 0
      %v730 = vsel %vm225, %v645, 0
      %v733 = vsel %vm225, %v646, 0
      %v736 = vsel %vm225, %v647, 0
      %v739 = vsel %vm225, %v648, 0
      %v742 = vsel %vm225, %v649, 0
      %v745 = vsel %vm225, %v650, 0
      %v748 = vsel %vm225, %v651, 0
      %v751 = vsel %vm471, %v653, 0
      %753 = vmatpush.msra.mxu0 0.0
      %754 = vmatpush.msra.mxu0 0.0
      %755 = vmatpush.msra.mxu0 0.0
      %756 = vmatpush.msra.mxu0 0.0
      %757 = vmatpush.msra.mxu0 0.0
      %758 = vmatpush.msra.mxu0 0.0
      %759 = vmatpush.msra.mxu0 0.0
      %760 = vmatpush.msra.mxu0 0.0
      %761 = vmatpush.msra.mxu0 0.0
      %762 = vmatpush.msra.mxu0 0.0
      %763 = vmatpush.msra.mxu0 0.0
      %764 = vmatpush.msra.mxu0 0.0
      %765 = vmatpush.msra.mxu0 0.0
      %766 = vmatpush.msra.mxu0 0.0
      %767 = vmatpush.msra.mxu0 0.0
      %768 = vmatpush.msra.mxu0 %v751
      %769 = vmatmul.f32.gmra.mxu0 %v655
      %v770 = vpop.f32.mrf.mxu0
      %v771 = vadd.f32 0.0, %v770
      %772 = vmatmul.f32.gmra.mxu0 %v658
      %v773 = vpop.f32.mrf.mxu0
      %v774 = vadd.f32 0.0, %v773
      %775 = vmatmul.f32.gmra.mxu0 %v661
      %v776 = vpop.f32.mrf.mxu0
      %v777 = vadd.f32 0.0, %v776
      %778 = vmatmul.f32.gmra.mxu0 %v664
      %v779 = vpop.f32.mrf.mxu0
      %v780 = vadd.f32 0.0, %v779
      %781 = vmatmul.f32.gmra.mxu0 %v667
      %v782 = vpop.f32.mrf.mxu0
      %v783 = vadd.f32 0.0, %v782
      %784 = vmatmul.f32.gmra.mxu0 %v670
      %v785 = vpop.f32.mrf.mxu0
      %v786 = vadd.f32 0.0, %v785
      %787 = vmatmul.f32.gmra.mxu0 %v673
      %v788 = vpop.f32.mrf.mxu0
      %v789 = vadd.f32 0.0, %v788
      %790 = vmatmul.f32.gmra.mxu0 %v676
      %v791 = vpop.f32.mrf.mxu0
      %v792 = vadd.f32 0.0, %v791
      %793 = vmatmul.f32.gmra.mxu0 %v679
      %v794 = vpop.f32.mrf.mxu0
      %v795 = vadd.f32 0.0, %v794
      %796 = vmatmul.f32.gmra.mxu0 %v682
      %v797 = vpop.f32.mrf.mxu0
      %v798 = vadd.f32 0.0, %v797
      %799 = vmatmul.f32.gmra.mxu0 %v685
      %v800 = vpop.f32.mrf.mxu0
      %v801 = vadd.f32 0.0, %v800
      %802 = vmatmul.f32.gmra.mxu0 %v688
      %v803 = vpop.f32.mrf.mxu0
      %v804 = vadd.f32 0.0, %v803
      %805 = vmatmul.f32.gmra.mxu0 %v691
      %v806 = vpop.f32.mrf.mxu0
      %v807 = vadd.f32 0.0, %v806
      %808 = vmatmul.f32.gmra.mxu0 %v694
      %v809 = vpop.f32.mrf.mxu0
      %v810 = vadd.f32 0.0, %v809
      %811 = vmatmul.f32.gmra.mxu0 %v697
      %v812 = vpop.f32.mrf.mxu0
      %v813 = vadd.f32 0.0, %v812
      %814 = vmatmul.f32.gmra.mxu0 %v700
      %v815 = vpop.f32.mrf.mxu0
      %v816 = vadd.f32 0.0, %v815
      %817 = vmatmul.f32.gmra.mxu0 %v703
      %v818 = vpop.f32.mrf.mxu0
      %v819 = vadd.f32 0.0, %v818
      %820 = vmatmul.f32.gmra.mxu0 %v706
      %v821 = vpop.f32.mrf.mxu0
      %v822 = vadd.f32 0.0, %v821
      %823 = vmatmul.f32.gmra.mxu0 %v709
      %v824 = vpop.f32.mrf.mxu0
      %v825 = vadd.f32 0.0, %v824
      %826 = vmatmul.f32.gmra.mxu0 %v712
      %v827 = vpop.f32.mrf.mxu0
      %v828 = vadd.f32 0.0, %v827
      %829 = vmatmul.f32.gmra.mxu0 %v715
      %v830 = vpop.f32.mrf.mxu0
      %v831 = vadd.f32 0.0, %v830
      %832 = vmatmul.f32.gmra.mxu0 %v718
      %v833 = vpop.f32.mrf.mxu0
      %v834 = vadd.f32 0.0, %v833
      %835 = vmatmul.f32.gmra.mxu0 %v721
      %v836 = vpop.f32.mrf.mxu0
      %v837 = vadd.f32 0.0, %v836
      %838 = vmatmul.f32.gmra.mxu0 %v724
      %v839 = vpop.f32.mrf.mxu0
      %v840 = vadd.f32 0.0, %v839
      %841 = vmatmul.f32.gmra.mxu0 %v727
      %v842 = vpop.f32.mrf.mxu0
      %v843 = vadd.f32 0.0, %v842
      %844 = vmatmul.f32.gmra.mxu0 %v730
      %v845 = vpop.f32.mrf.mxu0
      %v846 = vadd.f32 0.0, %v845
      %847 = vmatmul.f32.gmra.mxu0 %v733
      %v848 = vpop.f32.mrf.mxu0
      %v849 = vadd.f32 0.0, %v848
      %850 = vmatmul.f32.gmra.mxu0 %v736
      %v851 = vpop.f32.mrf.mxu0
      %v852 = vadd.f32 0.0, %v851
      %853 = vmatmul.f32.gmra.mxu0 %v739
      %v854 = vpop.f32.mrf.mxu0
      %v855 = vadd.f32 0.0, %v854
      %856 = vmatmul.f32.gmra.mxu0 %v742
      %v857 = vpop.f32.mrf.mxu0
      %v858 = vadd.f32 0.0, %v857
      %859 = vmatmul.f32.gmra.mxu0 %v745
      %v860 = vpop.f32.mrf.mxu0
      %v861 = vadd.f32 0.0, %v860
      %862 = vmatmul.f32.gmra.mxu0 %v748
      %v863 = vpop.f32.mrf.mxu0
      %v864 = vadd.f32 0.0, %v863
      %865 = vdwg.mxu0
      %v866 = vadd.f32 %v588, %v771
      %v867 = vadd.f32 %v589, %v774
      %v868 = vadd.f32 %v590, %v777
      %v869 = vadd.f32 %v591, %v780
      %v870 = vadd.f32 %v592, %v783
      %v871 = vadd.f32 %v593, %v786
      %v872 = vadd.f32 %v594, %v789
      %v873 = vadd.f32 %v595, %v792
      %v874 = vadd.f32 %v596, %v795
      %v875 = vadd.f32 %v597, %v798
      %v876 = vadd.f32 %v598, %v801
      %v877 = vadd.f32 %v599, %v804
      %v878 = vadd.f32 %v600, %v807
      %v879 = vadd.f32 %v601, %v810
      %v880 = vadd.f32 %v602, %v813
      %v881 = vadd.f32 %v603, %v816
      %v882 = vadd.f32 %v604, %v819
      %v883 = vadd.f32 %v605, %v822
      %v884 = vadd.f32 %v606, %v825
      %v885 = vadd.f32 %v607, %v828
      %v886 = vadd.f32 %v608, %v831
      %v887 = vadd.f32 %v609, %v834
      %v888 = vadd.f32 %v610, %v837
      %v889 = vadd.f32 %v611, %v840
      %v890 = vadd.f32 %v612, %v843
      %v891 = vadd.f32 %v613, %v846
      %v892 = vadd.f32 %v614, %v849
      %v893 = vadd.f32 %v615, %v852
      %v894 = vadd.f32 %v616, %v855
      %v895 = vadd.f32 %v617, %v858
      %v896 = vadd.f32 %v618, %v861
      %v897 = vadd.f32 %v619, %v864
      %v898 = vld [vmem:[#allocation2 + $0x4] sm:$0xff]
      %v899 = vld [vmem:[#allocation2 + $0xc] sm:$0xff]
      %v900 = vld [vmem:[#allocation2 + $0x1c] sm:$0xff]
      %v901 = vld [vmem:[#allocation2 + $0x24] sm:$0xff]
      %v902 = vld [vmem:[#allocation2 + $0x34] sm:$0xff]
      %v903 = vld [vmem:[#allocation2 + $0x3c] sm:$0xff]
      %v904 = vld [vmem:[#allocation2 + $0x4c] sm:$0xff]
      %v905 = vld [vmem:[#allocation2 + $0x54] sm:$0xff]
      %v906 = vld [vmem:[#allocation2 + $0x64] sm:$0xff]
      %v907 = vld [vmem:[#allocation2 + $0x6c] sm:$0xff]
      %v908 = vld [vmem:[#allocation2 + $0x7c] sm:$0xff]
      %v909 = vld [vmem:[#allocation2 + $0x84] sm:$0xff]
      %v910 = vld [vmem:[#allocation2 + $0x94] sm:$0xff]
      %v911 = vld [vmem:[#allocation2 + $0x9c] sm:$0xff]
      %v912 = vld [vmem:[#allocation2 + $0xac] sm:$0xff]
      %v913 = vld [vmem:[#allocation2 + $0xb4] sm:$0xff]
      %v914 = vld [vmem:[#allocation2 + $0xc4] sm:$0xff]
      %v915 = vld [vmem:[#allocation2 + $0xcc] sm:$0xff]
      %v916 = vld [vmem:[#allocation2 + $0xdc] sm:$0xff]
      %v917 = vld [vmem:[#allocation2 + $0xe4] sm:$0xff]
      %v918 = vld [vmem:[#allocation2 + $0xf4] sm:$0xff]
      %v919 = vld [vmem:[#allocation2 + $0xfc] sm:$0xff]
      %v920 = vld [vmem:[#allocation2 + $0x10c] sm:$0xff]
      %v921 = vld [vmem:[#allocation2 + $0x114] sm:$0xff]
      %v922 = vld [vmem:[#allocation2 + $0x124] sm:$0xff]
      %v923 = vld [vmem:[#allocation2 + $0x12c] sm:$0xff]
      %v924 = vld [vmem:[#allocation2 + $0x13c] sm:$0xff]
      %v925 = vld [vmem:[#allocation2 + $0x144] sm:$0xff]
      %v926 = vld [vmem:[#allocation2 + $0x154] sm:$0xff]
      %v927 = vld [vmem:[#allocation2 + $0x15c] sm:$0xff]
      %v928 = vld [vmem:[#allocation2 + $0x16c] sm:$0xff]
      %v929 = vld [vmem:[#allocation2 + $0x174] sm:$0xff]
      %s930 = scalar_lea.vmem %s1, 8
      %v931 = vld [vmem:[%s930] sm:$0xf]
      %v933 = vsel %vm225, %v898, 0
      %v936 = vsel %vm225, %v899, 0
      %v939 = vsel %vm225, %v900, 0
      %v942 = vsel %vm225, %v901, 0
      %v945 = vsel %vm225, %v902, 0
      %v948 = vsel %vm225, %v903, 0
      %v951 = vsel %vm225, %v904, 0
      %v954 = vsel %vm225, %v905, 0
      %v957 = vsel %vm225, %v906, 0
      %v960 = vsel %vm225, %v907, 0
      %v963 = vsel %vm225, %v908, 0
      %v966 = vsel %vm225, %v909, 0
      %v969 = vsel %vm225, %v910, 0
      %v972 = vsel %vm225, %v911, 0
      %v975 = vsel %vm225, %v912, 0
      %v978 = vsel %vm225, %v913, 0
      %v981 = vsel %vm225, %v914, 0
      %v984 = vsel %vm225, %v915, 0
      %v987 = vsel %vm225, %v916, 0
      %v990 = vsel %vm225, %v917, 0
      %v993 = vsel %vm225, %v918, 0
      %v996 = vsel %vm225, %v919, 0
      %v999 = vsel %vm225, %v920, 0
      %v1002 = vsel %vm225, %v921, 0
      %v1005 = vsel %vm225, %v922, 0
      %v1008 = vsel %vm225, %v923, 0
      %v1011 = vsel %vm225, %v924, 0
      %v1014 = vsel %vm225, %v925, 0
      %v1017 = vsel %vm225, %v926, 0
      %v1020 = vsel %vm225, %v927, 0
      %v1023 = vsel %vm225, %v928, 0
      %v1026 = vsel %vm225, %v929, 0
      %v1029 = vsel %vm471, %v931, 0
      %1031 = vmatpush.msra.mxu0 0.0
      %1032 = vmatpush.msra.mxu0 0.0
      %1033 = vmatpush.msra.mxu0 0.0
      %1034 = vmatpush.msra.mxu0 0.0
      %1035 = vmatpush.msra.mxu0 0.0
      %1036 = vmatpush.msra.mxu0 0.0
      %1037 = vmatpush.msra.mxu0 0.0
      %1038 = vmatpush.msra.mxu0 0.0
      %1039 = vmatpush.msra.mxu0 0.0
      %1040 = vmatpush.msra.mxu0 0.0
      %1041 = vmatpush.msra.mxu0 0.0
      %1042 = vmatpush.msra.mxu0 0.0
      %1043 = vmatpush.msra.mxu0 0.0
      %1044 = vmatpush.msra.mxu0 0.0
      %1045 = vmatpush.msra.mxu0 0.0
      %1046 = vmatpush.msra.mxu0 %v1029
      %1047 = vmatmul.f32.gmra.mxu0 %v933
      %v1048 = vpop.f32.mrf.mxu0
      %v1049 = vadd.f32 0.0, %v1048
      %1050 = vmatmul.f32.gmra.mxu0 %v936
      %v1051 = vpop.f32.mrf.mxu0
      %v1052 = vadd.f32 0.0, %v1051
      %1053 = vmatmul.f32.gmra.mxu0 %v939
      %v1054 = vpop.f32.mrf.mxu0
      %v1055 = vadd.f32 0.0, %v1054
      %1056 = vmatmul.f32.gmra.mxu0 %v942
      %v1057 = vpop.f32.mrf.mxu0
      %v1058 = vadd.f32 0.0, %v1057
      %1059 = vmatmul.f32.gmra.mxu0 %v945
      %v1060 = vpop.f32.mrf.mxu0
      %v1061 = vadd.f32 0.0, %v1060
      %1062 = vmatmul.f32.gmra.mxu0 %v948
      %v1063 = vpop.f32.mrf.mxu0
      %v1064 = vadd.f32 0.0, %v1063
      %1065 = vmatmul.f32.gmra.mxu0 %v951
      %v1066 = vpop.f32.mrf.mxu0
      %v1067 = vadd.f32 0.0, %v1066
      %1068 = vmatmul.f32.gmra.mxu0 %v954
      %v1069 = vpop.f32.mrf.mxu0
      %v1070 = vadd.f32 0.0, %v1069
      %1071 = vmatmul.f32.gmra.mxu0 %v957
      %v1072 = vpop.f32.mrf.mxu0
      %v1073 = vadd.f32 0.0, %v1072
      %1074 = vmatmul.f32.gmra.mxu0 %v960
      %v1075 = vpop.f32.mrf.mxu0
      %v1076 = vadd.f32 0.0, %v1075
      %1077 = vmatmul.f32.gmra.mxu0 %v963
      %v1078 = vpop.f32.mrf.mxu0
      %v1079 = vadd.f32 0.0, %v1078
      %1080 = vmatmul.f32.gmra.mxu0 %v966
      %v1081 = vpop.f32.mrf.mxu0
      %v1082 = vadd.f32 0.0, %v1081
      %1083 = vmatmul.f32.gmra.mxu0 %v969
      %v1084 = vpop.f32.mrf.mxu0
      %v1085 = vadd.f32 0.0, %v1084
      %1086 = vmatmul.f32.gmra.mxu0 %v972
      %v1087 = vpop.f32.mrf.mxu0
      %v1088 = vadd.f32 0.0, %v1087
      %1089 = vmatmul.f32.gmra.mxu0 %v975
      %v1090 = vpop.f32.mrf.mxu0
      %v1091 = vadd.f32 0.0, %v1090
      %1092 = vmatmul.f32.gmra.mxu0 %v978
      %v1093 = vpop.f32.mrf.mxu0
      %v1094 = vadd.f32 0.0, %v1093
      %1095 = vmatmul.f32.gmra.mxu0 %v981
      %v1096 = vpop.f32.mrf.mxu0
      %v1097 = vadd.f32 0.0, %v1096
      %1098 = vmatmul.f32.gmra.mxu0 %v984
      %v1099 = vpop.f32.mrf.mxu0
      %v1100 = vadd.f32 0.0, %v1099
      %1101 = vmatmul.f32.gmra.mxu0 %v987
      %v1102 = vpop.f32.mrf.mxu0
      %v1103 = vadd.f32 0.0, %v1102
      %1104 = vmatmul.f32.gmra.mxu0 %v990
      %v1105 = vpop.f32.mrf.mxu0
      %v1106 = vadd.f32 0.0, %v1105
      %1107 = vmatmul.f32.gmra.mxu0 %v993
      %v1108 = vpop.f32.mrf.mxu0
      %v1109 = vadd.f32 0.0, %v1108
      %1110 = vmatmul.f32.gmra.mxu0 %v996
      %v1111 = vpop.f32.mrf.mxu0
      %v1112 = vadd.f32 0.0, %v1111
      %1113 = vmatmul.f32.gmra.mxu0 %v999
      %v1114 = vpop.f32.mrf.mxu0
      %v1115 = vadd.f32 0.0, %v1114
      %1116 = vmatmul.f32.gmra.mxu0 %v1002
      %v1117 = vpop.f32.mrf.mxu0
      %v1118 = vadd.f32 0.0, %v1117
      %1119 = vmatmul.f32.gmra.mxu0 %v1005
      %v1120 = vpop.f32.mrf.mxu0
      %v1121 = vadd.f32 0.0, %v1120
      %1122 = vmatmul.f32.gmra.mxu0 %v1008
      %v1123 = vpop.f32.mrf.mxu0
      %v1124 = vadd.f32 0.0, %v1123
      %1125 = vmatmul.f32.gmra.mxu0 %v1011
      %v1126 = vpop.f32.mrf.mxu0
      %v1127 = vadd.f32 0.0, %v1126
      %1128 = vmatmul.f32.gmra.mxu0 %v1014
      %v1129 = vpop.f32.mrf.mxu0
      %v1130 = vadd.f32 0.0, %v1129
      %1131 = vmatmul.f32.gmra.mxu0 %v1017
      %v1132 = vpop.f32.mrf.mxu0
      %v1133 = vadd.f32 0.0, %v1132
      %1134 = vmatmul.f32.gmra.mxu0 %v1020
      %v1135 = vpop.f32.mrf.mxu0
      %v1136 = vadd.f32 0.0, %v1135
      %1137 = vmatmul.f32.gmra.mxu0 %v1023
      %v1138 = vpop.f32.mrf.mxu0
      %v1139 = vadd.f32 0.0, %v1138
      %1140 = vmatmul.f32.gmra.mxu0 %v1026
      %v1141 = vpop.f32.mrf.mxu0
      %v1142 = vadd.f32 0.0, %v1141
      %1143 = vdwg.mxu0
      %v1144 = vadd.f32 %v866, %v1049
      %v1145 = vadd.f32 %v867, %v1052
      %v1146 = vadd.f32 %v868, %v1055
      %v1147 = vadd.f32 %v869, %v1058
      %v1148 = vadd.f32 %v870, %v1061
      %v1149 = vadd.f32 %v871, %v1064
      %v1150 = vadd.f32 %v872, %v1067
      %v1151 = vadd.f32 %v873, %v1070
      %v1152 = vadd.f32 %v874, %v1073
      %v1153 = vadd.f32 %v875, %v1076
      %v1154 = vadd.f32 %v876, %v1079
      %v1155 = vadd.f32 %v877, %v1082
      %v1156 = vadd.f32 %v878, %v1085
      %v1157 = vadd.f32 %v879, %v1088
      %v1158 = vadd.f32 %v880, %v1091
      %v1159 = vadd.f32 %v881, %v1094
      %v1160 = vadd.f32 %v882, %v1097
      %v1161 = vadd.f32 %v883, %v1100
      %v1162 = vadd.f32 %v884, %v1103
      %v1163 = vadd.f32 %v885, %v1106
      %v1164 = vadd.f32 %v886, %v1109
      %v1165 = vadd.f32 %v887, %v1112
      %v1166 = vadd.f32 %v888, %v1115
      %v1167 = vadd.f32 %v889, %v1118
      %v1168 = vadd.f32 %v890, %v1121
      %v1169 = vadd.f32 %v891, %v1124
      %v1170 = vadd.f32 %v892, %v1127
      %v1171 = vadd.f32 %v893, %v1130
      %v1172 = vadd.f32 %v894, %v1133
      %v1173 = vadd.f32 %v895, %v1136
      %v1174 = vadd.f32 %v896, %v1139
      %v1175 = vadd.f32 %v897, %v1142
      %v1176 = vld [vmem:[%s240] sm:$0xff]
      %v1177 = vld [vmem:[%s240 + $0x8] sm:$0xff]
      %v1178 = vld [vmem:[%s240 + $0x18] sm:$0xff]
      %v1179 = vld [vmem:[%s240 + $0x20] sm:$0xff]
      %v1180 = vld [vmem:[%s240 + $0x30] sm:$0xff]
      %v1181 = vld [vmem:[%s240 + $0x38] sm:$0xff]
      %v1182 = vld [vmem:[%s240 + $0x48] sm:$0xff]
      %v1183 = vld [vmem:[%s240 + $0x50] sm:$0xff]
      %v1184 = vld [vmem:[%s240 + $0x60] sm:$0xff]
      %v1185 = vld [vmem:[%s240 + $0x68] sm:$0xff]
      %v1186 = vld [vmem:[%s240 + $0x78] sm:$0xff]
      %v1187 = vld [vmem:[%s240 + $0x80] sm:$0xff]
      %v1188 = vld [vmem:[%s240 + $0x90] sm:$0xff]
      %v1189 = vld [vmem:[%s240 + $0x98] sm:$0xff]
      %v1190 = vld [vmem:[%s240 + $0xa8] sm:$0xff]
      %v1191 = vld [vmem:[%s240 + $0xb0] sm:$0xff]
      %v1192 = vld [vmem:[%s240 + $0xc0] sm:$0xff]
      %v1193 = vld [vmem:[%s240 + $0xc8] sm:$0xff]
      %v1194 = vld [vmem:[%s240 + $0xd8] sm:$0xff]
      %v1195 = vld [vmem:[%s240 + $0xe0] sm:$0xff]
      %v1196 = vld [vmem:[%s240 + $0xf0] sm:$0xff]
      %v1197 = vld [vmem:[%s240 + $0xf8] sm:$0xff]
      %v1198 = vld [vmem:[%s240 + $0x108] sm:$0xff]
      %v1199 = vld [vmem:[%s240 + $0x110] sm:$0xff]
      %v1200 = vld [vmem:[%s240 + $0x120] sm:$0xff]
      %v1201 = vld [vmem:[%s240 + $0x128] sm:$0xff]
      %v1202 = vld [vmem:[%s240 + $0x138] sm:$0xff]
      %v1203 = vld [vmem:[%s240 + $0x140] sm:$0xff]
      %v1204 = vld [vmem:[%s240 + $0x150] sm:$0xff]
      %v1205 = vld [vmem:[%s240 + $0x158] sm:$0xff]
      %v1206 = vld [vmem:[%s240 + $0x168] sm:$0xff]
      %v1207 = vld [vmem:[%s240 + $0x170] sm:$0xff]
      %s1208 = scalar_lea.vmem %s1, 12
      %v1209 = vld [vmem:[%s1208] sm:$0xf]
      %v1211 = vsel %vm225, %v1176, 0
      %v1214 = vsel %vm225, %v1177, 0
      %v1217 = vsel %vm225, %v1178, 0
      %v1220 = vsel %vm225, %v1179, 0
      %v1223 = vsel %vm225, %v1180, 0
      %v1226 = vsel %vm225, %v1181, 0
      %v1229 = vsel %vm225, %v1182, 0
      %v1232 = vsel %vm225, %v1183, 0
      %v1235 = vsel %vm225, %v1184, 0
      %v1238 = vsel %vm225, %v1185, 0
      %v1241 = vsel %vm225, %v1186, 0
      %v1244 = vsel %vm225, %v1187, 0
      %v1247 = vsel %vm225, %v1188, 0
      %v1250 = vsel %vm225, %v1189, 0
      %v1253 = vsel %vm225, %v1190, 0
      %v1256 = vsel %vm225, %v1191, 0
      %v1259 = vsel %vm225, %v1192, 0
      %v1262 = vsel %vm225, %v1193, 0
      %v1265 = vsel %vm225, %v1194, 0
      %v1268 = vsel %vm225, %v1195, 0
      %v1271 = vsel %vm225, %v1196, 0
      %v1274 = vsel %vm225, %v1197, 0
      %v1277 = vsel %vm225, %v1198, 0
      %v1280 = vsel %vm225, %v1199, 0
      %v1283 = vsel %vm225, %v1200, 0
      %v1286 = vsel %vm225, %v1201, 0
      %v1289 = vsel %vm225, %v1202, 0
      %v1292 = vsel %vm225, %v1203, 0
      %v1295 = vsel %vm225, %v1204, 0
      %v1298 = vsel %vm225, %v1205, 0
      %v1301 = vsel %vm225, %v1206, 0
      %v1304 = vsel %vm225, %v1207, 0
      %v1307 = vsel %vm471, %v1209, 0
      %1309 = vmatpush.msra.mxu0 0.0
      %1310 = vmatpush.msra.mxu0 0.0
      %1311 = vmatpush.msra.mxu0 0.0
      %1312 = vmatpush.msra.mxu0 0.0
      %1313 = vmatpush.msra.mxu0 0.0
      %1314 = vmatpush.msra.mxu0 0.0
      %1315 = vmatpush.msra.mxu0 0.0
      %1316 = vmatpush.msra.mxu0 0.0
      %1317 = vmatpush.msra.mxu0 0.0
      %1318 = vmatpush.msra.mxu0 0.0
      %1319 = vmatpush.msra.mxu0 0.0
      %1320 = vmatpush.msra.mxu0 0.0
      %1321 = vmatpush.msra.mxu0 0.0
      %1322 = vmatpush.msra.mxu0 0.0
      %1323 = vmatpush.msra.mxu0 0.0
      %1324 = vmatpush.msra.mxu0 %v1307
      %1325 = vmatmul.f32.gmra.mxu0 %v1211
      %v1326 = vpop.f32.mrf.mxu0
      %v1327 = vadd.f32 0.0, %v1326
      %1328 = vmatmul.f32.gmra.mxu0 %v1214
      %v1329 = vpop.f32.mrf.mxu0
      %v1330 = vadd.f32 0.0, %v1329
      %1331 = vmatmul.f32.gmra.mxu0 %v1217
      %v1332 = vpop.f32.mrf.mxu0
      %v1333 = vadd.f32 0.0, %v1332
      %1334 = vmatmul.f32.gmra.mxu0 %v1220
      %v1335 = vpop.f32.mrf.mxu0
      %v1336 = vadd.f32 0.0, %v1335
      %1337 = vmatmul.f32.gmra.mxu0 %v1223
      %v1338 = vpop.f32.mrf.mxu0
      %v1339 = vadd.f32 0.0, %v1338
      %1340 = vmatmul.f32.gmra.mxu0 %v1226
      %v1341 = vpop.f32.mrf.mxu0
      %v1342 = vadd.f32 0.0, %v1341
      %1343 = vmatmul.f32.gmra.mxu0 %v1229
      %v1344 = vpop.f32.mrf.mxu0
      %v1345 = vadd.f32 0.0, %v1344
      %1346 = vmatmul.f32.gmra.mxu0 %v1232
      %v1347 = vpop.f32.mrf.mxu0
      %v1348 = vadd.f32 0.0, %v1347
      %1349 = vmatmul.f32.gmra.mxu0 %v1235
      %v1350 = vpop.f32.mrf.mxu0
      %v1351 = vadd.f32 0.0, %v1350
      %1352 = vmatmul.f32.gmra.mxu0 %v1238
      %v1353 = vpop.f32.mrf.mxu0
      %v1354 = vadd.f32 0.0, %v1353
      %1355 = vmatmul.f32.gmra.mxu0 %v1241
      %v1356 = vpop.f32.mrf.mxu0
      %v1357 = vadd.f32 0.0, %v1356
      %1358 = vmatmul.f32.gmra.mxu0 %v1244
      %v1359 = vpop.f32.mrf.mxu0
      %v1360 = vadd.f32 0.0, %v1359
      %1361 = vmatmul.f32.gmra.mxu0 %v1247
      %v1362 = vpop.f32.mrf.mxu0
      %v1363 = vadd.f32 0.0, %v1362
      %1364 = vmatmul.f32.gmra.mxu0 %v1250
      %v1365 = vpop.f32.mrf.mxu0
      %v1366 = vadd.f32 0.0, %v1365
      %1367 = vmatmul.f32.gmra.mxu0 %v1253
      %v1368 = vpop.f32.mrf.mxu0
      %v1369 = vadd.f32 0.0, %v1368
      %1370 = vmatmul.f32.gmra.mxu0 %v1256
      %v1371 = vpop.f32.mrf.mxu0
      %v1372 = vadd.f32 0.0, %v1371
      %1373 = vmatmul.f32.gmra.mxu0 %v1259
      %v1374 = vpop.f32.mrf.mxu0
      %v1375 = vadd.f32 0.0, %v1374
      %1376 = vmatmul.f32.gmra.mxu0 %v1262
      %v1377 = vpop.f32.mrf.mxu0
      %v1378 = vadd.f32 0.0, %v1377
      %1379 = vmatmul.f32.gmra.mxu0 %v1265
      %v1380 = vpop.f32.mrf.mxu0
      %v1381 = vadd.f32 0.0, %v1380
      %1382 = vmatmul.f32.gmra.mxu0 %v1268
      %v1383 = vpop.f32.mrf.mxu0
      %v1384 = vadd.f32 0.0, %v1383
      %1385 = vmatmul.f32.gmra.mxu0 %v1271
      %v1386 = vpop.f32.mrf.mxu0
      %v1387 = vadd.f32 0.0, %v1386
      %1388 = vmatmul.f32.gmra.mxu0 %v1274
      %v1389 = vpop.f32.mrf.mxu0
      %v1390 = vadd.f32 0.0, %v1389
      %1391 = vmatmul.f32.gmra.mxu0 %v1277
      %v1392 = vpop.f32.mrf.mxu0
      %v1393 = vadd.f32 0.0, %v1392
      %1394 = vmatmul.f32.gmra.mxu0 %v1280
      %v1395 = vpop.f32.mrf.mxu0
      %v1396 = vadd.f32 0.0, %v1395
      %1397 = vmatmul.f32.gmra.mxu0 %v1283
      %v1398 = vpop.f32.mrf.mxu0
      %v1399 = vadd.f32 0.0, %v1398
      %1400 = vmatmul.f32.gmra.mxu0 %v1286
      %v1401 = vpop.f32.mrf.mxu0
      %v1402 = vadd.f32 0.0, %v1401
      %1403 = vmatmul.f32.gmra.mxu0 %v1289
      %v1404 = vpop.f32.mrf.mxu0
      %v1405 = vadd.f32 0.0, %v1404
      %1406 = vmatmul.f32.gmra.mxu0 %v1292
      %v1407 = vpop.f32.mrf.mxu0
      %v1408 = vadd.f32 0.0, %v1407
      %1409 = vmatmul.f32.gmra.mxu0 %v1295
      %v1410 = vpop.f32.mrf.mxu0
      %v1411 = vadd.f32 0.0, %v1410
      %1412 = vmatmul.f32.gmra.mxu0 %v1298
      %v1413 = vpop.f32.mrf.mxu0
      %v1414 = vadd.f32 0.0, %v1413
      %1415 = vmatmul.f32.gmra.mxu0 %v1301
      %v1416 = vpop.f32.mrf.mxu0
      %v1417 = vadd.f32 0.0, %v1416
      %1418 = vmatmul.f32.gmra.mxu0 %v1304
      %v1419 = vpop.f32.mrf.mxu0
      %v1420 = vadd.f32 0.0, %v1419
      %1421 = vdwg.mxu0
      %v1422 = vadd.f32 %v1144, %v1327
      %v1423 = vadd.f32 %v1145, %v1330
      %v1424 = vadd.f32 %v1146, %v1333
      %v1425 = vadd.f32 %v1147, %v1336
      %v1426 = vadd.f32 %v1148, %v1339
      %v1427 = vadd.f32 %v1149, %v1342
      %v1428 = vadd.f32 %v1150, %v1345
      %v1429 = vadd.f32 %v1151, %v1348
      %v1430 = vadd.f32 %v1152, %v1351
      %v1431 = vadd.f32 %v1153, %v1354
      %v1432 = vadd.f32 %v1154, %v1357
      %v1433 = vadd.f32 %v1155, %v1360
      %v1434 = vadd.f32 %v1156, %v1363
      %v1435 = vadd.f32 %v1157, %v1366
      %v1436 = vadd.f32 %v1158, %v1369
      %v1437 = vadd.f32 %v1159, %v1372
      %v1438 = vadd.f32 %v1160, %v1375
      %v1439 = vadd.f32 %v1161, %v1378
      %v1440 = vadd.f32 %v1162, %v1381
      %v1441 = vadd.f32 %v1163, %v1384
      %v1442 = vadd.f32 %v1164, %v1387
      %v1443 = vadd.f32 %v1165, %v1390
      %v1444 = vadd.f32 %v1166, %v1393
      %v1445 = vadd.f32 %v1167, %v1396
      %v1446 = vadd.f32 %v1168, %v1399
      %v1447 = vadd.f32 %v1169, %v1402
      %v1448 = vadd.f32 %v1170, %v1405
      %v1449 = vadd.f32 %v1171, %v1408
      %v1450 = vadd.f32 %v1172, %v1411
      %v1451 = vadd.f32 %v1173, %v1414
      %v1452 = vadd.f32 %v1174, %v1417
      %v1453 = vadd.f32 %v1175, %v1420
      %v1454 = vld [vmem:[%s240 + $0x2] sm:$0xff]
      %v1455 = vld [vmem:[%s240 + $0xa] sm:$0xff]
      %v1456 = vld [vmem:[%s240 + $0x1a] sm:$0xff]
      %v1457 = vld [vmem:[%s240 + $0x22] sm:$0xff]
      %v1458 = vld [vmem:[%s240 + $0x32] sm:$0xff]
      %v1459 = vld [vmem:[%s240 + $0x3a] sm:$0xff]
      %v1460 = vld [vmem:[%s240 + $0x4a] sm:$0xff]
      %v1461 = vld [vmem:[%s240 + $0x52] sm:$0xff]
      %v1462 = vld [vmem:[%s240 + $0x62] sm:$0xff]
      %v1463 = vld [vmem:[%s240 + $0x6a] sm:$0xff]
      %v1464 = vld [vmem:[%s240 + $0x7a] sm:$0xff]
      %v1465 = vld [vmem:[%s240 + $0x82] sm:$0xff]
      %v1466 = vld [vmem:[%s240 + $0x92] sm:$0xff]
      %v1467 = vld [vmem:[%s240 + $0x9a] sm:$0xff]
      %v1468 = vld [vmem:[%s240 + $0xaa] sm:$0xff]
      %v1469 = vld [vmem:[%s240 + $0xb2] sm:$0xff]
      %v1470 = vld [vmem:[%s240 + $0xc2] sm:$0xff]
      %v1471 = vld [vmem:[%s240 + $0xca] sm:$0xff]
      %v1472 = vld [vmem:[%s240 + $0xda] sm:$0xff]
      %v1473 = vld [vmem:[%s240 + $0xe2] sm:$0xff]
      %v1474 = vld [vmem:[%s240 + $0xf2] sm:$0xff]
      %v1475 = vld [vmem:[%s240 + $0xfa] sm:$0xff]
      %v1476 = vld [vmem:[%s240 + $0x10a] sm:$0xff]
      %v1477 = vld [vmem:[%s240 + $0x112] sm:$0xff]
      %v1478 = vld [vmem:[%s240 + $0x122] sm:$0xff]
      %v1479 = vld [vmem:[%s240 + $0x12a] sm:$0xff]
      %v1480 = vld [vmem:[%s240 + $0x13a] sm:$0xff]
      %v1481 = vld [vmem:[%s240 + $0x142] sm:$0xff]
      %v1482 = vld [vmem:[%s240 + $0x152] sm:$0xff]
      %v1483 = vld [vmem:[%s240 + $0x15a] sm:$0xff]
      %v1484 = vld [vmem:[%s240 + $0x16a] sm:$0xff]
      %v1485 = vld [vmem:[%s240 + $0x172] sm:$0xff]
      %s1486 = scalar_lea.vmem %s1, 16
      %v1487 = vld [vmem:[%s1486] sm:$0xf]
      %v1489 = vsel %vm225, %v1454, 0
      %v1492 = vsel %vm225, %v1455, 0
      %v1495 = vsel %vm225, %v1456, 0
      %v1498 = vsel %vm225, %v1457, 0
      %v1501 = vsel %vm225, %v1458, 0
      %v1504 = vsel %vm225, %v1459, 0
      %v1507 = vsel %vm225, %v1460, 0
      %v1510 = vsel %vm225, %v1461, 0
      %v1513 = vsel %vm225, %v1462, 0
      %v1516 = vsel %vm225, %v1463, 0
      %v1519 = vsel %vm225, %v1464, 0
      %v1522 = vsel %vm225, %v1465, 0
      %v1525 = vsel %vm225, %v1466, 0
      %v1528 = vsel %vm225, %v1467, 0
      %v1531 = vsel %vm225, %v1468, 0
      %v1534 = vsel %vm225, %v1469, 0
      %v1537 = vsel %vm225, %v1470, 0
      %v1540 = vsel %vm225, %v1471, 0
      %v1543 = vsel %vm225, %v1472, 0
      %v1546 = vsel %vm225, %v1473, 0
      %v1549 = vsel %vm225, %v1474, 0
      %v1552 = vsel %vm225, %v1475, 0
      %v1555 = vsel %vm225, %v1476, 0
      %v1558 = vsel %vm225, %v1477, 0
      %v1561 = vsel %vm225, %v1478, 0
      %v1564 = vsel %vm225, %v1479, 0
      %v1567 = vsel %vm225, %v1480, 0
      %v1570 = vsel %vm225, %v1481, 0
      %v1573 = vsel %vm225, %v1482, 0
      %v1576 = vsel %vm225, %v1483, 0
      %v1579 = vsel %vm225, %v1484, 0
      %v1582 = vsel %vm225, %v1485, 0
      %v1585 = vsel %vm471, %v1487, 0
      %1587 = vmatpush.msra.mxu0 0.0
      %1588 = vmatpush.msra.mxu0 0.0
      %1589 = vmatpush.msra.mxu0 0.0
      %1590 = vmatpush.msra.mxu0 0.0
      %1591 = vmatpush.msra.mxu0 0.0
      %1592 = vmatpush.msra.mxu0 0.0
      %1593 = vmatpush.msra.mxu0 0.0
      %1594 = vmatpush.msra.mxu0 0.0
      %1595 = vmatpush.msra.mxu0 0.0
      %1596 = vmatpush.msra.mxu0 0.0
      %1597 = vmatpush.msra.mxu0 0.0
      %1598 = vmatpush.msra.mxu0 0.0
      %1599 = vmatpush.msra.mxu0 0.0
      %1600 = vmatpush.msra.mxu0 0.0
      %1601 = vmatpush.msra.mxu0 0.0
      %1602 = vmatpush.msra.mxu0 %v1585
      %1603 = vmatmul.f32.gmra.mxu0 %v1489
      %v1604 = vpop.f32.mrf.mxu0
      %v1605 = vadd.f32 0.0, %v1604
      %1606 = vmatmul.f32.gmra.mxu0 %v1492
      %v1607 = vpop.f32.mrf.mxu0
      %v1608 = vadd.f32 0.0, %v1607
      %1609 = vmatmul.f32.gmra.mxu0 %v1495
      %v1610 = vpop.f32.mrf.mxu0
      %v1611 = vadd.f32 0.0, %v1610
      %1612 = vmatmul.f32.gmra.mxu0 %v1498
      %v1613 = vpop.f32.mrf.mxu0
      %v1614 = vadd.f32 0.0, %v1613
      %1615 = vmatmul.f32.gmra.mxu0 %v1501
      %v1616 = vpop.f32.mrf.mxu0
      %v1617 = vadd.f32 0.0, %v1616
      %1618 = vmatmul.f32.gmra.mxu0 %v1504
      %v1619 = vpop.f32.mrf.mxu0
      %v1620 = vadd.f32 0.0, %v1619
      %1621 = vmatmul.f32.gmra.mxu0 %v1507
      %v1622 = vpop.f32.mrf.mxu0
      %v1623 = vadd.f32 0.0, %v1622
      %1624 = vmatmul.f32.gmra.mxu0 %v1510
      %v1625 = vpop.f32.mrf.mxu0
      %v1626 = vadd.f32 0.0, %v1625
      %1627 = vmatmul.f32.gmra.mxu0 %v1513
      %v1628 = vpop.f32.mrf.mxu0
      %v1629 = vadd.f32 0.0, %v1628
      %1630 = vmatmul.f32.gmra.mxu0 %v1516
      %v1631 = vpop.f32.mrf.mxu0
      %v1632 = vadd.f32 0.0, %v1631
      %1633 = vmatmul.f32.gmra.mxu0 %v1519
      %v1634 = vpop.f32.mrf.mxu0
      %v1635 = vadd.f32 0.0, %v1634
      %1636 = vmatmul.f32.gmra.mxu0 %v1522
      %v1637 = vpop.f32.mrf.mxu0
      %v1638 = vadd.f32 0.0, %v1637
      %1639 = vmatmul.f32.gmra.mxu0 %v1525
      %v1640 = vpop.f32.mrf.mxu0
      %v1641 = vadd.f32 0.0, %v1640
      %1642 = vmatmul.f32.gmra.mxu0 %v1528
      %v1643 = vpop.f32.mrf.mxu0
      %v1644 = vadd.f32 0.0, %v1643
      %1645 = vmatmul.f32.gmra.mxu0 %v1531
      %v1646 = vpop.f32.mrf.mxu0
      %v1647 = vadd.f32 0.0, %v1646
      %1648 = vmatmul.f32.gmra.mxu0 %v1534
      %v1649 = vpop.f32.mrf.mxu0
      %v1650 = vadd.f32 0.0, %v1649
      %1651 = vmatmul.f32.gmra.mxu0 %v1537
      %v1652 = vpop.f32.mrf.mxu0
      %v1653 = vadd.f32 0.0, %v1652
      %1654 = vmatmul.f32.gmra.mxu0 %v1540
      %v1655 = vpop.f32.mrf.mxu0
      %v1656 = vadd.f32 0.0, %v1655
      %1657 = vmatmul.f32.gmra.mxu0 %v1543
      %v1658 = vpop.f32.mrf.mxu0
      %v1659 = vadd.f32 0.0, %v1658
      %1660 = vmatmul.f32.gmra.mxu0 %v1546
      %v1661 = vpop.f32.mrf.mxu0
      %v1662 = vadd.f32 0.0, %v1661
      %1663 = vmatmul.f32.gmra.mxu0 %v1549
      %v1664 = vpop.f32.mrf.mxu0
      %v1665 = vadd.f32 0.0, %v1664
      %1666 = vmatmul.f32.gmra.mxu0 %v1552
      %v1667 = vpop.f32.mrf.mxu0
      %v1668 = vadd.f32 0.0, %v1667
      %1669 = vmatmul.f32.gmra.mxu0 %v1555
      %v1670 = vpop.f32.mrf.mxu0
      %v1671 = vadd.f32 0.0, %v1670
      %1672 = vmatmul.f32.gmra.mxu0 %v1558
      %v1673 = vpop.f32.mrf.mxu0
      %v1674 = vadd.f32 0.0, %v1673
      %1675 = vmatmul.f32.gmra.mxu0 %v1561
      %v1676 = vpop.f32.mrf.mxu0
      %v1677 = vadd.f32 0.0, %v1676
      %1678 = vmatmul.f32.gmra.mxu0 %v1564
      %v1679 = vpop.f32.mrf.mxu0
      %v1680 = vadd.f32 0.0, %v1679
      %1681 = vmatmul.f32.gmra.mxu0 %v1567
      %v1682 = vpop.f32.mrf.mxu0
      %v1683 = vadd.f32 0.0, %v1682
      %1684 = vmatmul.f32.gmra.mxu0 %v1570
      %v1685 = vpop.f32.mrf.mxu0
      %v1686 = vadd.f32 0.0, %v1685
      %1687 = vmatmul.f32.gmra.mxu0 %v1573
      %v1688 = vpop.f32.mrf.mxu0
      %v1689 = vadd.f32 0.0, %v1688
      %1690 = vmatmul.f32.gmra.mxu0 %v1576
      %v1691 = vpop.f32.mrf.mxu0
      %v1692 = vadd.f32 0.0, %v1691
      %1693 = vmatmul.f32.gmra.mxu0 %v1579
      %v1694 = vpop.f32.mrf.mxu0
      %v1695 = vadd.f32 0.0, %v1694
      %1696 = vmatmul.f32.gmra.mxu0 %v1582
      %v1697 = vpop.f32.mrf.mxu0
      %v1698 = vadd.f32 0.0, %v1697
      %1699 = vdwg.mxu0
      %v1700 = vadd.f32 %v1422, %v1605
      %v1701 = vadd.f32 %v1423, %v1608
      %v1702 = vadd.f32 %v1424, %v1611
      %v1703 = vadd.f32 %v1425, %v1614
      %v1704 = vadd.f32 %v1426, %v1617
      %v1705 = vadd.f32 %v1427, %v1620
      %v1706 = vadd.f32 %v1428, %v1623
      %v1707 = vadd.f32 %v1429, %v1626
      %v1708 = vadd.f32 %v1430, %v1629
      %v1709 = vadd.f32 %v1431, %v1632
      %v1710 = vadd.f32 %v1432, %v1635
      %v1711 = vadd.f32 %v1433, %v1638
      %v1712 = vadd.f32 %v1434, %v1641
      %v1713 = vadd.f32 %v1435, %v1644
      %v1714 = vadd.f32 %v1436, %v1647
      %v1715 = vadd.f32 %v1437, %v1650
      %v1716 = vadd.f32 %v1438, %v1653
      %v1717 = vadd.f32 %v1439, %v1656
      %v1718 = vadd.f32 %v1440, %v1659
      %v1719 = vadd.f32 %v1441, %v1662
      %v1720 = vadd.f32 %v1442, %v1665
      %v1721 = vadd.f32 %v1443, %v1668
      %v1722 = vadd.f32 %v1444, %v1671
      %v1723 = vadd.f32 %v1445, %v1674
      %v1724 = vadd.f32 %v1446, %v1677
      %v1725 = vadd.f32 %v1447, %v1680
      %v1726 = vadd.f32 %v1448, %v1683
      %v1727 = vadd.f32 %v1449, %v1686
      %v1728 = vadd.f32 %v1450, %v1689
      %v1729 = vadd.f32 %v1451, %v1692
      %v1730 = vadd.f32 %v1452, %v1695
      %v1731 = vadd.f32 %v1453, %v1698
      %v1732 = vld [vmem:[%s240 + $0x4] sm:$0xff]
      %v1733 = vld [vmem:[%s240 + $0xc] sm:$0xff]
      %v1734 = vld [vmem:[%s240 + $0x1c] sm:$0xff]
      %v1735 = vld [vmem:[%s240 + $0x24] sm:$0xff]
      %v1736 = vld [vmem:[%s240 + $0x34] sm:$0xff]
      %v1737 = vld [vmem:[%s240 + $0x3c] sm:$0xff]
      %v1738 = vld [vmem:[%s240 + $0x4c] sm:$0xff]
      %v1739 = vld [vmem:[%s240 + $0x54] sm:$0xff]
      %v1740 = vld [vmem:[%s240 + $0x64] sm:$0xff]
      %v1741 = vld [vmem:[%s240 + $0x6c] sm:$0xff]
      %v1742 = vld [vmem:[%s240 + $0x7c] sm:$0xff]
      %v1743 = vld [vmem:[%s240 + $0x84] sm:$0xff]
      %v1744 = vld [vmem:[%s240 + $0x94] sm:$0xff]
      %v1745 = vld [vmem:[%s240 + $0x9c] sm:$0xff]
      %v1746 = vld [vmem:[%s240 + $0xac] sm:$0xff]
      %v1747 = vld [vmem:[%s240 + $0xb4] sm:$0xff]
      %v1748 = vld [vmem:[%s240 + $0xc4] sm:$0xff]
      %v1749 = vld [vmem:[%s240 + $0xcc] sm:$0xff]
      %v1750 = vld [vmem:[%s240 + $0xdc] sm:$0xff]
      %v1751 = vld [vmem:[%s240 + $0xe4] sm:$0xff]
      %v1752 = vld [vmem:[%s240 + $0xf4] sm:$0xff]
      %v1753 = vld [vmem:[%s240 + $0xfc] sm:$0xff]
      %v1754 = vld [vmem:[%s240 + $0x10c] sm:$0xff]
      %v1755 = vld [vmem:[%s240 + $0x114] sm:$0xff]
      %v1756 = vld [vmem:[%s240 + $0x124] sm:$0xff]
      %v1757 = vld [vmem:[%s240 + $0x12c] sm:$0xff]
      %v1758 = vld [vmem:[%s240 + $0x13c] sm:$0xff]
      %v1759 = vld [vmem:[%s240 + $0x144] sm:$0xff]
      %v1760 = vld [vmem:[%s240 + $0x154] sm:$0xff]
      %v1761 = vld [vmem:[%s240 + $0x15c] sm:$0xff]
      %v1762 = vld [vmem:[%s240 + $0x16c] sm:$0xff]
      %v1763 = vld [vmem:[%s240 + $0x174] sm:$0xff]
      %s1764 = scalar_lea.vmem %s1, 20
      %v1765 = vld [vmem:[%s1764] sm:$0xf]
      %v1767 = vsel %vm225, %v1732, 0
      %v1770 = vsel %vm225, %v1733, 0
      %v1773 = vsel %vm225, %v1734, 0
      %v1776 = vsel %vm225, %v1735, 0
      %v1779 = vsel %vm225, %v1736, 0
      %v1782 = vsel %vm225, %v1737, 0
      %v1785 = vsel %vm225, %v1738, 0
      %v1788 = vsel %vm225, %v1739, 0
      %v1791 = vsel %vm225, %v1740, 0
      %v1794 = vsel %vm225, %v1741, 0
      %v1797 = vsel %vm225, %v1742, 0
      %v1800 = vsel %vm225, %v1743, 0
      %v1803 = vsel %vm225, %v1744, 0
      %v1806 = vsel %vm225, %v1745, 0
      %v1809 = vsel %vm225, %v1746, 0
      %v1812 = vsel %vm225, %v1747, 0
      %v1815 = vsel %vm225, %v1748, 0
      %v1818 = vsel %vm225, %v1749, 0
      %v1821 = vsel %vm225, %v1750, 0
      %v1824 = vsel %vm225, %v1751, 0
      %v1827 = vsel %vm225, %v1752, 0
      %v1830 = vsel %vm225, %v1753, 0
      %v1833 = vsel %vm225, %v1754, 0
      %v1836 = vsel %vm225, %v1755, 0
      %v1839 = vsel %vm225, %v1756, 0
      %v1842 = vsel %vm225, %v1757, 0
      %v1845 = vsel %vm225, %v1758, 0
      %v1848 = vsel %vm225, %v1759, 0
      %v1851 = vsel %vm225, %v1760, 0
      %v1854 = vsel %vm225, %v1761, 0
      %v1857 = vsel %vm225, %v1762, 0
      %v1860 = vsel %vm225, %v1763, 0
      %v1863 = vsel %vm471, %v1765, 0
      %1865 = vmatpush.msra.mxu0 0.0
      %1866 = vmatpush.msra.mxu0 0.0
      %1867 = vmatpush.msra.mxu0 0.0
      %1868 = vmatpush.msra.mxu0 0.0
      %1869 = vmatpush.msra.mxu0 0.0
      %1870 = vmatpush.msra.mxu0 0.0
      %1871 = vmatpush.msra.mxu0 0.0
      %1872 = vmatpush.msra.mxu0 0.0
      %1873 = vmatpush.msra.mxu0 0.0
      %1874 = vmatpush.msra.mxu0 0.0
      %1875 = vmatpush.msra.mxu0 0.0
      %1876 = vmatpush.msra.mxu0 0.0
      %1877 = vmatpush.msra.mxu0 0.0
      %1878 = vmatpush.msra.mxu0 0.0
      %1879 = vmatpush.msra.mxu0 0.0
      %1880 = vmatpush.msra.mxu0 %v1863
      %1881 = vmatmul.f32.gmra.mxu0 %v1767
      %v1882 = vpop.f32.mrf.mxu0
      %v1883 = vadd.f32 0.0, %v1882
      %1884 = vmatmul.f32.gmra.mxu0 %v1770
      %v1885 = vpop.f32.mrf.mxu0
      %v1886 = vadd.f32 0.0, %v1885
      %1887 = vmatmul.f32.gmra.mxu0 %v1773
      %v1888 = vpop.f32.mrf.mxu0
      %v1889 = vadd.f32 0.0, %v1888
      %1890 = vmatmul.f32.gmra.mxu0 %v1776
      %v1891 = vpop.f32.mrf.mxu0
      %v1892 = vadd.f32 0.0, %v1891
      %1893 = vmatmul.f32.gmra.mxu0 %v1779
      %v1894 = vpop.f32.mrf.mxu0
      %v1895 = vadd.f32 0.0, %v1894
      %1896 = vmatmul.f32.gmra.mxu0 %v1782
      %v1897 = vpop.f32.mrf.mxu0
      %v1898 = vadd.f32 0.0, %v1897
      %1899 = vmatmul.f32.gmra.mxu0 %v1785
      %v1900 = vpop.f32.mrf.mxu0
      %v1901 = vadd.f32 0.0, %v1900
      %1902 = vmatmul.f32.gmra.mxu0 %v1788
      %v1903 = vpop.f32.mrf.mxu0
      %v1904 = vadd.f32 0.0, %v1903
      %1905 = vmatmul.f32.gmra.mxu0 %v1791
      %v1906 = vpop.f32.mrf.mxu0
      %v1907 = vadd.f32 0.0, %v1906
      %1908 = vmatmul.f32.gmra.mxu0 %v1794
      %v1909 = vpop.f32.mrf.mxu0
      %v1910 = vadd.f32 0.0, %v1909
      %1911 = vmatmul.f32.gmra.mxu0 %v1797
      %v1912 = vpop.f32.mrf.mxu0
      %v1913 = vadd.f32 0.0, %v1912
      %1914 = vmatmul.f32.gmra.mxu0 %v1800
      %v1915 = vpop.f32.mrf.mxu0
      %v1916 = vadd.f32 0.0, %v1915
      %1917 = vmatmul.f32.gmra.mxu0 %v1803
      %v1918 = vpop.f32.mrf.mxu0
      %v1919 = vadd.f32 0.0, %v1918
      %1920 = vmatmul.f32.gmra.mxu0 %v1806
      %v1921 = vpop.f32.mrf.mxu0
      %v1922 = vadd.f32 0.0, %v1921
      %1923 = vmatmul.f32.gmra.mxu0 %v1809
      %v1924 = vpop.f32.mrf.mxu0
      %v1925 = vadd.f32 0.0, %v1924
      %1926 = vmatmul.f32.gmra.mxu0 %v1812
      %v1927 = vpop.f32.mrf.mxu0
      %v1928 = vadd.f32 0.0, %v1927
      %1929 = vmatmul.f32.gmra.mxu0 %v1815
      %v1930 = vpop.f32.mrf.mxu0
      %v1931 = vadd.f32 0.0, %v1930
      %1932 = vmatmul.f32.gmra.mxu0 %v1818
      %v1933 = vpop.f32.mrf.mxu0
      %v1934 = vadd.f32 0.0, %v1933
      %1935 = vmatmul.f32.gmra.mxu0 %v1821
      %v1936 = vpop.f32.mrf.mxu0
      %v1937 = vadd.f32 0.0, %v1936
      %1938 = vmatmul.f32.gmra.mxu0 %v1824
      %v1939 = vpop.f32.mrf.mxu0
      %v1940 = vadd.f32 0.0, %v1939
      %1941 = vmatmul.f32.gmra.mxu0 %v1827
      %v1942 = vpop.f32.mrf.mxu0
      %v1943 = vadd.f32 0.0, %v1942
      %1944 = vmatmul.f32.gmra.mxu0 %v1830
      %v1945 = vpop.f32.mrf.mxu0
      %v1946 = vadd.f32 0.0, %v1945
      %1947 = vmatmul.f32.gmra.mxu0 %v1833
      %v1948 = vpop.f32.mrf.mxu0
      %v1949 = vadd.f32 0.0, %v1948
      %1950 = vmatmul.f32.gmra.mxu0 %v1836
      %v1951 = vpop.f32.mrf.mxu0
      %v1952 = vadd.f32 0.0, %v1951
      %1953 = vmatmul.f32.gmra.mxu0 %v1839
      %v1954 = vpop.f32.mrf.mxu0
      %v1955 = vadd.f32 0.0, %v1954
      %1956 = vmatmul.f32.gmra.mxu0 %v1842
      %v1957 = vpop.f32.mrf.mxu0
      %v1958 = vadd.f32 0.0, %v1957
      %1959 = vmatmul.f32.gmra.mxu0 %v1845
      %v1960 = vpop.f32.mrf.mxu0
      %v1961 = vadd.f32 0.0, %v1960
      %1962 = vmatmul.f32.gmra.mxu0 %v1848
      %v1963 = vpop.f32.mrf.mxu0
      %v1964 = vadd.f32 0.0, %v1963
      %1965 = vmatmul.f32.gmra.mxu0 %v1851
      %v1966 = vpop.f32.mrf.mxu0
      %v1967 = vadd.f32 0.0, %v1966
      %1968 = vmatmul.f32.gmra.mxu0 %v1854
      %v1969 = vpop.f32.mrf.mxu0
      %v1970 = vadd.f32 0.0, %v1969
      %1971 = vmatmul.f32.gmra.mxu0 %v1857
      %v1972 = vpop.f32.mrf.mxu0
      %v1973 = vadd.f32 0.0, %v1972
      %1974 = vmatmul.f32.gmra.mxu0 %v1860
      %v1975 = vpop.f32.mrf.mxu0
      %v1976 = vadd.f32 0.0, %v1975
      %1977 = vdwg.mxu0
      %v1978 = vadd.f32 %v1700, %v1883
      %v1979 = vadd.f32 %v1701, %v1886
      %v1980 = vadd.f32 %v1702, %v1889
      %v1981 = vadd.f32 %v1703, %v1892
      %v1982 = vadd.f32 %v1704, %v1895
      %v1983 = vadd.f32 %v1705, %v1898
      %v1984 = vadd.f32 %v1706, %v1901
      %v1985 = vadd.f32 %v1707, %v1904
      %v1986 = vadd.f32 %v1708, %v1907
      %v1987 = vadd.f32 %v1709, %v1910
      %v1988 = vadd.f32 %v1710, %v1913
      %v1989 = vadd.f32 %v1711, %v1916
      %v1990 = vadd.f32 %v1712, %v1919
      %v1991 = vadd.f32 %v1713, %v1922
      %v1992 = vadd.f32 %v1714, %v1925
      %v1993 = vadd.f32 %v1715, %v1928
      %v1994 = vadd.f32 %v1716, %v1931
      %v1995 = vadd.f32 %v1717, %v1934
      %v1996 = vadd.f32 %v1718, %v1937
      %v1997 = vadd.f32 %v1719, %v1940
      %v1998 = vadd.f32 %v1720, %v1943
      %v1999 = vadd.f32 %v1721, %v1946
      %v2000 = vadd.f32 %v1722, %v1949
      %v2001 = vadd.f32 %v1723, %v1952
      %v2002 = vadd.f32 %v1724, %v1955
      %v2003 = vadd.f32 %v1725, %v1958
      %v2004 = vadd.f32 %v1726, %v1961
      %v2005 = vadd.f32 %v1727, %v1964
      %v2006 = vadd.f32 %v1728, %v1967
      %v2007 = vadd.f32 %v1729, %v1970
      %v2008 = vadd.f32 %v1730, %v1973
      %v2009 = vadd.f32 %v1731, %v1976
      %s2010 = scalar_lea.vmem [#allocation2], 96
      %v2011 = vld [vmem:[%s2010] sm:$0xff]
      %v2012 = vld [vmem:[%s2010 + $0x8] sm:$0xff]
      %v2013 = vld [vmem:[%s2010 + $0x18] sm:$0xff]
      %v2014 = vld [vmem:[%s2010 + $0x20] sm:$0xff]
      %v2015 = vld [vmem:[%s2010 + $0x30] sm:$0xff]
      %v2016 = vld [vmem:[%s2010 + $0x38] sm:$0xff]
      %v2017 = vld [vmem:[%s2010 + $0x48] sm:$0xff]
      %v2018 = vld [vmem:[%s2010 + $0x50] sm:$0xff]
      %v2019 = vld [vmem:[%s2010 + $0x60] sm:$0xff]
      %v2020 = vld [vmem:[%s2010 + $0x68] sm:$0xff]
      %v2021 = vld [vmem:[%s2010 + $0x78] sm:$0xff]
      %v2022 = vld [vmem:[%s2010 + $0x80] sm:$0xff]
      %v2023 = vld [vmem:[%s2010 + $0x90] sm:$0xff]
      %v2024 = vld [vmem:[%s2010 + $0x98] sm:$0xff]
      %v2025 = vld [vmem:[%s2010 + $0xa8] sm:$0xff]
      %v2026 = vld [vmem:[%s2010 + $0xb0] sm:$0xff]
      %v2027 = vld [vmem:[%s2010 + $0xc0] sm:$0xff]
      %v2028 = vld [vmem:[%s2010 + $0xc8] sm:$0xff]
      %v2029 = vld [vmem:[%s2010 + $0xd8] sm:$0xff]
      %v2030 = vld [vmem:[%s2010 + $0xe0] sm:$0xff]
      %v2031 = vld [vmem:[%s2010 + $0xf0] sm:$0xff]
      %v2032 = vld [vmem:[%s2010 + $0xf8] sm:$0xff]
      %v2033 = vld [vmem:[%s2010 + $0x108] sm:$0xff]
      %v2034 = vld [vmem:[%s2010 + $0x110] sm:$0xff]
      %v2035 = vld [vmem:[%s2010 + $0x120] sm:$0xff]
      %v2036 = vld [vmem:[%s2010 + $0x128] sm:$0xff]
      %v2037 = vld [vmem:[%s2010 + $0x138] sm:$0xff]
      %v2038 = vld [vmem:[%s2010 + $0x140] sm:$0xff]
      %v2039 = vld [vmem:[%s2010 + $0x150] sm:$0xff]
      %v2040 = vld [vmem:[%s2010 + $0x158] sm:$0xff]
      %v2041 = vld [vmem:[%s2010 + $0x168] sm:$0xff]
      %v2042 = vld [vmem:[%s2010 + $0x170] sm:$0xff]
      %s2043 = scalar_lea.vmem %s1, 24
      %v2044 = vld [vmem:[%s2043] sm:$0xf]
      %v2046 = vsel %vm225, %v2011, 0
      %v2049 = vsel %vm225, %v2012, 0
      %v2052 = vsel %vm225, %v2013, 0
      %v2055 = vsel %vm225, %v2014, 0
      %v2058 = vsel %vm225, %v2015, 0
      %v2061 = vsel %vm225, %v2016, 0
      %v2064 = vsel %vm225, %v2017, 0
      %v2067 = vsel %vm225, %v2018, 0
      %v2070 = vsel %vm225, %v2019, 0
      %v2073 = vsel %vm225, %v2020, 0
      %v2076 = vsel %vm225, %v2021, 0
      %v2079 = vsel %vm225, %v2022, 0
      %v2082 = vsel %vm225, %v2023, 0
      %v2085 = vsel %vm225, %v2024, 0
      %v2088 = vsel %vm225, %v2025, 0
      %v2091 = vsel %vm225, %v2026, 0
      %v2094 = vsel %vm225, %v2027, 0
      %v2097 = vsel %vm225, %v2028, 0
      %v2100 = vsel %vm225, %v2029, 0
      %v2103 = vsel %vm225, %v2030, 0
      %v2106 = vsel %vm225, %v2031, 0
      %v2109 = vsel %vm225, %v2032, 0
      %v2112 = vsel %vm225, %v2033, 0
      %v2115 = vsel %vm225, %v2034, 0
      %v2118 = vsel %vm225, %v2035, 0
      %v2121 = vsel %vm225, %v2036, 0
      %v2124 = vsel %vm225, %v2037, 0
      %v2127 = vsel %vm225, %v2038, 0
      %v2130 = vsel %vm225, %v2039, 0
      %v2133 = vsel %vm225, %v2040, 0
      %v2136 = vsel %vm225, %v2041, 0
      %v2139 = vsel %vm225, %v2042, 0
      %v2142 = vsel %vm471, %v2044, 0
      %2144 = vmatpush.msra.mxu0 0.0
      %2145 = vmatpush.msra.mxu0 0.0
      %2146 = vmatpush.msra.mxu0 0.0
      %2147 = vmatpush.msra.mxu0 0.0
      %2148 = vmatpush.msra.mxu0 0.0
      %2149 = vmatpush.msra.mxu0 0.0
      %2150 = vmatpush.msra.mxu0 0.0
      %2151 = vmatpush.msra.mxu0 0.0
      %2152 = vmatpush.msra.mxu0 0.0
      %2153 = vmatpush.msra.mxu0 0.0
      %2154 = vmatpush.msra.mxu0 0.0
      %2155 = vmatpush.msra.mxu0 0.0
      %2156 = vmatpush.msra.mxu0 0.0
      %2157 = vmatpush.msra.mxu0 0.0
      %2158 = vmatpush.msra.mxu0 0.0
      %2159 = vmatpush.msra.mxu0 %v2142
      %2160 = vmatmul.f32.gmra.mxu0 %v2046
      %v2161 = vpop.f32.mrf.mxu0
      %v2162 = vadd.f32 0.0, %v2161
      %2163 = vmatmul.f32.gmra.mxu0 %v2049
      %v2164 = vpop.f32.mrf.mxu0
      %v2165 = vadd.f32 0.0, %v2164
      %2166 = vmatmul.f32.gmra.mxu0 %v2052
      %v2167 = vpop.f32.mrf.mxu0
      %v2168 = vadd.f32 0.0, %v2167
      %2169 = vmatmul.f32.gmra.mxu0 %v2055
      %v2170 = vpop.f32.mrf.mxu0
      %v2171 = vadd.f32 0.0, %v2170
      %2172 = vmatmul.f32.gmra.mxu0 %v2058
      %v2173 = vpop.f32.mrf.mxu0
      %v2174 = vadd.f32 0.0, %v2173
      %2175 = vmatmul.f32.gmra.mxu0 %v2061
      %v2176 = vpop.f32.mrf.mxu0
      %v2177 = vadd.f32 0.0, %v2176
      %2178 = vmatmul.f32.gmra.mxu0 %v2064
      %v2179 = vpop.f32.mrf.mxu0
      %v2180 = vadd.f32 0.0, %v2179
      %2181 = vmatmul.f32.gmra.mxu0 %v2067
      %v2182 = vpop.f32.mrf.mxu0
      %v2183 = vadd.f32 0.0, %v2182
      %2184 = vmatmul.f32.gmra.mxu0 %v2070
      %v2185 = vpop.f32.mrf.mxu0
      %v2186 = vadd.f32 0.0, %v2185
      %2187 = vmatmul.f32.gmra.mxu0 %v2073
      %v2188 = vpop.f32.mrf.mxu0
      %v2189 = vadd.f32 0.0, %v2188
      %2190 = vmatmul.f32.gmra.mxu0 %v2076
      %v2191 = vpop.f32.mrf.mxu0
      %v2192 = vadd.f32 0.0, %v2191
      %2193 = vmatmul.f32.gmra.mxu0 %v2079
      %v2194 = vpop.f32.mrf.mxu0
      %v2195 = vadd.f32 0.0, %v2194
      %2196 = vmatmul.f32.gmra.mxu0 %v2082
      %v2197 = vpop.f32.mrf.mxu0
      %v2198 = vadd.f32 0.0, %v2197
      %2199 = vmatmul.f32.gmra.mxu0 %v2085
      %v2200 = vpop.f32.mrf.mxu0
      %v2201 = vadd.f32 0.0, %v2200
      %2202 = vmatmul.f32.gmra.mxu0 %v2088
      %v2203 = vpop.f32.mrf.mxu0
      %v2204 = vadd.f32 0.0, %v2203
      %2205 = vmatmul.f32.gmra.mxu0 %v2091
      %v2206 = vpop.f32.mrf.mxu0
      %v2207 = vadd.f32 0.0, %v2206
      %2208 = vmatmul.f32.gmra.mxu0 %v2094
      %v2209 = vpop.f32.mrf.mxu0
      %v2210 = vadd.f32 0.0, %v2209
      %2211 = vmatmul.f32.gmra.mxu0 %v2097
      %v2212 = vpop.f32.mrf.mxu0
      %v2213 = vadd.f32 0.0, %v2212
      %2214 = vmatmul.f32.gmra.mxu0 %v2100
      %v2215 = vpop.f32.mrf.mxu0
      %v2216 = vadd.f32 0.0, %v2215
      %2217 = vmatmul.f32.gmra.mxu0 %v2103
      %v2218 = vpop.f32.mrf.mxu0
      %v2219 = vadd.f32 0.0, %v2218
      %2220 = vmatmul.f32.gmra.mxu0 %v2106
      %v2221 = vpop.f32.mrf.mxu0
      %v2222 = vadd.f32 0.0, %v2221
      %2223 = vmatmul.f32.gmra.mxu0 %v2109
      %v2224 = vpop.f32.mrf.mxu0
      %v2225 = vadd.f32 0.0, %v2224
      %2226 = vmatmul.f32.gmra.mxu0 %v2112
      %v2227 = vpop.f32.mrf.mxu0
      %v2228 = vadd.f32 0.0, %v2227
      %2229 = vmatmul.f32.gmra.mxu0 %v2115
      %v2230 = vpop.f32.mrf.mxu0
      %v2231 = vadd.f32 0.0, %v2230
      %2232 = vmatmul.f32.gmra.mxu0 %v2118
      %v2233 = vpop.f32.mrf.mxu0
      %v2234 = vadd.f32 0.0, %v2233
      %2235 = vmatmul.f32.gmra.mxu0 %v2121
      %v2236 = vpop.f32.mrf.mxu0
      %v2237 = vadd.f32 0.0, %v2236
      %2238 = vmatmul.f32.gmra.mxu0 %v2124
      %v2239 = vpop.f32.mrf.mxu0
      %v2240 = vadd.f32 0.0, %v2239
      %2241 = vmatmul.f32.gmra.mxu0 %v2127
      %v2242 = vpop.f32.mrf.mxu0
      %v2243 = vadd.f32 0.0, %v2242
      %2244 = vmatmul.f32.gmra.mxu0 %v2130
      %v2245 = vpop.f32.mrf.mxu0
      %v2246 = vadd.f32 0.0, %v2245
      %2247 = vmatmul.f32.gmra.mxu0 %v2133
      %v2248 = vpop.f32.mrf.mxu0
      %v2249 = vadd.f32 0.0, %v2248
      %2250 = vmatmul.f32.gmra.mxu0 %v2136
      %v2251 = vpop.f32.mrf.mxu0
      %v2252 = vadd.f32 0.0, %v2251
      %2253 = vmatmul.f32.gmra.mxu0 %v2139
      %v2254 = vpop.f32.mrf.mxu0
      %v2255 = vadd.f32 0.0, %v2254
      %2256 = vdwg.mxu0
      %v2257 = vadd.f32 %v1978, %v2162
      %v2258 = vadd.f32 %v1979, %v2165
      %v2259 = vadd.f32 %v1980, %v2168
      %v2260 = vadd.f32 %v1981, %v2171
      %v2261 = vadd.f32 %v1982, %v2174
      %v2262 = vadd.f32 %v1983, %v2177
      %v2263 = vadd.f32 %v1984, %v2180
      %v2264 = vadd.f32 %v1985, %v2183
      %v2265 = vadd.f32 %v1986, %v2186
      %v2266 = vadd.f32 %v1987, %v2189
      %v2267 = vadd.f32 %v1988, %v2192
      %v2268 = vadd.f32 %v1989, %v2195
      %v2269 = vadd.f32 %v1990, %v2198
      %v2270 = vadd.f32 %v1991, %v2201
      %v2271 = vadd.f32 %v1992, %v2204
      %v2272 = vadd.f32 %v1993, %v2207
      %v2273 = vadd.f32 %v1994, %v2210
      %v2274 = vadd.f32 %v1995, %v2213
      %v2275 = vadd.f32 %v1996, %v2216
      %v2276 = vadd.f32 %v1997, %v2219
      %v2277 = vadd.f32 %v1998, %v2222
      %v2278 = vadd.f32 %v1999, %v2225
      %v2279 = vadd.f32 %v2000, %v2228
      %v2280 = vadd.f32 %v2001, %v2231
      %v2281 = vadd.f32 %v2002, %v2234
      %v2282 = vadd.f32 %v2003, %v2237
      %v2283 = vadd.f32 %v2004, %v2240
      %v2284 = vadd.f32 %v2005, %v2243
      %v2285 = vadd.f32 %v2006, %v2246
      %v2286 = vadd.f32 %v2007, %v2249
      %v2287 = vadd.f32 %v2008, %v2252
      %v2288 = vadd.f32 %v2009, %v2255
      %v2289 = vld [vmem:[%s2010 + $0x2] sm:$0xff]
      %v2290 = vld [vmem:[%s2010 + $0xa] sm:$0xff]
      %v2291 = vld [vmem:[%s2010 + $0x1a] sm:$0xff]
      %v2292 = vld [vmem:[%s2010 + $0x22] sm:$0xff]
      %v2293 = vld [vmem:[%s2010 + $0x32] sm:$0xff]
      %v2294 = vld [vmem:[%s2010 + $0x3a] sm:$0xff]
      %v2295 = vld [vmem:[%s2010 + $0x4a] sm:$0xff]
      %v2296 = vld [vmem:[%s2010 + $0x52] sm:$0xff]
      %v2297 = vld [vmem:[%s2010 + $0x62] sm:$0xff]
      %v2298 = vld [vmem:[%s2010 + $0x6a] sm:$0xff]
      %v2299 = vld [vmem:[%s2010 + $0x7a] sm:$0xff]
      %v2300 = vld [vmem:[%s2010 + $0x82] sm:$0xff]
      %v2301 = vld [vmem:[%s2010 + $0x92] sm:$0xff]
      %v2302 = vld [vmem:[%s2010 + $0x9a] sm:$0xff]
      %v2303 = vld [vmem:[%s2010 + $0xaa] sm:$0xff]
      %v2304 = vld [vmem:[%s2010 + $0xb2] sm:$0xff]
      %v2305 = vld [vmem:[%s2010 + $0xc2] sm:$0xff]
      %v2306 = vld [vmem:[%s2010 + $0xca] sm:$0xff]
      %v2307 = vld [vmem:[%s2010 + $0xda] sm:$0xff]
      %v2308 = vld [vmem:[%s2010 + $0xe2] sm:$0xff]
      %v2309 = vld [vmem:[%s2010 + $0xf2] sm:$0xff]
      %v2310 = vld [vmem:[%s2010 + $0xfa] sm:$0xff]
      %v2311 = vld [vmem:[%s2010 + $0x10a] sm:$0xff]
      %v2312 = vld [vmem:[%s2010 + $0x112] sm:$0xff]
      %v2313 = vld [vmem:[%s2010 + $0x122] sm:$0xff]
      %v2314 = vld [vmem:[%s2010 + $0x12a] sm:$0xff]
      %v2315 = vld [vmem:[%s2010 + $0x13a] sm:$0xff]
      %v2316 = vld [vmem:[%s2010 + $0x142] sm:$0xff]
      %v2317 = vld [vmem:[%s2010 + $0x152] sm:$0xff]
      %v2318 = vld [vmem:[%s2010 + $0x15a] sm:$0xff]
      %v2319 = vld [vmem:[%s2010 + $0x16a] sm:$0xff]
      %v2320 = vld [vmem:[%s2010 + $0x172] sm:$0xff]
      %s2321 = scalar_lea.vmem %s1, 28
      %v2322 = vld [vmem:[%s2321] sm:$0xf]
      %v2324 = vsel %vm225, %v2289, 0
      %v2327 = vsel %vm225, %v2290, 0
      %v2330 = vsel %vm225, %v2291, 0
      %v2333 = vsel %vm225, %v2292, 0
      %v2336 = vsel %vm225, %v2293, 0
      %v2339 = vsel %vm225, %v2294, 0
      %v2342 = vsel %vm225, %v2295, 0
      %v2345 = vsel %vm225, %v2296, 0
      %v2348 = vsel %vm225, %v2297, 0
      %v2351 = vsel %vm225, %v2298, 0
      %v2354 = vsel %vm225, %v2299, 0
      %v2357 = vsel %vm225, %v2300, 0
      %v2360 = vsel %vm225, %v2301, 0
      %v2363 = vsel %vm225, %v2302, 0
      %v2366 = vsel %vm225, %v2303, 0
      %v2369 = vsel %vm225, %v2304, 0
      %v2372 = vsel %vm225, %v2305, 0
      %v2375 = vsel %vm225, %v2306, 0
      %v2378 = vsel %vm225, %v2307, 0
      %v2381 = vsel %vm225, %v2308, 0
      %v2384 = vsel %vm225, %v2309, 0
      %v2387 = vsel %vm225, %v2310, 0
      %v2390 = vsel %vm225, %v2311, 0
      %v2393 = vsel %vm225, %v2312, 0
      %v2396 = vsel %vm225, %v2313, 0
      %v2399 = vsel %vm225, %v2314, 0
      %v2402 = vsel %vm225, %v2315, 0
      %v2405 = vsel %vm225, %v2316, 0
      %v2408 = vsel %vm225, %v2317, 0
      %v2411 = vsel %vm225, %v2318, 0
      %v2414 = vsel %vm225, %v2319, 0
      %v2417 = vsel %vm225, %v2320, 0
      %v2420 = vsel %vm471, %v2322, 0
      %2422 = vmatpush.msra.mxu0 0.0
      %2423 = vmatpush.msra.mxu0 0.0
      %2424 = vmatpush.msra.mxu0 0.0
      %2425 = vmatpush.msra.mxu0 0.0
      %2426 = vmatpush.msra.mxu0 0.0
      %2427 = vmatpush.msra.mxu0 0.0
      %2428 = vmatpush.msra.mxu0 0.0
      %2429 = vmatpush.msra.mxu0 0.0
      %2430 = vmatpush.msra.mxu0 0.0
      %2431 = vmatpush.msra.mxu0 0.0
      %2432 = vmatpush.msra.mxu0 0.0
      %2433 = vmatpush.msra.mxu0 0.0
      %2434 = vmatpush.msra.mxu0 0.0
      %2435 = vmatpush.msra.mxu0 0.0
      %2436 = vmatpush.msra.mxu0 0.0
      %2437 = vmatpush.msra.mxu0 %v2420
      %2438 = vmatmul.f32.gmra.mxu0 %v2324
      %v2439 = vpop.f32.mrf.mxu0
      %v2440 = vadd.f32 0.0, %v2439
      %2441 = vmatmul.f32.gmra.mxu0 %v2327
      %v2442 = vpop.f32.mrf.mxu0
      %v2443 = vadd.f32 0.0, %v2442
      %2444 = vmatmul.f32.gmra.mxu0 %v2330
      %v2445 = vpop.f32.mrf.mxu0
      %v2446 = vadd.f32 0.0, %v2445
      %2447 = vmatmul.f32.gmra.mxu0 %v2333
      %v2448 = vpop.f32.mrf.mxu0
      %v2449 = vadd.f32 0.0, %v2448
      %2450 = vmatmul.f32.gmra.mxu0 %v2336
      %v2451 = vpop.f32.mrf.mxu0
      %v2452 = vadd.f32 0.0, %v2451
      %2453 = vmatmul.f32.gmra.mxu0 %v2339
      %v2454 = vpop.f32.mrf.mxu0
      %v2455 = vadd.f32 0.0, %v2454
      %2456 = vmatmul.f32.gmra.mxu0 %v2342
      %v2457 = vpop.f32.mrf.mxu0
      %v2458 = vadd.f32 0.0, %v2457
      %2459 = vmatmul.f32.gmra.mxu0 %v2345
      %v2460 = vpop.f32.mrf.mxu0
      %v2461 = vadd.f32 0.0, %v2460
      %2462 = vmatmul.f32.gmra.mxu0 %v2348
      %v2463 = vpop.f32.mrf.mxu0
      %v2464 = vadd.f32 0.0, %v2463
      %2465 = vmatmul.f32.gmra.mxu0 %v2351
      %v2466 = vpop.f32.mrf.mxu0
      %v2467 = vadd.f32 0.0, %v2466
      %2468 = vmatmul.f32.gmra.mxu0 %v2354
      %v2469 = vpop.f32.mrf.mxu0
      %v2470 = vadd.f32 0.0, %v2469
      %2471 = vmatmul.f32.gmra.mxu0 %v2357
      %v2472 = vpop.f32.mrf.mxu0
      %v2473 = vadd.f32 0.0, %v2472
      %2474 = vmatmul.f32.gmra.mxu0 %v2360
      %v2475 = vpop.f32.mrf.mxu0
      %v2476 = vadd.f32 0.0, %v2475
      %2477 = vmatmul.f32.gmra.mxu0 %v2363
      %v2478 = vpop.f32.mrf.mxu0
      %v2479 = vadd.f32 0.0, %v2478
      %2480 = vmatmul.f32.gmra.mxu0 %v2366
      %v2481 = vpop.f32.mrf.mxu0
      %v2482 = vadd.f32 0.0, %v2481
      %2483 = vmatmul.f32.gmra.mxu0 %v2369
      %v2484 = vpop.f32.mrf.mxu0
      %v2485 = vadd.f32 0.0, %v2484
      %2486 = vmatmul.f32.gmra.mxu0 %v2372
      %v2487 = vpop.f32.mrf.mxu0
      %v2488 = vadd.f32 0.0, %v2487
      %2489 = vmatmul.f32.gmra.mxu0 %v2375
      %v2490 = vpop.f32.mrf.mxu0
      %v2491 = vadd.f32 0.0, %v2490
      %2492 = vmatmul.f32.gmra.mxu0 %v2378
      %v2493 = vpop.f32.mrf.mxu0
      %v2494 = vadd.f32 0.0, %v2493
      %2495 = vmatmul.f32.gmra.mxu0 %v2381
      %v2496 = vpop.f32.mrf.mxu0
      %v2497 = vadd.f32 0.0, %v2496
      %2498 = vmatmul.f32.gmra.mxu0 %v2384
      %v2499 = vpop.f32.mrf.mxu0
      %v2500 = vadd.f32 0.0, %v2499
      %2501 = vmatmul.f32.gmra.mxu0 %v2387
      %v2502 = vpop.f32.mrf.mxu0
      %v2503 = vadd.f32 0.0, %v2502
      %2504 = vmatmul.f32.gmra.mxu0 %v2390
      %v2505 = vpop.f32.mrf.mxu0
      %v2506 = vadd.f32 0.0, %v2505
      %2507 = vmatmul.f32.gmra.mxu0 %v2393
      %v2508 = vpop.f32.mrf.mxu0
      %v2509 = vadd.f32 0.0, %v2508
      %2510 = vmatmul.f32.gmra.mxu0 %v2396
      %v2511 = vpop.f32.mrf.mxu0
      %v2512 = vadd.f32 0.0, %v2511
      %2513 = vmatmul.f32.gmra.mxu0 %v2399
      %v2514 = vpop.f32.mrf.mxu0
      %v2515 = vadd.f32 0.0, %v2514
      %2516 = vmatmul.f32.gmra.mxu0 %v2402
      %v2517 = vpop.f32.mrf.mxu0
      %v2518 = vadd.f32 0.0, %v2517
      %2519 = vmatmul.f32.gmra.mxu0 %v2405
      %v2520 = vpop.f32.mrf.mxu0
      %v2521 = vadd.f32 0.0, %v2520
      %2522 = vmatmul.f32.gmra.mxu0 %v2408
      %v2523 = vpop.f32.mrf.mxu0
      %v2524 = vadd.f32 0.0, %v2523
      %2525 = vmatmul.f32.gmra.mxu0 %v2411
      %v2526 = vpop.f32.mrf.mxu0
      %v2527 = vadd.f32 0.0, %v2526
      %2528 = vmatmul.f32.gmra.mxu0 %v2414
      %v2529 = vpop.f32.mrf.mxu0
      %v2530 = vadd.f32 0.0, %v2529
      %2531 = vmatmul.f32.gmra.mxu0 %v2417
      %v2532 = vpop.f32.mrf.mxu0
      %v2533 = vadd.f32 0.0, %v2532
      %2534 = vdwg.mxu0
      %v2535 = vadd.f32 %v2257, %v2440
      %v2536 = vadd.f32 %v2258, %v2443
      %v2537 = vadd.f32 %v2259, %v2446
      %v2538 = vadd.f32 %v2260, %v2449
      %v2539 = vadd.f32 %v2261, %v2452
      %v2540 = vadd.f32 %v2262, %v2455
      %v2541 = vadd.f32 %v2263, %v2458
      %v2542 = vadd.f32 %v2264, %v2461
      %v2543 = vadd.f32 %v2265, %v2464
      %v2544 = vadd.f32 %v2266, %v2467
      %v2545 = vadd.f32 %v2267, %v2470
      %v2546 = vadd.f32 %v2268, %v2473
      %v2547 = vadd.f32 %v2269, %v2476
      %v2548 = vadd.f32 %v2270, %v2479
      %v2549 = vadd.f32 %v2271, %v2482
      %v2550 = vadd.f32 %v2272, %v2485
      %v2551 = vadd.f32 %v2273, %v2488
      %v2552 = vadd.f32 %v2274, %v2491
      %v2553 = vadd.f32 %v2275, %v2494
      %v2554 = vadd.f32 %v2276, %v2497
      %v2555 = vadd.f32 %v2277, %v2500
      %v2556 = vadd.f32 %v2278, %v2503
      %v2557 = vadd.f32 %v2279, %v2506
      %v2558 = vadd.f32 %v2280, %v2509
      %v2559 = vadd.f32 %v2281, %v2512
      %v2560 = vadd.f32 %v2282, %v2515
      %v2561 = vadd.f32 %v2283, %v2518
      %v2562 = vadd.f32 %v2284, %v2521
      %v2563 = vadd.f32 %v2285, %v2524
      %v2564 = vadd.f32 %v2286, %v2527
      %v2565 = vadd.f32 %v2287, %v2530
      %v2566 = vadd.f32 %v2288, %v2533
      %v2567 = vld [vmem:[%s2010 + $0x4] sm:$0xff]
      %v2568 = vld [vmem:[%s2010 + $0xc] sm:$0xff]
      %v2569 = vld [vmem:[%s2010 + $0x1c] sm:$0xff]
      %v2570 = vld [vmem:[%s2010 + $0x24] sm:$0xff]
      %v2571 = vld [vmem:[%s2010 + $0x34] sm:$0xff]
      %v2572 = vld [vmem:[%s2010 + $0x3c] sm:$0xff]
      %v2573 = vld [vmem:[%s2010 + $0x4c] sm:$0xff]
      %v2574 = vld [vmem:[%s2010 + $0x54] sm:$0xff]
      %v2575 = vld [vmem:[%s2010 + $0x64] sm:$0xff]
      %v2576 = vld [vmem:[%s2010 + $0x6c] sm:$0xff]
      %v2577 = vld [vmem:[%s2010 + $0x7c] sm:$0xff]
      %v2578 = vld [vmem:[%s2010 + $0x84] sm:$0xff]
      %v2579 = vld [vmem:[%s2010 + $0x94] sm:$0xff]
      %v2580 = vld [vmem:[%s2010 + $0x9c] sm:$0xff]
      %v2581 = vld [vmem:[%s2010 + $0xac] sm:$0xff]
      %v2582 = vld [vmem:[%s2010 + $0xb4] sm:$0xff]
      %v2583 = vld [vmem:[%s2010 + $0xc4] sm:$0xff]
      %v2584 = vld [vmem:[%s2010 + $0xcc] sm:$0xff]
      %v2585 = vld [vmem:[%s2010 + $0xdc] sm:$0xff]
      %v2586 = vld [vmem:[%s2010 + $0xe4] sm:$0xff]
      %v2587 = vld [vmem:[%s2010 + $0xf4] sm:$0xff]
      %v2588 = vld [vmem:[%s2010 + $0xfc] sm:$0xff]
      %v2589 = vld [vmem:[%s2010 + $0x10c] sm:$0xff]
      %v2590 = vld [vmem:[%s2010 + $0x114] sm:$0xff]
      %v2591 = vld [vmem:[%s2010 + $0x124] sm:$0xff]
      %v2592 = vld [vmem:[%s2010 + $0x12c] sm:$0xff]
      %v2593 = vld [vmem:[%s2010 + $0x13c] sm:$0xff]
      %v2594 = vld [vmem:[%s2010 + $0x144] sm:$0xff]
      %v2595 = vld [vmem:[%s2010 + $0x154] sm:$0xff]
      %v2596 = vld [vmem:[%s2010 + $0x15c] sm:$0xff]
      %v2597 = vld [vmem:[%s2010 + $0x16c] sm:$0xff]
      %v2598 = vld [vmem:[%s2010 + $0x174] sm:$0xff]
      %s2599 = scalar_lea.vmem %s1, 32
      %v2600 = vld [vmem:[%s2599] sm:$0xf]
      %v2602 = vsel %vm225, %v2567, 0
      %v2605 = vsel %vm225, %v2568, 0
      %v2608 = vsel %vm225, %v2569, 0
      %v2611 = vsel %vm225, %v2570, 0
      %v2614 = vsel %vm225, %v2571, 0
      %v2617 = vsel %vm225, %v2572, 0
      %v2620 = vsel %vm225, %v2573, 0
      %v2623 = vsel %vm225, %v2574, 0
      %v2626 = vsel %vm225, %v2575, 0
      %v2629 = vsel %vm225, %v2576, 0
      %v2632 = vsel %vm225, %v2577, 0
      %v2635 = vsel %vm225, %v2578, 0
      %v2638 = vsel %vm225, %v2579, 0
      %v2641 = vsel %vm225, %v2580, 0
      %v2644 = vsel %vm225, %v2581, 0
      %v2647 = vsel %vm225, %v2582, 0
      %v2650 = vsel %vm225, %v2583, 0
      %v2653 = vsel %vm225, %v2584, 0
      %v2656 = vsel %vm225, %v2585, 0
      %v2659 = vsel %vm225, %v2586, 0
      %v2662 = vsel %vm225, %v2587, 0
      %v2665 = vsel %vm225, %v2588, 0
      %v2668 = vsel %vm225, %v2589, 0
      %v2671 = vsel %vm225, %v2590, 0
      %v2674 = vsel %vm225, %v2591, 0
      %v2677 = vsel %vm225, %v2592, 0
      %v2680 = vsel %vm225, %v2593, 0
      %v2683 = vsel %vm225, %v2594, 0
      %v2686 = vsel %vm225, %v2595, 0
      %v2689 = vsel %vm225, %v2596, 0
      %v2692 = vsel %vm225, %v2597, 0
      %v2695 = vsel %vm225, %v2598, 0
      %v2698 = vsel %vm471, %v2600, 0
      %2700 = vmatpush.msra.mxu0 0.0
      %2701 = vmatpush.msra.mxu0 0.0
      %2702 = vmatpush.msra.mxu0 0.0
      %2703 = vmatpush.msra.mxu0 0.0
      %2704 = vmatpush.msra.mxu0 0.0
      %2705 = vmatpush.msra.mxu0 0.0
      %2706 = vmatpush.msra.mxu0 0.0
      %2707 = vmatpush.msra.mxu0 0.0
      %2708 = vmatpush.msra.mxu0 0.0
      %2709 = vmatpush.msra.mxu0 0.0
      %2710 = vmatpush.msra.mxu0 0.0
      %2711 = vmatpush.msra.mxu0 0.0
      %2712 = vmatpush.msra.mxu0 0.0
      %2713 = vmatpush.msra.mxu0 0.0
      %2714 = vmatpush.msra.mxu0 0.0
      %2715 = vmatpush.msra.mxu0 %v2698
      %2716 = vmatmul.f32.gmra.mxu0 %v2602
      %v2717 = vpop.f32.mrf.mxu0
      %v2718 = vadd.f32 0.0, %v2717
      %2719 = vmatmul.f32.gmra.mxu0 %v2605
      %v2720 = vpop.f32.mrf.mxu0
      %v2721 = vadd.f32 0.0, %v2720
      %2722 = vmatmul.f32.gmra.mxu0 %v2608
      %v2723 = vpop.f32.mrf.mxu0
      %v2724 = vadd.f32 0.0, %v2723
      %2725 = vmatmul.f32.gmra.mxu0 %v2611
      %v2726 = vpop.f32.mrf.mxu0
      %v2727 = vadd.f32 0.0, %v2726
      %2728 = vmatmul.f32.gmra.mxu0 %v2614
      %v2729 = vpop.f32.mrf.mxu0
      %v2730 = vadd.f32 0.0, %v2729
      %2731 = vmatmul.f32.gmra.mxu0 %v2617
      %v2732 = vpop.f32.mrf.mxu0
      %v2733 = vadd.f32 0.0, %v2732
      %2734 = vmatmul.f32.gmra.mxu0 %v2620
      %v2735 = vpop.f32.mrf.mxu0
      %v2736 = vadd.f32 0.0, %v2735
      %2737 = vmatmul.f32.gmra.mxu0 %v2623
      %v2738 = vpop.f32.mrf.mxu0
      %v2739 = vadd.f32 0.0, %v2738
      %2740 = vmatmul.f32.gmra.mxu0 %v2626
      %v2741 = vpop.f32.mrf.mxu0
      %v2742 = vadd.f32 0.0, %v2741
      %2743 = vmatmul.f32.gmra.mxu0 %v2629
      %v2744 = vpop.f32.mrf.mxu0
      %v2745 = vadd.f32 0.0, %v2744
      %2746 = vmatmul.f32.gmra.mxu0 %v2632
      %v2747 = vpop.f32.mrf.mxu0
      %v2748 = vadd.f32 0.0, %v2747
      %2749 = vmatmul.f32.gmra.mxu0 %v2635
      %v2750 = vpop.f32.mrf.mxu0
      %v2751 = vadd.f32 0.0, %v2750
      %2752 = vmatmul.f32.gmra.mxu0 %v2638
      %v2753 = vpop.f32.mrf.mxu0
      %v2754 = vadd.f32 0.0, %v2753
      %2755 = vmatmul.f32.gmra.mxu0 %v2641
      %v2756 = vpop.f32.mrf.mxu0
      %v2757 = vadd.f32 0.0, %v2756
      %2758 = vmatmul.f32.gmra.mxu0 %v2644
      %v2759 = vpop.f32.mrf.mxu0
      %v2760 = vadd.f32 0.0, %v2759
      %2761 = vmatmul.f32.gmra.mxu0 %v2647
      %v2762 = vpop.f32.mrf.mxu0
      %v2763 = vadd.f32 0.0, %v2762
      %2764 = vmatmul.f32.gmra.mxu0 %v2650
      %v2765 = vpop.f32.mrf.mxu0
      %v2766 = vadd.f32 0.0, %v2765
      %2767 = vmatmul.f32.gmra.mxu0 %v2653
      %v2768 = vpop.f32.mrf.mxu0
      %v2769 = vadd.f32 0.0, %v2768
      %2770 = vmatmul.f32.gmra.mxu0 %v2656
      %v2771 = vpop.f32.mrf.mxu0
      %v2772 = vadd.f32 0.0, %v2771
      %2773 = vmatmul.f32.gmra.mxu0 %v2659
      %v2774 = vpop.f32.mrf.mxu0
      %v2775 = vadd.f32 0.0, %v2774
      %2776 = vmatmul.f32.gmra.mxu0 %v2662
      %v2777 = vpop.f32.mrf.mxu0
      %v2778 = vadd.f32 0.0, %v2777
      %2779 = vmatmul.f32.gmra.mxu0 %v2665
      %v2780 = vpop.f32.mrf.mxu0
      %v2781 = vadd.f32 0.0, %v2780
      %2782 = vmatmul.f32.gmra.mxu0 %v2668
      %v2783 = vpop.f32.mrf.mxu0
      %v2784 = vadd.f32 0.0, %v2783
      %2785 = vmatmul.f32.gmra.mxu0 %v2671
      %v2786 = vpop.f32.mrf.mxu0
      %v2787 = vadd.f32 0.0, %v2786
      %2788 = vmatmul.f32.gmra.mxu0 %v2674
      %v2789 = vpop.f32.mrf.mxu0
      %v2790 = vadd.f32 0.0, %v2789
      %2791 = vmatmul.f32.gmra.mxu0 %v2677
      %v2792 = vpop.f32.mrf.mxu0
      %v2793 = vadd.f32 0.0, %v2792
      %2794 = vmatmul.f32.gmra.mxu0 %v2680
      %v2795 = vpop.f32.mrf.mxu0
      %v2796 = vadd.f32 0.0, %v2795
      %2797 = vmatmul.f32.gmra.mxu0 %v2683
      %v2798 = vpop.f32.mrf.mxu0
      %v2799 = vadd.f32 0.0, %v2798
      %2800 = vmatmul.f32.gmra.mxu0 %v2686
      %v2801 = vpop.f32.mrf.mxu0
      %v2802 = vadd.f32 0.0, %v2801
      %2803 = vmatmul.f32.gmra.mxu0 %v2689
      %v2804 = vpop.f32.mrf.mxu0
      %v2805 = vadd.f32 0.0, %v2804
      %2806 = vmatmul.f32.gmra.mxu0 %v2692
      %v2807 = vpop.f32.mrf.mxu0
      %v2808 = vadd.f32 0.0, %v2807
      %2809 = vmatmul.f32.gmra.mxu0 %v2695
      %v2810 = vpop.f32.mrf.mxu0
      %v2811 = vadd.f32 0.0, %v2810
      %2812 = vdwg.mxu0
      %v2813 = vadd.f32 %v2535, %v2718
      %v2814 = vadd.f32 %v2536, %v2721
      %v2815 = vadd.f32 %v2537, %v2724
      %v2816 = vadd.f32 %v2538, %v2727
      %v2817 = vadd.f32 %v2539, %v2730
      %v2818 = vadd.f32 %v2540, %v2733
      %v2819 = vadd.f32 %v2541, %v2736
      %v2820 = vadd.f32 %v2542, %v2739
      %v2821 = vadd.f32 %v2543, %v2742
      %v2822 = vadd.f32 %v2544, %v2745
      %v2823 = vadd.f32 %v2545, %v2748
      %v2824 = vadd.f32 %v2546, %v2751
      %v2825 = vadd.f32 %v2547, %v2754
      %v2826 = vadd.f32 %v2548, %v2757
      %v2827 = vadd.f32 %v2549, %v2760
      %v2828 = vadd.f32 %v2550, %v2763
      %v2829 = vadd.f32 %v2551, %v2766
      %v2830 = vadd.f32 %v2552, %v2769
      %v2831 = vadd.f32 %v2553, %v2772
      %v2832 = vadd.f32 %v2554, %v2775
      %v2833 = vadd.f32 %v2555, %v2778
      %v2834 = vadd.f32 %v2556, %v2781
      %v2835 = vadd.f32 %v2557, %v2784
      %v2836 = vadd.f32 %v2558, %v2787
      %v2837 = vadd.f32 %v2559, %v2790
      %v2838 = vadd.f32 %v2560, %v2793
      %v2839 = vadd.f32 %v2561, %v2796
      %v2840 = vadd.f32 %v2562, %v2799
      %v2841 = vadd.f32 %v2563, %v2802
      %v2842 = vadd.f32 %v2564, %v2805
      %v2843 = vadd.f32 %v2565, %v2808
      %v2844 = vadd.f32 %v2566, %v2811
      %v2845 = vmax.f32 %v2813, 0.0
      %v2846 = vmax.f32 %v2814, 0.0
      %v2847 = vmax.f32 %v2815, 0.0
      %v2848 = vmax.f32 %v2816, 0.0
      %v2849 = vmax.f32 %v2817, 0.0
      %v2850 = vmax.f32 %v2818, 0.0
      %v2851 = vmax.f32 %v2819, 0.0
      %v2852 = vmax.f32 %v2820, 0.0
      %v2853 = vmax.f32 %v2821, 0.0
      %v2854 = vmax.f32 %v2822, 0.0
      %v2855 = vmax.f32 %v2823, 0.0
      %v2856 = vmax.f32 %v2824, 0.0
      %v2857 = vmax.f32 %v2825, 0.0
      %v2858 = vmax.f32 %v2826, 0.0
      %v2859 = vmax.f32 %v2827, 0.0
      %v2860 = vmax.f32 %v2828, 0.0
      %v2861 = vmax.f32 %v2829, 0.0
      %v2862 = vmax.f32 %v2830, 0.0
      %v2863 = vmax.f32 %v2831, 0.0
      %v2864 = vmax.f32 %v2832, 0.0
      %v2865 = vmax.f32 %v2833, 0.0
      %v2866 = vmax.f32 %v2834, 0.0
      %v2867 = vmax.f32 %v2835, 0.0
      %v2868 = vmax.f32 %v2836, 0.0
      %v2869 = vmax.f32 %v2837, 0.0
      %v2870 = vmax.f32 %v2838, 0.0
      %v2871 = vmax.f32 %v2839, 0.0
      %v2872 = vmax.f32 %v2840, 0.0
      %v2873 = vmax.f32 %v2841, 0.0
      %v2874 = vmax.f32 %v2842, 0.0
      %v2875 = vmax.f32 %v2843, 0.0
      %v2876 = vmax.f32 %v2844, 0.0
      %2877 = vst.msk [vmem:[#allocation3] sm:$0xff] %vm225, 0.0
      %2878 = vst.msk [vmem:[#allocation3 + $0x8] sm:$0xff] %vm225, 0.0
      %2879 = vst.msk [vmem:[#allocation3 + $0x10] sm:$0xf] %vm228, 0.0
      %2880 = vst.msk [vmem:[#allocation3 + $0x18] sm:$0xff] %vm225, 0.0
      %2881 = vst.msk [vmem:[#allocation3 + $0x20] sm:$0xff] %vm225, 0.0
      %2882 = vst.msk [vmem:[#allocation3 + $0x28] sm:$0xf] %vm228, 0.0
      %s2883 = scalar_lea.vmem [#allocation3], 432
      %2884 = vst.msk [vmem:[%s2883] sm:$0xff] %vm225, 0.0
      %2885 = vst.msk [vmem:[%s2883 + $0x8] sm:$0xff] %vm225, 0.0
      %2886 = vst.msk [vmem:[%s2883 + $0x10] sm:$0xf] %vm228, 0.0
      %2887 = vst.msk [vmem:[%s2883 + $0x18] sm:$0xff] %vm225, 0.0
      %2888 = vst.msk [vmem:[%s2883 + $0x20] sm:$0xff] %vm225, 0.0
      %2889 = vst.msk [vmem:[%s2883 + $0x28] sm:$0xf] %vm228, 0.0
      %s2890 = scalar_lea.vmem [#allocation3], 48
      %2891 = vst.msk [vmem:[%s2890] sm:$0x3] %vm241, 0.0
      %2892 = vst.msk [vmem:[%s2890 + $0x18] sm:$0x3] %vm241, 0.0
      %2893 = vst.msk [vmem:[%s2890 + $0x30] sm:$0x3] %vm241, 0.0
      %2894 = vst.msk [vmem:[%s2890 + $0x48] sm:$0x3] %vm241, 0.0
      %2895 = vst.msk [vmem:[%s2890 + $0x60] sm:$0x3] %vm241, 0.0
      %2896 = vst.msk [vmem:[%s2890 + $0x78] sm:$0x3] %vm241, 0.0
      %2897 = vst.msk [vmem:[%s2890 + $0x90] sm:$0x3] %vm241, 0.0
      %2898 = vst.msk [vmem:[%s2890 + $0xa8] sm:$0x3] %vm241, 0.0
      %2899 = vst.msk [vmem:[%s2890 + $0xc0] sm:$0x3] %vm241, 0.0
      %2900 = vst.msk [vmem:[%s2890 + $0xd8] sm:$0x3] %vm241, 0.0
      %2901 = vst.msk [vmem:[%s2890 + $0xf0] sm:$0x3] %vm241, 0.0
      %2902 = vst.msk [vmem:[%s2890 + $0x108] sm:$0x3] %vm241, 0.0
      %2903 = vst.msk [vmem:[%s2890 + $0x120] sm:$0x3] %vm241, 0.0
      %2904 = vst.msk [vmem:[%s2890 + $0x138] sm:$0x3] %vm241, 0.0
      %2905 = vst.msk [vmem:[%s2890 + $0x150] sm:$0x3] %vm241, 0.0
      %2906 = vst.msk [vmem:[%s2890 + $0x168] sm:$0x3] %vm241, 0.0
      %2907 = vst.msk [vmem:[%s2890 + $0x12] sm:$0x3] %vm241, 0.0
      %2908 = vst.msk [vmem:[%s2890 + $0x2a] sm:$0x3] %vm241, 0.0
      %2909 = vst.msk [vmem:[%s2890 + $0x42] sm:$0x3] %vm241, 0.0
      %2910 = vst.msk [vmem:[%s2890 + $0x5a] sm:$0x3] %vm241, 0.0
      %2911 = vst.msk [vmem:[%s2890 + $0x72] sm:$0x3] %vm241, 0.0
      %2912 = vst.msk [vmem:[%s2890 + $0x8a] sm:$0x3] %vm241, 0.0
      %2913 = vst.msk [vmem:[%s2890 + $0xa2] sm:$0x3] %vm241, 0.0
      %2914 = vst.msk [vmem:[%s2890 + $0xba] sm:$0x3] %vm241, 0.0
      %2915 = vst.msk [vmem:[%s2890 + $0xd2] sm:$0x3] %vm241, 0.0
      %2916 = vst.msk [vmem:[%s2890 + $0xea] sm:$0x3] %vm241, 0.0
      %2917 = vst.msk [vmem:[%s2890 + $0x102] sm:$0x3] %vm241, 0.0
      %2918 = vst.msk [vmem:[%s2890 + $0x11a] sm:$0x3] %vm241, 0.0
      %2919 = vst.msk [vmem:[%s2890 + $0x132] sm:$0x3] %vm241, 0.0
      %2920 = vst.msk [vmem:[%s2890 + $0x14a] sm:$0x3] %vm241, 0.0
      %2921 = vst.msk [vmem:[%s2890 + $0x162] sm:$0x3] %vm241, 0.0
      %2922 = vst.msk [vmem:[%s2890 + $0x17a] sm:$0x3] %vm241, 0.0
      %2923 = vst.msk [vmem:[%s2890 + $0x2] sm:$0xff] %vm225, %v2845
      %2924 = vst.msk [vmem:[%s2890 + $0xa] sm:$0xff] %vm225, %v2846
      %2925 = vst.msk [vmem:[%s2890 + $0x1a] sm:$0xff] %vm225, %v2847
      %2926 = vst.msk [vmem:[%s2890 + $0x22] sm:$0xff] %vm225, %v2848
      %2927 = vst.msk [vmem:[%s2890 + $0x32] sm:$0xff] %vm225, %v2849
      %2928 = vst.msk [vmem:[%s2890 + $0x3a] sm:$0xff] %vm225, %v2850
      %2929 = vst.msk [vmem:[%s2890 + $0x4a] sm:$0xff] %vm225, %v2851
      %2930 = vst.msk [vmem:[%s2890 + $0x52] sm:$0xff] %vm225, %v2852
      %2931 = vst.msk [vmem:[%s2890 + $0x62] sm:$0xff] %vm225, %v2853
      %2932 = vst.msk [vmem:[%s2890 + $0x6a] sm:$0xff] %vm225, %v2854
      %2933 = vst.msk [vmem:[%s2890 + $0x7a] sm:$0xff] %vm225, %v2855
      %2934 = vst.msk [vmem:[%s2890 + $0x82] sm:$0xff] %vm225, %v2856
      %2935 = vst.msk [vmem:[%s2890 + $0x92] sm:$0xff] %vm225, %v2857
      %2936 = vst.msk [vmem:[%s2890 + $0x9a] sm:$0xff] %vm225, %v2858
      %2937 = vst.msk [vmem:[%s2890 + $0xaa] sm:$0xff] %vm225, %v2859
      %2938 = vst.msk [vmem:[%s2890 + $0xb2] sm:$0xff] %vm225, %v2860
      %2939 = vst.msk [vmem:[%s2890 + $0xc2] sm:$0xff] %vm225, %v2861
      %2940 = vst.msk [vmem:[%s2890 + $0xca] sm:$0xff] %vm225, %v2862
      %2941 = vst.msk [vmem:[%s2890 + $0xda] sm:$0xff] %vm225, %v2863
      %2942 = vst.msk [vmem:[%s2890 + $0xe2] sm:$0xff] %vm225, %v2864
      %2943 = vst.msk [vmem:[%s2890 + $0xf2] sm:$0xff] %vm225, %v2865
      %2944 = vst.msk [vmem:[%s2890 + $0xfa] sm:$0xff] %vm225, %v2866
      %2945 = vst.msk [vmem:[%s2890 + $0x10a] sm:$0xff] %vm225, %v2867
      %2946 = vst.msk [vmem:[%s2890 + $0x112] sm:$0xff] %vm225, %v2868
      %2947 = vst.msk [vmem:[%s2890 + $0x122] sm:$0xff] %vm225, %v2869
      %2948 = vst.msk [vmem:[%s2890 + $0x12a] sm:$0xff] %vm225, %v2870
      %2949 = vst.msk [vmem:[%s2890 + $0x13a] sm:$0xff] %vm225, %v2871
      %2950 = vst.msk [vmem:[%s2890 + $0x142] sm:$0xff] %vm225, %v2872
      %2951 = vst.msk [vmem:[%s2890 + $0x152] sm:$0xff] %vm225, %v2873
      %2952 = vst.msk [vmem:[%s2890 + $0x15a] sm:$0xff] %vm225, %v2874
      %2953 = vst.msk [vmem:[%s2890 + $0x16a] sm:$0xff] %vm225, %v2875
      %2954 = vst.msk [vmem:[%s2890 + $0x172] sm:$0xff] %vm225, %v2876
      %v2955 = vld [vmem:[%s4] sm:$0x1]
      %v2957 = vperm.slane %v2955, 0
      %v2959 = vld [vmem:[#allocation3] sm:$0xff]
      %v2960 = vld [vmem:[#allocation3 + $0x8] sm:$0xff]
      %v2961 = vld [vmem:[#allocation3 + $0x18] sm:$0xff]
      %v2962 = vld [vmem:[#allocation3 + $0x20] sm:$0xff]
      %v2963 = vld [vmem:[#allocation3 + $0x30] sm:$0xff]
      %v2964 = vld [vmem:[#allocation3 + $0x38] sm:$0xff]
      %v2965 = vld [vmem:[#allocation3 + $0x48] sm:$0xff]
      %v2966 = vld [vmem:[#allocation3 + $0x50] sm:$0xff]
      %v2967 = vld [vmem:[#allocation3 + $0x60] sm:$0xff]
      %v2968 = vld [vmem:[#allocation3 + $0x68] sm:$0xff]
      %v2969 = vld [vmem:[#allocation3 + $0x78] sm:$0xff]
      %v2970 = vld [vmem:[#allocation3 + $0x80] sm:$0xff]
      %v2971 = vld [vmem:[#allocation3 + $0x90] sm:$0xff]
      %v2972 = vld [vmem:[#allocation3 + $0x98] sm:$0xff]
      %v2973 = vld [vmem:[#allocation3 + $0xa8] sm:$0xff]
      %v2974 = vld [vmem:[#allocation3 + $0xb0] sm:$0xff]
      %v2975 = vld [vmem:[#allocation3 + $0xc0] sm:$0xff]
      %v2976 = vld [vmem:[#allocation3 + $0xc8] sm:$0xff]
      %v2977 = vld [vmem:[#allocation3 + $0xd8] sm:$0xff]
      %v2978 = vld [vmem:[#allocation3 + $0xe0] sm:$0xff]
      %v2979 = vld [vmem:[#allocation3 + $0xf0] sm:$0xff]
      %v2980 = vld [vmem:[#allocation3 + $0xf8] sm:$0xff]
      %v2981 = vld [vmem:[#allocation3 + $0x108] sm:$0xff]
      %v2982 = vld [vmem:[#allocation3 + $0x110] sm:$0xff]
      %v2983 = vld [vmem:[#allocation3 + $0x120] sm:$0xff]
      %v2984 = vld [vmem:[#allocation3 + $0x128] sm:$0xff]
      %v2985 = vld [vmem:[#allocation3 + $0x138] sm:$0xff]
      %v2986 = vld [vmem:[#allocation3 + $0x140] sm:$0xff]
      %v2987 = vld [vmem:[#allocation3 + $0x150] sm:$0xff]
      %v2988 = vld [vmem:[#allocation3 + $0x158] sm:$0xff]
      %v2989 = vld [vmem:[#allocation3 + $0x168] sm:$0xff]
      %v2990 = vld [vmem:[#allocation3 + $0x170] sm:$0xff]
      %v2991 = vld [vmem:[%s3] sm:$0xf]
      %v2993 = vsel %vm225, %v2959, 0
      %v2996 = vsel %vm225, %v2960, 0
      %v2999 = vsel %vm225, %v2961, 0
      %v3002 = vsel %vm225, %v2962, 0
      %v3005 = vsel %vm225, %v2963, 0
      %v3008 = vsel %vm225, %v2964, 0
      %v3011 = vsel %vm225, %v2965, 0
      %v3014 = vsel %vm225, %v2966, 0
      %v3017 = vsel %vm225, %v2967, 0
      %v3020 = vsel %vm225, %v2968, 0
      %v3023 = vsel %vm225, %v2969, 0
      %v3026 = vsel %vm225, %v2970, 0
      %v3029 = vsel %vm225, %v2971, 0
      %v3032 = vsel %vm225, %v2972, 0
      %v3035 = vsel %vm225, %v2973, 0
      %v3038 = vsel %vm225, %v2974, 0
      %v3041 = vsel %vm225, %v2975, 0
      %v3044 = vsel %vm225, %v2976, 0
      %v3047 = vsel %vm225, %v2977, 0
      %v3050 = vsel %vm225, %v2978, 0
      %v3053 = vsel %vm225, %v2979, 0
      %v3056 = vsel %vm225, %v2980, 0
      %v3059 = vsel %vm225, %v2981, 0
      %v3062 = vsel %vm225, %v2982, 0
      %v3065 = vsel %vm225, %v2983, 0
      %v3068 = vsel %vm225, %v2984, 0
      %v3071 = vsel %vm225, %v2985, 0
      %v3074 = vsel %vm225, %v2986, 0
      %v3077 = vsel %vm225, %v2987, 0
      %v3080 = vsel %vm225, %v2988, 0
      %v3083 = vsel %vm225, %v2989, 0
      %v3086 = vsel %vm225, %v2990, 0
      %v3089 = vsel %vm471, %v2991, 0
      %3091 = vmatpush.msra.mxu0 0.0
      %3092 = vmatpush.msra.mxu0 0.0
      %3093 = vmatpush.msra.mxu0 0.0
      %3094 = vmatpush.msra.mxu0 0.0
      %3095 = vmatpush.msra.mxu0 0.0
      %3096 = vmatpush.msra.mxu0 0.0
      %3097 = vmatpush.msra.mxu0 0.0
      %3098 = vmatpush.msra.mxu0 0.0
      %3099 = vmatpush.msra.mxu0 0.0
      %3100 = vmatpush.msra.mxu0 0.0
      %3101 = vmatpush.msra.mxu0 0.0
      %3102 = vmatpush.msra.mxu0 0.0
      %3103 = vmatpush.msra.mxu0 0.0
      %3104 = vmatpush.msra.mxu0 0.0
      %3105 = vmatpush.msra.mxu0 0.0
      %3106 = vmatpush.msra.mxu0 %v3089
      %3107 = vmatmul.f32.gmra.mxu0 %v2993
      %v3108 = vpop.f32.mrf.mxu0
      %v3109 = vadd.f32 0.0, %v3108
      %3110 = vmatmul.f32.gmra.mxu0 %v2996
      %v3111 = vpop.f32.mrf.mxu0
      %v3112 = vadd.f32 0.0, %v3111
      %3113 = vmatmul.f32.gmra.mxu0 %v2999
      %v3114 = vpop.f32.mrf.mxu0
      %v3115 = vadd.f32 0.0, %v3114
      %3116 = vmatmul.f32.gmra.mxu0 %v3002
      %v3117 = vpop.f32.mrf.mxu0
      %v3118 = vadd.f32 0.0, %v3117
      %3119 = vmatmul.f32.gmra.mxu0 %v3005
      %v3120 = vpop.f32.mrf.mxu0
      %v3121 = vadd.f32 0.0, %v3120
      %3122 = vmatmul.f32.gmra.mxu0 %v3008
      %v3123 = vpop.f32.mrf.mxu0
      %v3124 = vadd.f32 0.0, %v3123
      %3125 = vmatmul.f32.gmra.mxu0 %v3011
      %v3126 = vpop.f32.mrf.mxu0
      %v3127 = vadd.f32 0.0, %v3126
      %3128 = vmatmul.f32.gmra.mxu0 %v3014
      %v3129 = vpop.f32.mrf.mxu0
      %v3130 = vadd.f32 0.0, %v3129
      %3131 = vmatmul.f32.gmra.mxu0 %v3017
      %v3132 = vpop.f32.mrf.mxu0
      %v3133 = vadd.f32 0.0, %v3132
      %3134 = vmatmul.f32.gmra.mxu0 %v3020
      %v3135 = vpop.f32.mrf.mxu0
      %v3136 = vadd.f32 0.0, %v3135
      %3137 = vmatmul.f32.gmra.mxu0 %v3023
      %v3138 = vpop.f32.mrf.mxu0
      %v3139 = vadd.f32 0.0, %v3138
      %3140 = vmatmul.f32.gmra.mxu0 %v3026
      %v3141 = vpop.f32.mrf.mxu0
      %v3142 = vadd.f32 0.0, %v3141
      %3143 = vmatmul.f32.gmra.mxu0 %v3029
      %v3144 = vpop.f32.mrf.mxu0
      %v3145 = vadd.f32 0.0, %v3144
      %3146 = vmatmul.f32.gmra.mxu0 %v3032
      %v3147 = vpop.f32.mrf.mxu0
      %v3148 = vadd.f32 0.0, %v3147
      %3149 = vmatmul.f32.gmra.mxu0 %v3035
      %v3150 = vpop.f32.mrf.mxu0
      %v3151 = vadd.f32 0.0, %v3150
      %3152 = vmatmul.f32.gmra.mxu0 %v3038
      %v3153 = vpop.f32.mrf.mxu0
      %v3154 = vadd.f32 0.0, %v3153
      %3155 = vmatmul.f32.gmra.mxu0 %v3041
      %v3156 = vpop.f32.mrf.mxu0
      %v3157 = vadd.f32 0.0, %v3156
      %3158 = vmatmul.f32.gmra.mxu0 %v3044
      %v3159 = vpop.f32.mrf.mxu0
      %v3160 = vadd.f32 0.0, %v3159
      %3161 = vmatmul.f32.gmra.mxu0 %v3047
      %v3162 = vpop.f32.mrf.mxu0
      %v3163 = vadd.f32 0.0, %v3162
      %3164 = vmatmul.f32.gmra.mxu0 %v3050
      %v3165 = vpop.f32.mrf.mxu0
      %v3166 = vadd.f32 0.0, %v3165
      %3167 = vmatmul.f32.gmra.mxu0 %v3053
      %v3168 = vpop.f32.mrf.mxu0
      %v3169 = vadd.f32 0.0, %v3168
      %3170 = vmatmul.f32.gmra.mxu0 %v3056
      %v3171 = vpop.f32.mrf.mxu0
      %v3172 = vadd.f32 0.0, %v3171
      %3173 = vmatmul.f32.gmra.mxu0 %v3059
      %v3174 = vpop.f32.mrf.mxu0
      %v3175 = vadd.f32 0.0, %v3174
      %3176 = vmatmul.f32.gmra.mxu0 %v3062
      %v3177 = vpop.f32.mrf.mxu0
      %v3178 = vadd.f32 0.0, %v3177
      %3179 = vmatmul.f32.gmra.mxu0 %v3065
      %v3180 = vpop.f32.mrf.mxu0
      %v3181 = vadd.f32 0.0, %v3180
      %3182 = vmatmul.f32.gmra.mxu0 %v3068
      %v3183 = vpop.f32.mrf.mxu0
      %v3184 = vadd.f32 0.0, %v3183
      %3185 = vmatmul.f32.gmra.mxu0 %v3071
      %v3186 = vpop.f32.mrf.mxu0
      %v3187 = vadd.f32 0.0, %v3186
      %3188 = vmatmul.f32.gmra.mxu0 %v3074
      %v3189 = vpop.f32.mrf.mxu0
      %v3190 = vadd.f32 0.0, %v3189
      %3191 = vmatmul.f32.gmra.mxu0 %v3077
      %v3192 = vpop.f32.mrf.mxu0
      %v3193 = vadd.f32 0.0, %v3192
      %3194 = vmatmul.f32.gmra.mxu0 %v3080
      %v3195 = vpop.f32.mrf.mxu0
      %v3196 = vadd.f32 0.0, %v3195
      %3197 = vmatmul.f32.gmra.mxu0 %v3083
      %v3198 = vpop.f32.mrf.mxu0
      %v3199 = vadd.f32 0.0, %v3198
      %3200 = vmatmul.f32.gmra.mxu0 %v3086
      %v3201 = vpop.f32.mrf.mxu0
      %v3202 = vadd.f32 0.0, %v3201
      %3203 = vdwg.mxu0
      %v3204 = vadd.f32 %v2957, %v3109
      %v3205 = vadd.f32 %v2957, %v3112
      %v3206 = vadd.f32 %v2957, %v3115
      %v3207 = vadd.f32 %v2957, %v3118
      %v3208 = vadd.f32 %v2957, %v3121
      %v3209 = vadd.f32 %v2957, %v3124
      %v3210 = vadd.f32 %v2957, %v3127
      %v3211 = vadd.f32 %v2957, %v3130
      %v3212 = vadd.f32 %v2957, %v3133
      %v3213 = vadd.f32 %v2957, %v3136
      %v3214 = vadd.f32 %v2957, %v3139
      %v3215 = vadd.f32 %v2957, %v3142
      %v3216 = vadd.f32 %v2957, %v3145
      %v3217 = vadd.f32 %v2957, %v3148
      %v3218 = vadd.f32 %v2957, %v3151
      %v3219 = vadd.f32 %v2957, %v3154
      %v3220 = vadd.f32 %v2957, %v3157
      %v3221 = vadd.f32 %v2957, %v3160
      %v3222 = vadd.f32 %v2957, %v3163
      %v3223 = vadd.f32 %v2957, %v3166
      %v3224 = vadd.f32 %v2957, %v3169
      %v3225 = vadd.f32 %v2957, %v3172
      %v3226 = vadd.f32 %v2957, %v3175
      %v3227 = vadd.f32 %v2957, %v3178
      %v3228 = vadd.f32 %v2957, %v3181
      %v3229 = vadd.f32 %v2957, %v3184
      %v3230 = vadd.f32 %v2957, %v3187
      %v3231 = vadd.f32 %v2957, %v3190
      %v3232 = vadd.f32 %v2957, %v3193
      %v3233 = vadd.f32 %v2957, %v3196
      %v3234 = vadd.f32 %v2957, %v3199
      %v3235 = vadd.f32 %v2957, %v3202
      %v3236 = vld [vmem:[#allocation3 + $0x2] sm:$0xff]
      %v3237 = vld [vmem:[#allocation3 + $0xa] sm:$0xff]
      %v3238 = vld [vmem:[#allocation3 + $0x1a] sm:$0xff]
      %v3239 = vld [vmem:[#allocation3 + $0x22] sm:$0xff]
      %v3240 = vld [vmem:[#allocation3 + $0x32] sm:$0xff]
      %v3241 = vld [vmem:[#allocation3 + $0x3a] sm:$0xff]
      %v3242 = vld [vmem:[#allocation3 + $0x4a] sm:$0xff]
      %v3243 = vld [vmem:[#allocation3 + $0x52] sm:$0xff]
      %v3244 = vld [vmem:[#allocation3 + $0x62] sm:$0xff]
      %v3245 = vld [vmem:[#allocation3 + $0x6a] sm:$0xff]
      %v3246 = vld [vmem:[#allocation3 + $0x7a] sm:$0xff]
      %v3247 = vld [vmem:[#allocation3 + $0x82] sm:$0xff]
      %v3248 = vld [vmem:[#allocation3 + $0x92] sm:$0xff]
      %v3249 = vld [vmem:[#allocation3 + $0x9a] sm:$0xff]
      %v3250 = vld [vmem:[#allocation3 + $0xaa] sm:$0xff]
      %v3251 = vld [vmem:[#allocation3 + $0xb2] sm:$0xff]
      %v3252 = vld [vmem:[#allocation3 + $0xc2] sm:$0xff]
      %v3253 = vld [vmem:[#allocation3 + $0xca] sm:$0xff]
      %v3254 = vld [vmem:[#allocation3 + $0xda] sm:$0xff]
      %v3255 = vld [vmem:[#allocation3 + $0xe2] sm:$0xff]
      %v3256 = vld [vmem:[#allocation3 + $0xf2] sm:$0xff]
      %v3257 = vld [vmem:[#allocation3 + $0xfa] sm:$0xff]
      %v3258 = vld [vmem:[#allocation3 + $0x10a] sm:$0xff]
      %v3259 = vld [vmem:[#allocation3 + $0x112] sm:$0xff]
      %v3260 = vld [vmem:[#allocation3 + $0x122] sm:$0xff]
      %v3261 = vld [vmem:[#allocation3 + $0x12a] sm:$0xff]
      %v3262 = vld [vmem:[#allocation3 + $0x13a] sm:$0xff]
      %v3263 = vld [vmem:[#allocation3 + $0x142] sm:$0xff]
      %v3264 = vld [vmem:[#allocation3 + $0x152] sm:$0xff]
      %v3265 = vld [vmem:[#allocation3 + $0x15a] sm:$0xff]
      %v3266 = vld [vmem:[#allocation3 + $0x16a] sm:$0xff]
      %v3267 = vld [vmem:[#allocation3 + $0x172] sm:$0xff]
      %s3268 = scalar_lea.vmem %s3, 4
      %v3269 = vld [vmem:[%s3268] sm:$0xf]
      %v3271 = vsel %vm225, %v3236, 0
      %v3274 = vsel %vm225, %v3237, 0
      %v3277 = vsel %vm225, %v3238, 0
      %v3280 = vsel %vm225, %v3239, 0
      %v3283 = vsel %vm225, %v3240, 0
      %v3286 = vsel %vm225, %v3241, 0
      %v3289 = vsel %vm225, %v3242, 0
      %v3292 = vsel %vm225, %v3243, 0
      %v3295 = vsel %vm225, %v3244, 0
      %v3298 = vsel %vm225, %v3245, 0
      %v3301 = vsel %vm225, %v3246, 0
      %v3304 = vsel %vm225, %v3247, 0
      %v3307 = vsel %vm225, %v3248, 0
      %v3310 = vsel %vm225, %v3249, 0
      %v3313 = vsel %vm225, %v3250, 0
      %v3316 = vsel %vm225, %v3251, 0
      %v3319 = vsel %vm225, %v3252, 0
      %v3322 = vsel %vm225, %v3253, 0
      %v3325 = vsel %vm225, %v3254, 0
      %v3328 = vsel %vm225, %v3255, 0
      %v3331 = vsel %vm225, %v3256, 0
      %v3334 = vsel %vm225, %v3257, 0
      %v3337 = vsel %vm225, %v3258, 0
      %v3340 = vsel %vm225, %v3259, 0
      %v3343 = vsel %vm225, %v3260, 0
      %v3346 = vsel %vm225, %v3261, 0
      %v3349 = vsel %vm225, %v3262, 0
      %v3352 = vsel %vm225, %v3263, 0
      %v3355 = vsel %vm225, %v3264, 0
      %v3358 = vsel %vm225, %v3265, 0
      %v3361 = vsel %vm225, %v3266, 0
      %v3364 = vsel %vm225, %v3267, 0
      %v3367 = vsel %vm471, %v3269, 0
      %3369 = vmatpush.msra.mxu0 0.0
      %3370 = vmatpush.msra.mxu0 0.0
      %3371 = vmatpush.msra.mxu0 0.0
      %3372 = vmatpush.msra.mxu0 0.0
      %3373 = vmatpush.msra.mxu0 0.0
      %3374 = vmatpush.msra.mxu0 0.0
      %3375 = vmatpush.msra.mxu0 0.0
      %3376 = vmatpush.msra.mxu0 0.0
      %3377 = vmatpush.msra.mxu0 0.0
      %3378 = vmatpush.msra.mxu0 0.0
      %3379 = vmatpush.msra.mxu0 0.0
      %3380 = vmatpush.msra.mxu0 0.0
      %3381 = vmatpush.msra.mxu0 0.0
      %3382 = vmatpush.msra.mxu0 0.0
      %3383 = vmatpush.msra.mxu0 0.0
      %3384 = vmatpush.msra.mxu0 %v3367
      %3385 = vmatmul.f32.gmra.mxu0 %v3271
      %v3386 = vpop.f32.mrf.mxu0
      %v3387 = vadd.f32 0.0, %v3386
      %3388 = vmatmul.f32.gmra.mxu0 %v3274
      %v3389 = vpop.f32.mrf.mxu0
      %v3390 = vadd.f32 0.0, %v3389
      %3391 = vmatmul.f32.gmra.mxu0 %v3277
      %v3392 = vpop.f32.mrf.mxu0
      %v3393 = vadd.f32 0.0, %v3392
      %3394 = vmatmul.f32.gmra.mxu0 %v3280
      %v3395 = vpop.f32.mrf.mxu0
      %v3396 = vadd.f32 0.0, %v3395
      %3397 = vmatmul.f32.gmra.mxu0 %v3283
      %v3398 = vpop.f32.mrf.mxu0
      %v3399 = vadd.f32 0.0, %v3398
      %3400 = vmatmul.f32.gmra.mxu0 %v3286
      %v3401 = vpop.f32.mrf.mxu0
      %v3402 = vadd.f32 0.0, %v3401
      %3403 = vmatmul.f32.gmra.mxu0 %v3289
      %v3404 = vpop.f32.mrf.mxu0
      %v3405 = vadd.f32 0.0, %v3404
      %3406 = vmatmul.f32.gmra.mxu0 %v3292
      %v3407 = vpop.f32.mrf.mxu0
      %v3408 = vadd.f32 0.0, %v3407
      %3409 = vmatmul.f32.gmra.mxu0 %v3295
      %v3410 = vpop.f32.mrf.mxu0
      %v3411 = vadd.f32 0.0, %v3410
      %3412 = vmatmul.f32.gmra.mxu0 %v3298
      %v3413 = vpop.f32.mrf.mxu0
      %v3414 = vadd.f32 0.0, %v3413
      %3415 = vmatmul.f32.gmra.mxu0 %v3301
      %v3416 = vpop.f32.mrf.mxu0
      %v3417 = vadd.f32 0.0, %v3416
      %3418 = vmatmul.f32.gmra.mxu0 %v3304
      %v3419 = vpop.f32.mrf.mxu0
      %v3420 = vadd.f32 0.0, %v3419
      %3421 = vmatmul.f32.gmra.mxu0 %v3307
      %v3422 = vpop.f32.mrf.mxu0
      %v3423 = vadd.f32 0.0, %v3422
      %3424 = vmatmul.f32.gmra.mxu0 %v3310
      %v3425 = vpop.f32.mrf.mxu0
      %v3426 = vadd.f32 0.0, %v3425
      %3427 = vmatmul.f32.gmra.mxu0 %v3313
      %v3428 = vpop.f32.mrf.mxu0
      %v3429 = vadd.f32 0.0, %v3428
      %3430 = vmatmul.f32.gmra.mxu0 %v3316
      %v3431 = vpop.f32.mrf.mxu0
      %v3432 = vadd.f32 0.0, %v3431
      %3433 = vmatmul.f32.gmra.mxu0 %v3319
      %v3434 = vpop.f32.mrf.mxu0
      %v3435 = vadd.f32 0.0, %v3434
      %3436 = vmatmul.f32.gmra.mxu0 %v3322
      %v3437 = vpop.f32.mrf.mxu0
      %v3438 = vadd.f32 0.0, %v3437
      %3439 = vmatmul.f32.gmra.mxu0 %v3325
      %v3440 = vpop.f32.mrf.mxu0
      %v3441 = vadd.f32 0.0, %v3440
      %3442 = vmatmul.f32.gmra.mxu0 %v3328
      %v3443 = vpop.f32.mrf.mxu0
      %v3444 = vadd.f32 0.0, %v3443
      %3445 = vmatmul.f32.gmra.mxu0 %v3331
      %v3446 = vpop.f32.mrf.mxu0
      %v3447 = vadd.f32 0.0, %v3446
      %3448 = vmatmul.f32.gmra.mxu0 %v3334
      %v3449 = vpop.f32.mrf.mxu0
      %v3450 = vadd.f32 0.0, %v3449
      %3451 = vmatmul.f32.gmra.mxu0 %v3337
      %v3452 = vpop.f32.mrf.mxu0
      %v3453 = vadd.f32 0.0, %v3452
      %3454 = vmatmul.f32.gmra.mxu0 %v3340
      %v3455 = vpop.f32.mrf.mxu0
      %v3456 = vadd.f32 0.0, %v3455
      %3457 = vmatmul.f32.gmra.mxu0 %v3343
      %v3458 = vpop.f32.mrf.mxu0
      %v3459 = vadd.f32 0.0, %v3458
      %3460 = vmatmul.f32.gmra.mxu0 %v3346
      %v3461 = vpop.f32.mrf.mxu0
      %v3462 = vadd.f32 0.0, %v3461
      %3463 = vmatmul.f32.gmra.mxu0 %v3349
      %v3464 = vpop.f32.mrf.mxu0
      %v3465 = vadd.f32 0.0, %v3464
      %3466 = vmatmul.f32.gmra.mxu0 %v3352
      %v3467 = vpop.f32.mrf.mxu0
      %v3468 = vadd.f32 0.0, %v3467
      %3469 = vmatmul.f32.gmra.mxu0 %v3355
      %v3470 = vpop.f32.mrf.mxu0
      %v3471 = vadd.f32 0.0, %v3470
      %3472 = vmatmul.f32.gmra.mxu0 %v3358
      %v3473 = vpop.f32.mrf.mxu0
      %v3474 = vadd.f32 0.0, %v3473
      %3475 = vmatmul.f32.gmra.mxu0 %v3361
      %v3476 = vpop.f32.mrf.mxu0
      %v3477 = vadd.f32 0.0, %v3476
      %3478 = vmatmul.f32.gmra.mxu0 %v3364
      %v3479 = vpop.f32.mrf.mxu0
      %v3480 = vadd.f32 0.0, %v3479
      %3481 = vdwg.mxu0
      %v3482 = vadd.f32 %v3204, %v3387
      %v3483 = vadd.f32 %v3205, %v3390
      %v3484 = vadd.f32 %v3206, %v3393
      %v3485 = vadd.f32 %v3207, %v3396
      %v3486 = vadd.f32 %v3208, %v3399
      %v3487 = vadd.f32 %v3209, %v3402
      %v3488 = vadd.f32 %v3210, %v3405
      %v3489 = vadd.f32 %v3211, %v3408
      %v3490 = vadd.f32 %v3212, %v3411
      %v3491 = vadd.f32 %v3213, %v3414
      %v3492 = vadd.f32 %v3214, %v3417
      %v3493 = vadd.f32 %v3215, %v3420
      %v3494 = vadd.f32 %v3216, %v3423
      %v3495 = vadd.f32 %v3217, %v3426
      %v3496 = vadd.f32 %v3218, %v3429
      %v3497 = vadd.f32 %v3219, %v3432
      %v3498 = vadd.f32 %v3220, %v3435
      %v3499 = vadd.f32 %v3221, %v3438
      %v3500 = vadd.f32 %v3222, %v3441
      %v3501 = vadd.f32 %v3223, %v3444
      %v3502 = vadd.f32 %v3224, %v3447
      %v3503 = vadd.f32 %v3225, %v3450
      %v3504 = vadd.f32 %v3226, %v3453
      %v3505 = vadd.f32 %v3227, %v3456
      %v3506 = vadd.f32 %v3228, %v3459
      %v3507 = vadd.f32 %v3229, %v3462
      %v3508 = vadd.f32 %v3230, %v3465
      %v3509 = vadd.f32 %v3231, %v3468
      %v3510 = vadd.f32 %v3232, %v3471
      %v3511 = vadd.f32 %v3233, %v3474
      %v3512 = vadd.f32 %v3234, %v3477
      %v3513 = vadd.f32 %v3235, %v3480
      %v3514 = vld [vmem:[#allocation3 + $0x4] sm:$0xff]
      %v3515 = vld [vmem:[#allocation3 + $0xc] sm:$0xff]
      %v3516 = vld [vmem:[#allocation3 + $0x1c] sm:$0xff]
      %v3517 = vld [vmem:[#allocation3 + $0x24] sm:$0xff]
      %v3518 = vld [vmem:[#allocation3 + $0x34] sm:$0xff]
      %v3519 = vld [vmem:[#allocation3 + $0x3c] sm:$0xff]
      %v3520 = vld [vmem:[#allocation3 + $0x4c] sm:$0xff]
      %v3521 = vld [vmem:[#allocation3 + $0x54] sm:$0xff]
      %v3522 = vld [vmem:[#allocation3 + $0x64] sm:$0xff]
      %v3523 = vld [vmem:[#allocation3 + $0x6c] sm:$0xff]
      %v3524 = vld [vmem:[#allocation3 + $0x7c] sm:$0xff]
      %v3525 = vld [vmem:[#allocation3 + $0x84] sm:$0xff]
      %v3526 = vld [vmem:[#allocation3 + $0x94] sm:$0xff]
      %v3527 = vld [vmem:[#allocation3 + $0x9c] sm:$0xff]
      %v3528 = vld [vmem:[#allocation3 + $0xac] sm:$0xff]
      %v3529 = vld [vmem:[#allocation3 + $0xb4] sm:$0xff]
      %v3530 = vld [vmem:[#allocation3 + $0xc4] sm:$0xff]
      %v3531 = vld [vmem:[#allocation3 + $0xcc] sm:$0xff]
      %v3532 = vld [vmem:[#allocation3 + $0xdc] sm:$0xff]
      %v3533 = vld [vmem:[#allocation3 + $0xe4] sm:$0xff]
      %v3534 = vld [vmem:[#allocation3 + $0xf4] sm:$0xff]
      %v3535 = vld [vmem:[#allocation3 + $0xfc] sm:$0xff]
      %v3536 = vld [vmem:[#allocation3 + $0x10c] sm:$0xff]
      %v3537 = vld [vmem:[#allocation3 + $0x114] sm:$0xff]
      %v3538 = vld [vmem:[#allocation3 + $0x124] sm:$0xff]
      %v3539 = vld [vmem:[#allocation3 + $0x12c] sm:$0xff]
      %v3540 = vld [vmem:[#allocation3 + $0x13c] sm:$0xff]
      %v3541 = vld [vmem:[#allocation3 + $0x144] sm:$0xff]
      %v3542 = vld [vmem:[#allocation3 + $0x154] sm:$0xff]
      %v3543 = vld [vmem:[#allocation3 + $0x15c] sm:$0xff]
      %v3544 = vld [vmem:[#allocation3 + $0x16c] sm:$0xff]
      %v3545 = vld [vmem:[#allocation3 + $0x174] sm:$0xff]
      %s3546 = scalar_lea.vmem %s3, 8
      %v3547 = vld [vmem:[%s3546] sm:$0xf]
      %v3549 = vsel %vm225, %v3514, 0
      %v3552 = vsel %vm225, %v3515, 0
      %v3555 = vsel %vm225, %v3516, 0
      %v3558 = vsel %vm225, %v3517, 0
      %v3561 = vsel %vm225, %v3518, 0
      %v3564 = vsel %vm225, %v3519, 0
      %v3567 = vsel %vm225, %v3520, 0
      %v3570 = vsel %vm225, %v3521, 0
      %v3573 = vsel %vm225, %v3522, 0
      %v3576 = vsel %vm225, %v3523, 0
      %v3579 = vsel %vm225, %v3524, 0
      %v3582 = vsel %vm225, %v3525, 0
      %v3585 = vsel %vm225, %v3526, 0
      %v3588 = vsel %vm225, %v3527, 0
      %v3591 = vsel %vm225, %v3528, 0
      %v3594 = vsel %vm225, %v3529, 0
      %v3597 = vsel %vm225, %v3530, 0
      %v3600 = vsel %vm225, %v3531, 0
      %v3603 = vsel %vm225, %v3532, 0
      %v3606 = vsel %vm225, %v3533, 0
      %v3609 = vsel %vm225, %v3534, 0
      %v3612 = vsel %vm225, %v3535, 0
      %v3615 = vsel %vm225, %v3536, 0
      %v3618 = vsel %vm225, %v3537, 0
      %v3621 = vsel %vm225, %v3538, 0
      %v3624 = vsel %vm225, %v3539, 0
      %v3627 = vsel %vm225, %v3540, 0
      %v3630 = vsel %vm225, %v3541, 0
      %v3633 = vsel %vm225, %v3542, 0
      %v3636 = vsel %vm225, %v3543, 0
      %v3639 = vsel %vm225, %v3544, 0
      %v3642 = vsel %vm225, %v3545, 0
      %v3645 = vsel %vm471, %v3547, 0
      %3647 = vmatpush.msra.mxu0 0.0
      %3648 = vmatpush.msra.mxu0 0.0
      %3649 = vmatpush.msra.mxu0 0.0
      %3650 = vmatpush.msra.mxu0 0.0
      %3651 = vmatpush.msra.mxu0 0.0
      %3652 = vmatpush.msra.mxu0 0.0
      %3653 = vmatpush.msra.mxu0 0.0
      %3654 = vmatpush.msra.mxu0 0.0
      %3655 = vmatpush.msra.mxu0 0.0
      %3656 = vmatpush.msra.mxu0 0.0
      %3657 = vmatpush.msra.mxu0 0.0
      %3658 = vmatpush.msra.mxu0 0.0
      %3659 = vmatpush.msra.mxu0 0.0
      %3660 = vmatpush.msra.mxu0 0.0
      %3661 = vmatpush.msra.mxu0 0.0
      %3662 = vmatpush.msra.mxu0 %v3645
      %3663 = vmatmul.f32.gmra.mxu0 %v3549
      %v3664 = vpop.f32.mrf.mxu0
      %v3665 = vadd.f32 0.0, %v3664
      %3666 = vmatmul.f32.gmra.mxu0 %v3552
      %v3667 = vpop.f32.mrf.mxu0
      %v3668 = vadd.f32 0.0, %v3667
      %3669 = vmatmul.f32.gmra.mxu0 %v3555
      %v3670 = vpop.f32.mrf.mxu0
      %v3671 = vadd.f32 0.0, %v3670
      %3672 = vmatmul.f32.gmra.mxu0 %v3558
      %v3673 = vpop.f32.mrf.mxu0
      %v3674 = vadd.f32 0.0, %v3673
      %3675 = vmatmul.f32.gmra.mxu0 %v3561
      %v3676 = vpop.f32.mrf.mxu0
      %v3677 = vadd.f32 0.0, %v3676
      %3678 = vmatmul.f32.gmra.mxu0 %v3564
      %v3679 = vpop.f32.mrf.mxu0
      %v3680 = vadd.f32 0.0, %v3679
      %3681 = vmatmul.f32.gmra.mxu0 %v3567
      %v3682 = vpop.f32.mrf.mxu0
      %v3683 = vadd.f32 0.0, %v3682
      %3684 = vmatmul.f32.gmra.mxu0 %v3570
      %v3685 = vpop.f32.mrf.mxu0
      %v3686 = vadd.f32 0.0, %v3685
      %3687 = vmatmul.f32.gmra.mxu0 %v3573
      %v3688 = vpop.f32.mrf.mxu0
      %v3689 = vadd.f32 0.0, %v3688
      %3690 = vmatmul.f32.gmra.mxu0 %v3576
      %v3691 = vpop.f32.mrf.mxu0
      %v3692 = vadd.f32 0.0, %v3691
      %3693 = vmatmul.f32.gmra.mxu0 %v3579
      %v3694 = vpop.f32.mrf.mxu0
      %v3695 = vadd.f32 0.0, %v3694
      %3696 = vmatmul.f32.gmra.mxu0 %v3582
      %v3697 = vpop.f32.mrf.mxu0
      %v3698 = vadd.f32 0.0, %v3697
      %3699 = vmatmul.f32.gmra.mxu0 %v3585
      %v3700 = vpop.f32.mrf.mxu0
      %v3701 = vadd.f32 0.0, %v3700
      %3702 = vmatmul.f32.gmra.mxu0 %v3588
      %v3703 = vpop.f32.mrf.mxu0
      %v3704 = vadd.f32 0.0, %v3703
      %3705 = vmatmul.f32.gmra.mxu0 %v3591
      %v3706 = vpop.f32.mrf.mxu0
      %v3707 = vadd.f32 0.0, %v3706
      %3708 = vmatmul.f32.gmra.mxu0 %v3594
      %v3709 = vpop.f32.mrf.mxu0
      %v3710 = vadd.f32 0.0, %v3709
      %3711 = vmatmul.f32.gmra.mxu0 %v3597
      %v3712 = vpop.f32.mrf.mxu0
      %v3713 = vadd.f32 0.0, %v3712
      %3714 = vmatmul.f32.gmra.mxu0 %v3600
      %v3715 = vpop.f32.mrf.mxu0
      %v3716 = vadd.f32 0.0, %v3715
      %3717 = vmatmul.f32.gmra.mxu0 %v3603
      %v3718 = vpop.f32.mrf.mxu0
      %v3719 = vadd.f32 0.0, %v3718
      %3720 = vmatmul.f32.gmra.mxu0 %v3606
      %v3721 = vpop.f32.mrf.mxu0
      %v3722 = vadd.f32 0.0, %v3721
      %3723 = vmatmul.f32.gmra.mxu0 %v3609
      %v3724 = vpop.f32.mrf.mxu0
      %v3725 = vadd.f32 0.0, %v3724
      %3726 = vmatmul.f32.gmra.mxu0 %v3612
      %v3727 = vpop.f32.mrf.mxu0
      %v3728 = vadd.f32 0.0, %v3727
      %3729 = vmatmul.f32.gmra.mxu0 %v3615
      %v3730 = vpop.f32.mrf.mxu0
      %v3731 = vadd.f32 0.0, %v3730
      %3732 = vmatmul.f32.gmra.mxu0 %v3618
      %v3733 = vpop.f32.mrf.mxu0
      %v3734 = vadd.f32 0.0, %v3733
      %3735 = vmatmul.f32.gmra.mxu0 %v3621
      %v3736 = vpop.f32.mrf.mxu0
      %v3737 = vadd.f32 0.0, %v3736
      %3738 = vmatmul.f32.gmra.mxu0 %v3624
      %v3739 = vpop.f32.mrf.mxu0
      %v3740 = vadd.f32 0.0, %v3739
      %3741 = vmatmul.f32.gmra.mxu0 %v3627
      %v3742 = vpop.f32.mrf.mxu0
      %v3743 = vadd.f32 0.0, %v3742
      %3744 = vmatmul.f32.gmra.mxu0 %v3630
      %v3745 = vpop.f32.mrf.mxu0
      %v3746 = vadd.f32 0.0, %v3745
      %3747 = vmatmul.f32.gmra.mxu0 %v3633
      %v3748 = vpop.f32.mrf.mxu0
      %v3749 = vadd.f32 0.0, %v3748
      %3750 = vmatmul.f32.gmra.mxu0 %v3636
      %v3751 = vpop.f32.mrf.mxu0
      %v3752 = vadd.f32 0.0, %v3751
      %3753 = vmatmul.f32.gmra.mxu0 %v3639
      %v3754 = vpop.f32.mrf.mxu0
      %v3755 = vadd.f32 0.0, %v3754
      %3756 = vmatmul.f32.gmra.mxu0 %v3642
      %v3757 = vpop.f32.mrf.mxu0
      %v3758 = vadd.f32 0.0, %v3757
      %3759 = vdwg.mxu0
      %v3760 = vadd.f32 %v3482, %v3665
      %v3761 = vadd.f32 %v3483, %v3668
      %v3762 = vadd.f32 %v3484, %v3671
      %v3763 = vadd.f32 %v3485, %v3674
      %v3764 = vadd.f32 %v3486, %v3677
      %v3765 = vadd.f32 %v3487, %v3680
      %v3766 = vadd.f32 %v3488, %v3683
      %v3767 = vadd.f32 %v3489, %v3686
      %v3768 = vadd.f32 %v3490, %v3689
      %v3769 = vadd.f32 %v3491, %v3692
      %v3770 = vadd.f32 %v3492, %v3695
      %v3771 = vadd.f32 %v3493, %v3698
      %v3772 = vadd.f32 %v3494, %v3701
      %v3773 = vadd.f32 %v3495, %v3704
      %v3774 = vadd.f32 %v3496, %v3707
      %v3775 = vadd.f32 %v3497, %v3710
      %v3776 = vadd.f32 %v3498, %v3713
      %v3777 = vadd.f32 %v3499, %v3716
      %v3778 = vadd.f32 %v3500, %v3719
      %v3779 = vadd.f32 %v3501, %v3722
      %v3780 = vadd.f32 %v3502, %v3725
      %v3781 = vadd.f32 %v3503, %v3728
      %v3782 = vadd.f32 %v3504, %v3731
      %v3783 = vadd.f32 %v3505, %v3734
      %v3784 = vadd.f32 %v3506, %v3737
      %v3785 = vadd.f32 %v3507, %v3740
      %v3786 = vadd.f32 %v3508, %v3743
      %v3787 = vadd.f32 %v3509, %v3746
      %v3788 = vadd.f32 %v3510, %v3749
      %v3789 = vadd.f32 %v3511, %v3752
      %v3790 = vadd.f32 %v3512, %v3755
      %v3791 = vadd.f32 %v3513, %v3758
      %v3792 = vld [vmem:[%s2890] sm:$0xff]
      %v3793 = vld [vmem:[%s2890 + $0x8] sm:$0xff]
      %v3794 = vld [vmem:[%s2890 + $0x18] sm:$0xff]
      %v3795 = vld [vmem:[%s2890 + $0x20] sm:$0xff]
      %v3796 = vld [vmem:[%s2890 + $0x30] sm:$0xff]
      %v3797 = vld [vmem:[%s2890 + $0x38] sm:$0xff]
      %v3798 = vld [vmem:[%s2890 + $0x48] sm:$0xff]
      %v3799 = vld [vmem:[%s2890 + $0x50] sm:$0xff]
      %v3800 = vld [vmem:[%s2890 + $0x60] sm:$0xff]
      %v3801 = vld [vmem:[%s2890 + $0x68] sm:$0xff]
      %v3802 = vld [vmem:[%s2890 + $0x78] sm:$0xff]
      %v3803 = vld [vmem:[%s2890 + $0x80] sm:$0xff]
      %v3804 = vld [vmem:[%s2890 + $0x90] sm:$0xff]
      %v3805 = vld [vmem:[%s2890 + $0x98] sm:$0xff]
      %v3806 = vld [vmem:[%s2890 + $0xa8] sm:$0xff]
      %v3807 = vld [vmem:[%s2890 + $0xb0] sm:$0xff]
      %v3808 = vld [vmem:[%s2890 + $0xc0] sm:$0xff]
      %v3809 = vld [vmem:[%s2890 + $0xc8] sm:$0xff]
      %v3810 = vld [vmem:[%s2890 + $0xd8] sm:$0xff]
      %v3811 = vld [vmem:[%s2890 + $0xe0] sm:$0xff]
      %v3812 = vld [vmem:[%s2890 + $0xf0] sm:$0xff]
      %v3813 = vld [vmem:[%s2890 + $0xf8] sm:$0xff]
      %v3814 = vld [vmem:[%s2890 + $0x108] sm:$0xff]
      %v3815 = vld [vmem:[%s2890 + $0x110] sm:$0xff]
      %v3816 = vld [vmem:[%s2890 + $0x120] sm:$0xff]
      %v3817 = vld [vmem:[%s2890 + $0x128] sm:$0xff]
      %v3818 = vld [vmem:[%s2890 + $0x138] sm:$0xff]
      %v3819 = vld [vmem:[%s2890 + $0x140] sm:$0xff]
      %v3820 = vld [vmem:[%s2890 + $0x150] sm:$0xff]
      %v3821 = vld [vmem:[%s2890 + $0x158] sm:$0xff]
      %v3822 = vld [vmem:[%s2890 + $0x168] sm:$0xff]
      %v3823 = vld [vmem:[%s2890 + $0x170] sm:$0xff]
      %s3824 = scalar_lea.vmem %s3, 12
      %v3825 = vld [vmem:[%s3824] sm:$0xf]
      %v3827 = vsel %vm225, %v3792, 0
      %v3830 = vsel %vm225, %v3793, 0
      %v3833 = vsel %vm225, %v3794, 0
      %v3836 = vsel %vm225, %v3795, 0
      %v3839 = vsel %vm225, %v3796, 0
      %v3842 = vsel %vm225, %v3797, 0
      %v3845 = vsel %vm225, %v3798, 0
      %v3848 = vsel %vm225, %v3799, 0
      %v3851 = vsel %vm225, %v3800, 0
      %v3854 = vsel %vm225, %v3801, 0
      %v3857 = vsel %vm225, %v3802, 0
      %v3860 = vsel %vm225, %v3803, 0
      %v3863 = vsel %vm225, %v3804, 0
      %v3866 = vsel %vm225, %v3805, 0
      %v3869 = vsel %vm225, %v3806, 0
      %v3872 = vsel %vm225, %v3807, 0
      %v3875 = vsel %vm225, %v3808, 0
      %v3878 = vsel %vm225, %v3809, 0
      %v3881 = vsel %vm225, %v3810, 0
      %v3884 = vsel %vm225, %v3811, 0
      %v3887 = vsel %vm225, %v3812, 0
      %v3890 = vsel %vm225, %v3813, 0
      %v3893 = vsel %vm225, %v3814, 0
      %v3896 = vsel %vm225, %v3815, 0
      %v3899 = vsel %vm225, %v3816, 0
      %v3902 = vsel %vm225, %v3817, 0
      %v3905 = vsel %vm225, %v3818, 0
      %v3908 = vsel %vm225, %v3819, 0
      %v3911 = vsel %vm225, %v3820, 0
      %v3914 = vsel %vm225, %v3821, 0
      %v3917 = vsel %vm225, %v3822, 0
      %v3920 = vsel %vm225, %v3823, 0
      %v3923 = vsel %vm471, %v3825, 0
      %3925 = vmatpush.msra.mxu0 0.0
      %3926 = vmatpush.msra.mxu0 0.0
      %3927 = vmatpush.msra.mxu0 0.0
      %3928 = vmatpush.msra.mxu0 0.0
      %3929 = vmatpush.msra.mxu0 0.0
      %3930 = vmatpush.msra.mxu0 0.0
      %3931 = vmatpush.msra.mxu0 0.0
      %3932 = vmatpush.msra.mxu0 0.0
      %3933 = vmatpush.msra.mxu0 0.0
      %3934 = vmatpush.msra.mxu0 0.0
      %3935 = vmatpush.msra.mxu0 0.0
      %3936 = vmatpush.msra.mxu0 0.0
      %3937 = vmatpush.msra.mxu0 0.0
      %3938 = vmatpush.msra.mxu0 0.0
      %3939 = vmatpush.msra.mxu0 0.0
      %3940 = vmatpush.msra.mxu0 %v3923
      %3941 = vmatmul.f32.gmra.mxu0 %v3827
      %v3942 = vpop.f32.mrf.mxu0
      %v3943 = vadd.f32 0.0, %v3942
      %3944 = vmatmul.f32.gmra.mxu0 %v3830
      %v3945 = vpop.f32.mrf.mxu0
      %v3946 = vadd.f32 0.0, %v3945
      %3947 = vmatmul.f32.gmra.mxu0 %v3833
      %v3948 = vpop.f32.mrf.mxu0
      %v3949 = vadd.f32 0.0, %v3948
      %3950 = vmatmul.f32.gmra.mxu0 %v3836
      %v3951 = vpop.f32.mrf.mxu0
      %v3952 = vadd.f32 0.0, %v3951
      %3953 = vmatmul.f32.gmra.mxu0 %v3839
      %v3954 = vpop.f32.mrf.mxu0
      %v3955 = vadd.f32 0.0, %v3954
      %3956 = vmatmul.f32.gmra.mxu0 %v3842
      %v3957 = vpop.f32.mrf.mxu0
      %v3958 = vadd.f32 0.0, %v3957
      %3959 = vmatmul.f32.gmra.mxu0 %v3845
      %v3960 = vpop.f32.mrf.mxu0
      %v3961 = vadd.f32 0.0, %v3960
      %3962 = vmatmul.f32.gmra.mxu0 %v3848
      %v3963 = vpop.f32.mrf.mxu0
      %v3964 = vadd.f32 0.0, %v3963
      %3965 = vmatmul.f32.gmra.mxu0 %v3851
      %v3966 = vpop.f32.mrf.mxu0
      %v3967 = vadd.f32 0.0, %v3966
      %3968 = vmatmul.f32.gmra.mxu0 %v3854
      %v3969 = vpop.f32.mrf.mxu0
      %v3970 = vadd.f32 0.0, %v3969
      %3971 = vmatmul.f32.gmra.mxu0 %v3857
      %v3972 = vpop.f32.mrf.mxu0
      %v3973 = vadd.f32 0.0, %v3972
      %3974 = vmatmul.f32.gmra.mxu0 %v3860
      %v3975 = vpop.f32.mrf.mxu0
      %v3976 = vadd.f32 0.0, %v3975
      %3977 = vmatmul.f32.gmra.mxu0 %v3863
      %v3978 = vpop.f32.mrf.mxu0
      %v3979 = vadd.f32 0.0, %v3978
      %3980 = vmatmul.f32.gmra.mxu0 %v3866
      %v3981 = vpop.f32.mrf.mxu0
      %v3982 = vadd.f32 0.0, %v3981
      %3983 = vmatmul.f32.gmra.mxu0 %v3869
      %v3984 = vpop.f32.mrf.mxu0
      %v3985 = vadd.f32 0.0, %v3984
      %3986 = vmatmul.f32.gmra.mxu0 %v3872
      %v3987 = vpop.f32.mrf.mxu0
      %v3988 = vadd.f32 0.0, %v3987
      %3989 = vmatmul.f32.gmra.mxu0 %v3875
      %v3990 = vpop.f32.mrf.mxu0
      %v3991 = vadd.f32 0.0, %v3990
      %3992 = vmatmul.f32.gmra.mxu0 %v3878
      %v3993 = vpop.f32.mrf.mxu0
      %v3994 = vadd.f32 0.0, %v3993
      %3995 = vmatmul.f32.gmra.mxu0 %v3881
      %v3996 = vpop.f32.mrf.mxu0
      %v3997 = vadd.f32 0.0, %v3996
      %3998 = vmatmul.f32.gmra.mxu0 %v3884
      %v3999 = vpop.f32.mrf.mxu0
      %v4000 = vadd.f32 0.0, %v3999
      %4001 = vmatmul.f32.gmra.mxu0 %v3887
      %v4002 = vpop.f32.mrf.mxu0
      %v4003 = vadd.f32 0.0, %v4002
      %4004 = vmatmul.f32.gmra.mxu0 %v3890
      %v4005 = vpop.f32.mrf.mxu0
      %v4006 = vadd.f32 0.0, %v4005
      %4007 = vmatmul.f32.gmra.mxu0 %v3893
      %v4008 = vpop.f32.mrf.mxu0
      %v4009 = vadd.f32 0.0, %v4008
      %4010 = vmatmul.f32.gmra.mxu0 %v3896
      %v4011 = vpop.f32.mrf.mxu0
      %v4012 = vadd.f32 0.0, %v4011
      %4013 = vmatmul.f32.gmra.mxu0 %v3899
      %v4014 = vpop.f32.mrf.mxu0
      %v4015 = vadd.f32 0.0, %v4014
      %4016 = vmatmul.f32.gmra.mxu0 %v3902
      %v4017 = vpop.f32.mrf.mxu0
      %v4018 = vadd.f32 0.0, %v4017
      %4019 = vmatmul.f32.gmra.mxu0 %v3905
      %v4020 = vpop.f32.mrf.mxu0
      %v4021 = vadd.f32 0.0, %v4020
      %4022 = vmatmul.f32.gmra.mxu0 %v3908
      %v4023 = vpop.f32.mrf.mxu0
      %v4024 = vadd.f32 0.0, %v4023
      %4025 = vmatmul.f32.gmra.mxu0 %v3911
      %v4026 = vpop.f32.mrf.mxu0
      %v4027 = vadd.f32 0.0, %v4026
      %4028 = vmatmul.f32.gmra.mxu0 %v3914
      %v4029 = vpop.f32.mrf.mxu0
      %v4030 = vadd.f32 0.0, %v4029
      %4031 = vmatmul.f32.gmra.mxu0 %v3917
      %v4032 = vpop.f32.mrf.mxu0
      %v4033 = vadd.f32 0.0, %v4032
      %4034 = vmatmul.f32.gmra.mxu0 %v3920
      %v4035 = vpop.f32.mrf.mxu0
      %v4036 = vadd.f32 0.0, %v4035
      %4037 = vdwg.mxu0
      %v4038 = vadd.f32 %v3760, %v3943
      %v4039 = vadd.f32 %v3761, %v3946
      %v4040 = vadd.f32 %v3762, %v3949
      %v4041 = vadd.f32 %v3763, %v3952
      %v4042 = vadd.f32 %v3764, %v3955
      %v4043 = vadd.f32 %v3765, %v3958
      %v4044 = vadd.f32 %v3766, %v3961
      %v4045 = vadd.f32 %v3767, %v3964
      %v4046 = vadd.f32 %v3768, %v3967
      %v4047 = vadd.f32 %v3769, %v3970
      %v4048 = vadd.f32 %v3770, %v3973
      %v4049 = vadd.f32 %v3771, %v3976
      %v4050 = vadd.f32 %v3772, %v3979
      %v4051 = vadd.f32 %v3773, %v3982
      %v4052 = vadd.f32 %v3774, %v3985
      %v4053 = vadd.f32 %v3775, %v3988
      %v4054 = vadd.f32 %v3776, %v3991
      %v4055 = vadd.f32 %v3777, %v3994
      %v4056 = vadd.f32 %v3778, %v3997
      %v4057 = vadd.f32 %v3779, %v4000
      %v4058 = vadd.f32 %v3780, %v4003
      %v4059 = vadd.f32 %v3781, %v4006
      %v4060 = vadd.f32 %v3782, %v4009
      %v4061 = vadd.f32 %v3783, %v4012
      %v4062 = vadd.f32 %v3784, %v4015
      %v4063 = vadd.f32 %v3785, %v4018
      %v4064 = vadd.f32 %v3786, %v4021
      %v4065 = vadd.f32 %v3787, %v4024
      %v4066 = vadd.f32 %v3788, %v4027
      %v4067 = vadd.f32 %v3789, %v4030
      %v4068 = vadd.f32 %v3790, %v4033
      %v4069 = vadd.f32 %v3791, %v4036
      %v4070 = vld [vmem:[%s2890 + $0x2] sm:$0xff]
      %v4071 = vld [vmem:[%s2890 + $0xa] sm:$0xff]
      %v4072 = vld [vmem:[%s2890 + $0x1a] sm:$0xff]
      %v4073 = vld [vmem:[%s2890 + $0x22] sm:$0xff]
      %v4074 = vld [vmem:[%s2890 + $0x32] sm:$0xff]
      %v4075 = vld [vmem:[%s2890 + $0x3a] sm:$0xff]
      %v4076 = vld [vmem:[%s2890 + $0x4a] sm:$0xff]
      %v4077 = vld [vmem:[%s2890 + $0x52] sm:$0xff]
      %v4078 = vld [vmem:[%s2890 + $0x62] sm:$0xff]
      %v4079 = vld [vmem:[%s2890 + $0x6a] sm:$0xff]
      %v4080 = vld [vmem:[%s2890 + $0x7a] sm:$0xff]
      %v4081 = vld [vmem:[%s2890 + $0x82] sm:$0xff]
      %v4082 = vld [vmem:[%s2890 + $0x92] sm:$0xff]
      %v4083 = vld [vmem:[%s2890 + $0x9a] sm:$0xff]
      %v4084 = vld [vmem:[%s2890 + $0xaa] sm:$0xff]
      %v4085 = vld [vmem:[%s2890 + $0xb2] sm:$0xff]
      %v4086 = vld [vmem:[%s2890 + $0xc2] sm:$0xff]
      %v4087 = vld [vmem:[%s2890 + $0xca] sm:$0xff]
      %v4088 = vld [vmem:[%s2890 + $0xda] sm:$0xff]
      %v4089 = vld [vmem:[%s2890 + $0xe2] sm:$0xff]
      %v4090 = vld [vmem:[%s2890 + $0xf2] sm:$0xff]
      %v4091 = vld [vmem:[%s2890 + $0xfa] sm:$0xff]
      %v4092 = vld [vmem:[%s2890 + $0x10a] sm:$0xff]
      %v4093 = vld [vmem:[%s2890 + $0x112] sm:$0xff]
      %v4094 = vld [vmem:[%s2890 + $0x122] sm:$0xff]
      %v4095 = vld [vmem:[%s2890 + $0x12a] sm:$0xff]
      %v4096 = vld [vmem:[%s2890 + $0x13a] sm:$0xff]
      %v4097 = vld [vmem:[%s2890 + $0x142] sm:$0xff]
      %v4098 = vld [vmem:[%s2890 + $0x152] sm:$0xff]
      %v4099 = vld [vmem:[%s2890 + $0x15a] sm:$0xff]
      %v4100 = vld [vmem:[%s2890 + $0x16a] sm:$0xff]
      %v4101 = vld [vmem:[%s2890 + $0x172] sm:$0xff]
      %s4102 = scalar_lea.vmem %s3, 16
      %v4103 = vld [vmem:[%s4102] sm:$0xf]
      %v4105 = vsel %vm225, %v4070, 0
      %v4108 = vsel %vm225, %v4071, 0
      %v4111 = vsel %vm225, %v4072, 0
      %v4114 = vsel %vm225, %v4073, 0
      %v4117 = vsel %vm225, %v4074, 0
      %v4120 = vsel %vm225, %v4075, 0
      %v4123 = vsel %vm225, %v4076, 0
      %v4126 = vsel %vm225, %v4077, 0
      %v4129 = vsel %vm225, %v4078, 0
      %v4132 = vsel %vm225, %v4079, 0
      %v4135 = vsel %vm225, %v4080, 0
      %v4138 = vsel %vm225, %v4081, 0
      %v4141 = vsel %vm225, %v4082, 0
      %v4144 = vsel %vm225, %v4083, 0
      %v4147 = vsel %vm225, %v4084, 0
      %v4150 = vsel %vm225, %v4085, 0
      %v4153 = vsel %vm225, %v4086, 0
      %v4156 = vsel %vm225, %v4087, 0
      %v4159 = vsel %vm225, %v4088, 0
      %v4162 = vsel %vm225, %v4089, 0
      %v4165 = vsel %vm225, %v4090, 0
      %v4168 = vsel %vm225, %v4091, 0
      %v4171 = vsel %vm225, %v4092, 0
      %v4174 = vsel %vm225, %v4093, 0
      %v4177 = vsel %vm225, %v4094, 0
      %v4180 = vsel %vm225, %v4095, 0
      %v4183 = vsel %vm225, %v4096, 0
      %v4186 = vsel %vm225, %v4097, 0
      %v4189 = vsel %vm225, %v4098, 0
      %v4192 = vsel %vm225, %v4099, 0
      %v4195 = vsel %vm225, %v4100, 0
      %v4198 = vsel %vm225, %v4101, 0
      %v4201 = vsel %vm471, %v4103, 0
      %4203 = vmatpush.msra.mxu0 0.0
      %4204 = vmatpush.msra.mxu0 0.0
      %4205 = vmatpush.msra.mxu0 0.0
      %4206 = vmatpush.msra.mxu0 0.0
      %4207 = vmatpush.msra.mxu0 0.0
      %4208 = vmatpush.msra.mxu0 0.0
      %4209 = vmatpush.msra.mxu0 0.0
      %4210 = vmatpush.msra.mxu0 0.0
      %4211 = vmatpush.msra.mxu0 0.0
      %4212 = vmatpush.msra.mxu0 0.0
      %4213 = vmatpush.msra.mxu0 0.0
      %4214 = vmatpush.msra.mxu0 0.0
      %4215 = vmatpush.msra.mxu0 0.0
      %4216 = vmatpush.msra.mxu0 0.0
      %4217 = vmatpush.msra.mxu0 0.0
      %4218 = vmatpush.msra.mxu0 %v4201
      %4219 = vmatmul.f32.gmra.mxu0 %v4105
      %v4220 = vpop.f32.mrf.mxu0
      %v4221 = vadd.f32 0.0, %v4220
      %4222 = vmatmul.f32.gmra.mxu0 %v4108
      %v4223 = vpop.f32.mrf.mxu0
      %v4224 = vadd.f32 0.0, %v4223
      %4225 = vmatmul.f32.gmra.mxu0 %v4111
      %v4226 = vpop.f32.mrf.mxu0
      %v4227 = vadd.f32 0.0, %v4226
      %4228 = vmatmul.f32.gmra.mxu0 %v4114
      %v4229 = vpop.f32.mrf.mxu0
      %v4230 = vadd.f32 0.0, %v4229
      %4231 = vmatmul.f32.gmra.mxu0 %v4117
      %v4232 = vpop.f32.mrf.mxu0
      %v4233 = vadd.f32 0.0, %v4232
      %4234 = vmatmul.f32.gmra.mxu0 %v4120
      %v4235 = vpop.f32.mrf.mxu0
      %v4236 = vadd.f32 0.0, %v4235
      %4237 = vmatmul.f32.gmra.mxu0 %v4123
      %v4238 = vpop.f32.mrf.mxu0
      %v4239 = vadd.f32 0.0, %v4238
      %4240 = vmatmul.f32.gmra.mxu0 %v4126
      %v4241 = vpop.f32.mrf.mxu0
      %v4242 = vadd.f32 0.0, %v4241
      %4243 = vmatmul.f32.gmra.mxu0 %v4129
      %v4244 = vpop.f32.mrf.mxu0
      %v4245 = vadd.f32 0.0, %v4244
      %4246 = vmatmul.f32.gmra.mxu0 %v4132
      %v4247 = vpop.f32.mrf.mxu0
      %v4248 = vadd.f32 0.0, %v4247
      %4249 = vmatmul.f32.gmra.mxu0 %v4135
      %v4250 = vpop.f32.mrf.mxu0
      %v4251 = vadd.f32 0.0, %v4250
      %4252 = vmatmul.f32.gmra.mxu0 %v4138
      %v4253 = vpop.f32.mrf.mxu0
      %v4254 = vadd.f32 0.0, %v4253
      %4255 = vmatmul.f32.gmra.mxu0 %v4141
      %v4256 = vpop.f32.mrf.mxu0
      %v4257 = vadd.f32 0.0, %v4256
      %4258 = vmatmul.f32.gmra.mxu0 %v4144
      %v4259 = vpop.f32.mrf.mxu0
      %v4260 = vadd.f32 0.0, %v4259
      %4261 = vmatmul.f32.gmra.mxu0 %v4147
      %v4262 = vpop.f32.mrf.mxu0
      %v4263 = vadd.f32 0.0, %v4262
      %4264 = vmatmul.f32.gmra.mxu0 %v4150
      %v4265 = vpop.f32.mrf.mxu0
      %v4266 = vadd.f32 0.0, %v4265
      %4267 = vmatmul.f32.gmra.mxu0 %v4153
      %v4268 = vpop.f32.mrf.mxu0
      %v4269 = vadd.f32 0.0, %v4268
      %4270 = vmatmul.f32.gmra.mxu0 %v4156
      %v4271 = vpop.f32.mrf.mxu0
      %v4272 = vadd.f32 0.0, %v4271
      %4273 = vmatmul.f32.gmra.mxu0 %v4159
      %v4274 = vpop.f32.mrf.mxu0
      %v4275 = vadd.f32 0.0, %v4274
      %4276 = vmatmul.f32.gmra.mxu0 %v4162
      %v4277 = vpop.f32.mrf.mxu0
      %v4278 = vadd.f32 0.0, %v4277
      %4279 = vmatmul.f32.gmra.mxu0 %v4165
      %v4280 = vpop.f32.mrf.mxu0
      %v4281 = vadd.f32 0.0, %v4280
      %4282 = vmatmul.f32.gmra.mxu0 %v4168
      %v4283 = vpop.f32.mrf.mxu0
      %v4284 = vadd.f32 0.0, %v4283
      %4285 = vmatmul.f32.gmra.mxu0 %v4171
      %v4286 = vpop.f32.mrf.mxu0
      %v4287 = vadd.f32 0.0, %v4286
      %4288 = vmatmul.f32.gmra.mxu0 %v4174
      %v4289 = vpop.f32.mrf.mxu0
      %v4290 = vadd.f32 0.0, %v4289
      %4291 = vmatmul.f32.gmra.mxu0 %v4177
      %v4292 = vpop.f32.mrf.mxu0
      %v4293 = vadd.f32 0.0, %v4292
      %4294 = vmatmul.f32.gmra.mxu0 %v4180
      %v4295 = vpop.f32.mrf.mxu0
      %v4296 = vadd.f32 0.0, %v4295
      %4297 = vmatmul.f32.gmra.mxu0 %v4183
      %v4298 = vpop.f32.mrf.mxu0
      %v4299 = vadd.f32 0.0, %v4298
      %4300 = vmatmul.f32.gmra.mxu0 %v4186
      %v4301 = vpop.f32.mrf.mxu0
      %v4302 = vadd.f32 0.0, %v4301
      %4303 = vmatmul.f32.gmra.mxu0 %v4189
      %v4304 = vpop.f32.mrf.mxu0
      %v4305 = vadd.f32 0.0, %v4304
      %4306 = vmatmul.f32.gmra.mxu0 %v4192
      %v4307 = vpop.f32.mrf.mxu0
      %v4308 = vadd.f32 0.0, %v4307
      %4309 = vmatmul.f32.gmra.mxu0 %v4195
      %v4310 = vpop.f32.mrf.mxu0
      %v4311 = vadd.f32 0.0, %v4310
      %4312 = vmatmul.f32.gmra.mxu0 %v4198
      %v4313 = vpop.f32.mrf.mxu0
      %v4314 = vadd.f32 0.0, %v4313
      %4315 = vdwg.mxu0
      %v4316 = vadd.f32 %v4038, %v4221
      %v4317 = vadd.f32 %v4039, %v4224
      %v4318 = vadd.f32 %v4040, %v4227
      %v4319 = vadd.f32 %v4041, %v4230
      %v4320 = vadd.f32 %v4042, %v4233
      %v4321 = vadd.f32 %v4043, %v4236
      %v4322 = vadd.f32 %v4044, %v4239
      %v4323 = vadd.f32 %v4045, %v4242
      %v4324 = vadd.f32 %v4046, %v4245
      %v4325 = vadd.f32 %v4047, %v4248
      %v4326 = vadd.f32 %v4048, %v4251
      %v4327 = vadd.f32 %v4049, %v4254
      %v4328 = vadd.f32 %v4050, %v4257
      %v4329 = vadd.f32 %v4051, %v4260
      %v4330 = vadd.f32 %v4052, %v4263
      %v4331 = vadd.f32 %v4053, %v4266
      %v4332 = vadd.f32 %v4054, %v4269
      %v4333 = vadd.f32 %v4055, %v4272
      %v4334 = vadd.f32 %v4056, %v4275
      %v4335 = vadd.f32 %v4057, %v4278
      %v4336 = vadd.f32 %v4058, %v4281
      %v4337 = vadd.f32 %v4059, %v4284
      %v4338 = vadd.f32 %v4060, %v4287
      %v4339 = vadd.f32 %v4061, %v4290
      %v4340 = vadd.f32 %v4062, %v4293
      %v4341 = vadd.f32 %v4063, %v4296
      %v4342 = vadd.f32 %v4064, %v4299
      %v4343 = vadd.f32 %v4065, %v4302
      %v4344 = vadd.f32 %v4066, %v4305
      %v4345 = vadd.f32 %v4067, %v4308
      %v4346 = vadd.f32 %v4068, %v4311
      %v4347 = vadd.f32 %v4069, %v4314
      %v4348 = vld [vmem:[%s2890 + $0x4] sm:$0xff]
      %v4349 = vld [vmem:[%s2890 + $0xc] sm:$0xff]
      %v4350 = vld [vmem:[%s2890 + $0x1c] sm:$0xff]
      %v4351 = vld [vmem:[%s2890 + $0x24] sm:$0xff]
      %v4352 = vld [vmem:[%s2890 + $0x34] sm:$0xff]
      %v4353 = vld [vmem:[%s2890 + $0x3c] sm:$0xff]
      %v4354 = vld [vmem:[%s2890 + $0x4c] sm:$0xff]
      %v4355 = vld [vmem:[%s2890 + $0x54] sm:$0xff]
      %v4356 = vld [vmem:[%s2890 + $0x64] sm:$0xff]
      %v4357 = vld [vmem:[%s2890 + $0x6c] sm:$0xff]
      %v4358 = vld [vmem:[%s2890 + $0x7c] sm:$0xff]
      %v4359 = vld [vmem:[%s2890 + $0x84] sm:$0xff]
      %v4360 = vld [vmem:[%s2890 + $0x94] sm:$0xff]
      %v4361 = vld [vmem:[%s2890 + $0x9c] sm:$0xff]
      %v4362 = vld [vmem:[%s2890 + $0xac] sm:$0xff]
      %v4363 = vld [vmem:[%s2890 + $0xb4] sm:$0xff]
      %v4364 = vld [vmem:[%s2890 + $0xc4] sm:$0xff]
      %v4365 = vld [vmem:[%s2890 + $0xcc] sm:$0xff]
      %v4366 = vld [vmem:[%s2890 + $0xdc] sm:$0xff]
      %v4367 = vld [vmem:[%s2890 + $0xe4] sm:$0xff]
      %v4368 = vld [vmem:[%s2890 + $0xf4] sm:$0xff]
      %v4369 = vld [vmem:[%s2890 + $0xfc] sm:$0xff]
      %v4370 = vld [vmem:[%s2890 + $0x10c] sm:$0xff]
      %v4371 = vld [vmem:[%s2890 + $0x114] sm:$0xff]
      %v4372 = vld [vmem:[%s2890 + $0x124] sm:$0xff]
      %v4373 = vld [vmem:[%s2890 + $0x12c] sm:$0xff]
      %v4374 = vld [vmem:[%s2890 + $0x13c] sm:$0xff]
      %v4375 = vld [vmem:[%s2890 + $0x144] sm:$0xff]
      %v4376 = vld [vmem:[%s2890 + $0x154] sm:$0xff]
      %v4377 = vld [vmem:[%s2890 + $0x15c] sm:$0xff]
      %v4378 = vld [vmem:[%s2890 + $0x16c] sm:$0xff]
      %v4379 = vld [vmem:[%s2890 + $0x174] sm:$0xff]
      %s4380 = scalar_lea.vmem %s3, 20
      %v4381 = vld [vmem:[%s4380] sm:$0xf]
      %v4383 = vsel %vm225, %v4348, 0
      %v4386 = vsel %vm225, %v4349, 0
      %v4389 = vsel %vm225, %v4350, 0
      %v4392 = vsel %vm225, %v4351, 0
      %v4395 = vsel %vm225, %v4352, 0
      %v4398 = vsel %vm225, %v4353, 0
      %v4401 = vsel %vm225, %v4354, 0
      %v4404 = vsel %vm225, %v4355, 0
      %v4407 = vsel %vm225, %v4356, 0
      %v4410 = vsel %vm225, %v4357, 0
      %v4413 = vsel %vm225, %v4358, 0
      %v4416 = vsel %vm225, %v4359, 0
      %v4419 = vsel %vm225, %v4360, 0
      %v4422 = vsel %vm225, %v4361, 0
      %v4425 = vsel %vm225, %v4362, 0
      %v4428 = vsel %vm225, %v4363, 0
      %v4431 = vsel %vm225, %v4364, 0
      %v4434 = vsel %vm225, %v4365, 0
      %v4437 = vsel %vm225, %v4366, 0
      %v4440 = vsel %vm225, %v4367, 0
      %v4443 = vsel %vm225, %v4368, 0
      %v4446 = vsel %vm225, %v4369, 0
      %v4449 = vsel %vm225, %v4370, 0
      %v4452 = vsel %vm225, %v4371, 0
      %v4455 = vsel %vm225, %v4372, 0
      %v4458 = vsel %vm225, %v4373, 0
      %v4461 = vsel %vm225, %v4374, 0
      %v4464 = vsel %vm225, %v4375, 0
      %v4467 = vsel %vm225, %v4376, 0
      %v4470 = vsel %vm225, %v4377, 0
      %v4473 = vsel %vm225, %v4378, 0
      %v4476 = vsel %vm225, %v4379, 0
      %v4479 = vsel %vm471, %v4381, 0
      %4481 = vmatpush.msra.mxu0 0.0
      %4482 = vmatpush.msra.mxu0 0.0
      %4483 = vmatpush.msra.mxu0 0.0
      %4484 = vmatpush.msra.mxu0 0.0
      %4485 = vmatpush.msra.mxu0 0.0
      %4486 = vmatpush.msra.mxu0 0.0
      %4487 = vmatpush.msra.mxu0 0.0
      %4488 = vmatpush.msra.mxu0 0.0
      %4489 = vmatpush.msra.mxu0 0.0
      %4490 = vmatpush.msra.mxu0 0.0
      %4491 = vmatpush.msra.mxu0 0.0
      %4492 = vmatpush.msra.mxu0 0.0
      %4493 = vmatpush.msra.mxu0 0.0
      %4494 = vmatpush.msra.mxu0 0.0
      %4495 = vmatpush.msra.mxu0 0.0
      %4496 = vmatpush.msra.mxu0 %v4479
      %4497 = vmatmul.f32.gmra.mxu0 %v4383
      %v4498 = vpop.f32.mrf.mxu0
      %v4499 = vadd.f32 0.0, %v4498
      %4500 = vmatmul.f32.gmra.mxu0 %v4386
      %v4501 = vpop.f32.mrf.mxu0
      %v4502 = vadd.f32 0.0, %v4501
      %4503 = vmatmul.f32.gmra.mxu0 %v4389
      %v4504 = vpop.f32.mrf.mxu0
      %v4505 = vadd.f32 0.0, %v4504
      %4506 = vmatmul.f32.gmra.mxu0 %v4392
      %v4507 = vpop.f32.mrf.mxu0
      %v4508 = vadd.f32 0.0, %v4507
      %4509 = vmatmul.f32.gmra.mxu0 %v4395
      %v4510 = vpop.f32.mrf.mxu0
      %v4511 = vadd.f32 0.0, %v4510
      %4512 = vmatmul.f32.gmra.mxu0 %v4398
      %v4513 = vpop.f32.mrf.mxu0
      %v4514 = vadd.f32 0.0, %v4513
      %4515 = vmatmul.f32.gmra.mxu0 %v4401
      %v4516 = vpop.f32.mrf.mxu0
      %v4517 = vadd.f32 0.0, %v4516
      %4518 = vmatmul.f32.gmra.mxu0 %v4404
      %v4519 = vpop.f32.mrf.mxu0
      %v4520 = vadd.f32 0.0, %v4519
      %4521 = vmatmul.f32.gmra.mxu0 %v4407
      %v4522 = vpop.f32.mrf.mxu0
      %v4523 = vadd.f32 0.0, %v4522
      %4524 = vmatmul.f32.gmra.mxu0 %v4410
      %v4525 = vpop.f32.mrf.mxu0
      %v4526 = vadd.f32 0.0, %v4525
      %4527 = vmatmul.f32.gmra.mxu0 %v4413
      %v4528 = vpop.f32.mrf.mxu0
      %v4529 = vadd.f32 0.0, %v4528
      %4530 = vmatmul.f32.gmra.mxu0 %v4416
      %v4531 = vpop.f32.mrf.mxu0
      %v4532 = vadd.f32 0.0, %v4531
      %4533 = vmatmul.f32.gmra.mxu0 %v4419
      %v4534 = vpop.f32.mrf.mxu0
      %v4535 = vadd.f32 0.0, %v4534
      %4536 = vmatmul.f32.gmra.mxu0 %v4422
      %v4537 = vpop.f32.mrf.mxu0
      %v4538 = vadd.f32 0.0, %v4537
      %4539 = vmatmul.f32.gmra.mxu0 %v4425
      %v4540 = vpop.f32.mrf.mxu0
      %v4541 = vadd.f32 0.0, %v4540
      %4542 = vmatmul.f32.gmra.mxu0 %v4428
      %v4543 = vpop.f32.mrf.mxu0
      %v4544 = vadd.f32 0.0, %v4543
      %4545 = vmatmul.f32.gmra.mxu0 %v4431
      %v4546 = vpop.f32.mrf.mxu0
      %v4547 = vadd.f32 0.0, %v4546
      %4548 = vmatmul.f32.gmra.mxu0 %v4434
      %v4549 = vpop.f32.mrf.mxu0
      %v4550 = vadd.f32 0.0, %v4549
      %4551 = vmatmul.f32.gmra.mxu0 %v4437
      %v4552 = vpop.f32.mrf.mxu0
      %v4553 = vadd.f32 0.0, %v4552
      %4554 = vmatmul.f32.gmra.mxu0 %v4440
      %v4555 = vpop.f32.mrf.mxu0
      %v4556 = vadd.f32 0.0, %v4555
      %4557 = vmatmul.f32.gmra.mxu0 %v4443
      %v4558 = vpop.f32.mrf.mxu0
      %v4559 = vadd.f32 0.0, %v4558
      %4560 = vmatmul.f32.gmra.mxu0 %v4446
      %v4561 = vpop.f32.mrf.mxu0
      %v4562 = vadd.f32 0.0, %v4561
      %4563 = vmatmul.f32.gmra.mxu0 %v4449
      %v4564 = vpop.f32.mrf.mxu0
      %v4565 = vadd.f32 0.0, %v4564
      %4566 = vmatmul.f32.gmra.mxu0 %v4452
      %v4567 = vpop.f32.mrf.mxu0
      %v4568 = vadd.f32 0.0, %v4567
      %4569 = vmatmul.f32.gmra.mxu0 %v4455
      %v4570 = vpop.f32.mrf.mxu0
      %v4571 = vadd.f32 0.0, %v4570
      %4572 = vmatmul.f32.gmra.mxu0 %v4458
      %v4573 = vpop.f32.mrf.mxu0
      %v4574 = vadd.f32 0.0, %v4573
      %4575 = vmatmul.f32.gmra.mxu0 %v4461
      %v4576 = vpop.f32.mrf.mxu0
      %v4577 = vadd.f32 0.0, %v4576
      %4578 = vmatmul.f32.gmra.mxu0 %v4464
      %v4579 = vpop.f32.mrf.mxu0
      %v4580 = vadd.f32 0.0, %v4579
      %4581 = vmatmul.f32.gmra.mxu0 %v4467
      %v4582 = vpop.f32.mrf.mxu0
      %v4583 = vadd.f32 0.0, %v4582
      %4584 = vmatmul.f32.gmra.mxu0 %v4470
      %v4585 = vpop.f32.mrf.mxu0
      %v4586 = vadd.f32 0.0, %v4585
      %4587 = vmatmul.f32.gmra.mxu0 %v4473
      %v4588 = vpop.f32.mrf.mxu0
      %v4589 = vadd.f32 0.0, %v4588
      %4590 = vmatmul.f32.gmra.mxu0 %v4476
      %v4591 = vpop.f32.mrf.mxu0
      %v4592 = vadd.f32 0.0, %v4591
      %4593 = vdwg.mxu0
      %v4594 = vadd.f32 %v4316, %v4499
      %v4595 = vadd.f32 %v4317, %v4502
      %v4596 = vadd.f32 %v4318, %v4505
      %v4597 = vadd.f32 %v4319, %v4508
      %v4598 = vadd.f32 %v4320, %v4511
      %v4599 = vadd.f32 %v4321, %v4514
      %v4600 = vadd.f32 %v4322, %v4517
      %v4601 = vadd.f32 %v4323, %v4520
      %v4602 = vadd.f32 %v4324, %v4523
      %v4603 = vadd.f32 %v4325, %v4526
      %v4604 = vadd.f32 %v4326, %v4529
      %v4605 = vadd.f32 %v4327, %v4532
      %v4606 = vadd.f32 %v4328, %v4535
      %v4607 = vadd.f32 %v4329, %v4538
      %v4608 = vadd.f32 %v4330, %v4541
      %v4609 = vadd.f32 %v4331, %v4544
      %v4610 = vadd.f32 %v4332, %v4547
      %v4611 = vadd.f32 %v4333, %v4550
      %v4612 = vadd.f32 %v4334, %v4553
      %v4613 = vadd.f32 %v4335, %v4556
      %v4614 = vadd.f32 %v4336, %v4559
      %v4615 = vadd.f32 %v4337, %v4562
      %v4616 = vadd.f32 %v4338, %v4565
      %v4617 = vadd.f32 %v4339, %v4568
      %v4618 = vadd.f32 %v4340, %v4571
      %v4619 = vadd.f32 %v4341, %v4574
      %v4620 = vadd.f32 %v4342, %v4577
      %v4621 = vadd.f32 %v4343, %v4580
      %v4622 = vadd.f32 %v4344, %v4583
      %v4623 = vadd.f32 %v4345, %v4586
      %v4624 = vadd.f32 %v4346, %v4589
      %v4625 = vadd.f32 %v4347, %v4592
      %s4626 = scalar_lea.vmem [#allocation3], 96
      %v4627 = vld [vmem:[%s4626] sm:$0xff]
      %v4628 = vld [vmem:[%s4626 + $0x8] sm:$0xff]
      %v4629 = vld [vmem:[%s4626 + $0x18] sm:$0xff]
      %v4630 = vld [vmem:[%s4626 + $0x20] sm:$0xff]
      %v4631 = vld [vmem:[%s4626 + $0x30] sm:$0xff]
      %v4632 = vld [vmem:[%s4626 + $0x38] sm:$0xff]
      %v4633 = vld [vmem:[%s4626 + $0x48] sm:$0xff]
      %v4634 = vld [vmem:[%s4626 + $0x50] sm:$0xff]
      %v4635 = vld [vmem:[%s4626 + $0x60] sm:$0xff]
      %v4636 = vld [vmem:[%s4626 + $0x68] sm:$0xff]
      %v4637 = vld [vmem:[%s4626 + $0x78] sm:$0xff]
      %v4638 = vld [vmem:[%s4626 + $0x80] sm:$0xff]
      %v4639 = vld [vmem:[%s4626 + $0x90] sm:$0xff]
      %v4640 = vld [vmem:[%s4626 + $0x98] sm:$0xff]
      %v4641 = vld [vmem:[%s4626 + $0xa8] sm:$0xff]
      %v4642 = vld [vmem:[%s4626 + $0xb0] sm:$0xff]
      %v4643 = vld [vmem:[%s4626 + $0xc0] sm:$0xff]
      %v4644 = vld [vmem:[%s4626 + $0xc8] sm:$0xff]
      %v4645 = vld [vmem:[%s4626 + $0xd8] sm:$0xff]
      %v4646 = vld [vmem:[%s4626 + $0xe0] sm:$0xff]
      %v4647 = vld [vmem:[%s4626 + $0xf0] sm:$0xff]
      %v4648 = vld [vmem:[%s4626 + $0xf8] sm:$0xff]
      %v4649 = vld [vmem:[%s4626 + $0x108] sm:$0xff]
      %v4650 = vld [vmem:[%s4626 + $0x110] sm:$0xff]
      %v4651 = vld [vmem:[%s4626 + $0x120] sm:$0xff]
      %v4652 = vld [vmem:[%s4626 + $0x128] sm:$0xff]
      %v4653 = vld [vmem:[%s4626 + $0x138] sm:$0xff]
      %v4654 = vld [vmem:[%s4626 + $0x140] sm:$0xff]
      %v4655 = vld [vmem:[%s4626 + $0x150] sm:$0xff]
      %v4656 = vld [vmem:[%s4626 + $0x158] sm:$0xff]
      %v4657 = vld [vmem:[%s4626 + $0x168] sm:$0xff]
      %v4658 = vld [vmem:[%s4626 + $0x170] sm:$0xff]
      %s4659 = scalar_lea.vmem %s3, 24
      %v4660 = vld [vmem:[%s4659] sm:$0xf]
      %v4662 = vsel %vm225, %v4627, 0
      %v4665 = vsel %vm225, %v4628, 0
      %v4668 = vsel %vm225, %v4629, 0
      %v4671 = vsel %vm225, %v4630, 0
      %v4674 = vsel %vm225, %v4631, 0
      %v4677 = vsel %vm225, %v4632, 0
      %v4680 = vsel %vm225, %v4633, 0
      %v4683 = vsel %vm225, %v4634, 0
      %v4686 = vsel %vm225, %v4635, 0
      %v4689 = vsel %vm225, %v4636, 0
      %v4692 = vsel %vm225, %v4637, 0
      %v4695 = vsel %vm225, %v4638, 0
      %v4698 = vsel %vm225, %v4639, 0
      %v4701 = vsel %vm225, %v4640, 0
      %v4704 = vsel %vm225, %v4641, 0
      %v4707 = vsel %vm225, %v4642, 0
      %v4710 = vsel %vm225, %v4643, 0
      %v4713 = vsel %vm225, %v4644, 0
      %v4716 = vsel %vm225, %v4645, 0
      %v4719 = vsel %vm225, %v4646, 0
      %v4722 = vsel %vm225, %v4647, 0
      %v4725 = vsel %vm225, %v4648, 0
      %v4728 = vsel %vm225, %v4649, 0
      %v4731 = vsel %vm225, %v4650, 0
      %v4734 = vsel %vm225, %v4651, 0
      %v4737 = vsel %vm225, %v4652, 0
      %v4740 = vsel %vm225, %v4653, 0
      %v4743 = vsel %vm225, %v4654, 0
      %v4746 = vsel %vm225, %v4655, 0
      %v4749 = vsel %vm225, %v4656, 0
      %v4752 = vsel %vm225, %v4657, 0
      %v4755 = vsel %vm225, %v4658, 0
      %v4758 = vsel %vm471, %v4660, 0
      %4760 = vmatpush.msra.mxu0 0.0
      %4761 = vmatpush.msra.mxu0 0.0
      %4762 = vmatpush.msra.mxu0 0.0
      %4763 = vmatpush.msra.mxu0 0.0
      %4764 = vmatpush.msra.mxu0 0.0
      %4765 = vmatpush.msra.mxu0 0.0
      %4766 = vmatpush.msra.mxu0 0.0
      %4767 = vmatpush.msra.mxu0 0.0
      %4768 = vmatpush.msra.mxu0 0.0
      %4769 = vmatpush.msra.mxu0 0.0
      %4770 = vmatpush.msra.mxu0 0.0
      %4771 = vmatpush.msra.mxu0 0.0
      %4772 = vmatpush.msra.mxu0 0.0
      %4773 = vmatpush.msra.mxu0 0.0
      %4774 = vmatpush.msra.mxu0 0.0
      %4775 = vmatpush.msra.mxu0 %v4758
      %4776 = vmatmul.f32.gmra.mxu0 %v4662
      %v4777 = vpop.f32.mrf.mxu0
      %v4778 = vadd.f32 0.0, %v4777
      %4779 = vmatmul.f32.gmra.mxu0 %v4665
      %v4780 = vpop.f32.mrf.mxu0
      %v4781 = vadd.f32 0.0, %v4780
      %4782 = vmatmul.f32.gmra.mxu0 %v4668
      %v4783 = vpop.f32.mrf.mxu0
      %v4784 = vadd.f32 0.0, %v4783
      %4785 = vmatmul.f32.gmra.mxu0 %v4671
      %v4786 = vpop.f32.mrf.mxu0
      %v4787 = vadd.f32 0.0, %v4786
      %4788 = vmatmul.f32.gmra.mxu0 %v4674
      %v4789 = vpop.f32.mrf.mxu0
      %v4790 = vadd.f32 0.0, %v4789
      %4791 = vmatmul.f32.gmra.mxu0 %v4677
      %v4792 = vpop.f32.mrf.mxu0
      %v4793 = vadd.f32 0.0, %v4792
      %4794 = vmatmul.f32.gmra.mxu0 %v4680
      %v4795 = vpop.f32.mrf.mxu0
      %v4796 = vadd.f32 0.0, %v4795
      %4797 = vmatmul.f32.gmra.mxu0 %v4683
      %v4798 = vpop.f32.mrf.mxu0
      %v4799 = vadd.f32 0.0, %v4798
      %4800 = vmatmul.f32.gmra.mxu0 %v4686
      %v4801 = vpop.f32.mrf.mxu0
      %v4802 = vadd.f32 0.0, %v4801
      %4803 = vmatmul.f32.gmra.mxu0 %v4689
      %v4804 = vpop.f32.mrf.mxu0
      %v4805 = vadd.f32 0.0, %v4804
      %4806 = vmatmul.f32.gmra.mxu0 %v4692
      %v4807 = vpop.f32.mrf.mxu0
      %v4808 = vadd.f32 0.0, %v4807
      %4809 = vmatmul.f32.gmra.mxu0 %v4695
      %v4810 = vpop.f32.mrf.mxu0
      %v4811 = vadd.f32 0.0, %v4810
      %4812 = vmatmul.f32.gmra.mxu0 %v4698
      %v4813 = vpop.f32.mrf.mxu0
      %v4814 = vadd.f32 0.0, %v4813
      %4815 = vmatmul.f32.gmra.mxu0 %v4701
      %v4816 = vpop.f32.mrf.mxu0
      %v4817 = vadd.f32 0.0, %v4816
      %4818 = vmatmul.f32.gmra.mxu0 %v4704
      %v4819 = vpop.f32.mrf.mxu0
      %v4820 = vadd.f32 0.0, %v4819
      %4821 = vmatmul.f32.gmra.mxu0 %v4707
      %v4822 = vpop.f32.mrf.mxu0
      %v4823 = vadd.f32 0.0, %v4822
      %4824 = vmatmul.f32.gmra.mxu0 %v4710
      %v4825 = vpop.f32.mrf.mxu0
      %v4826 = vadd.f32 0.0, %v4825
      %4827 = vmatmul.f32.gmra.mxu0 %v4713
      %v4828 = vpop.f32.mrf.mxu0
      %v4829 = vadd.f32 0.0, %v4828
      %4830 = vmatmul.f32.gmra.mxu0 %v4716
      %v4831 = vpop.f32.mrf.mxu0
      %v4832 = vadd.f32 0.0, %v4831
      %4833 = vmatmul.f32.gmra.mxu0 %v4719
      %v4834 = vpop.f32.mrf.mxu0
      %v4835 = vadd.f32 0.0, %v4834
      %4836 = vmatmul.f32.gmra.mxu0 %v4722
      %v4837 = vpop.f32.mrf.mxu0
      %v4838 = vadd.f32 0.0, %v4837
      %4839 = vmatmul.f32.gmra.mxu0 %v4725
      %v4840 = vpop.f32.mrf.mxu0
      %v4841 = vadd.f32 0.0, %v4840
      %4842 = vmatmul.f32.gmra.mxu0 %v4728
      %v4843 = vpop.f32.mrf.mxu0
      %v4844 = vadd.f32 0.0, %v4843
      %4845 = vmatmul.f32.gmra.mxu0 %v4731
      %v4846 = vpop.f32.mrf.mxu0
      %v4847 = vadd.f32 0.0, %v4846
      %4848 = vmatmul.f32.gmra.mxu0 %v4734
      %v4849 = vpop.f32.mrf.mxu0
      %v4850 = vadd.f32 0.0, %v4849
      %4851 = vmatmul.f32.gmra.mxu0 %v4737
      %v4852 = vpop.f32.mrf.mxu0
      %v4853 = vadd.f32 0.0, %v4852
      %4854 = vmatmul.f32.gmra.mxu0 %v4740
      %v4855 = vpop.f32.mrf.mxu0
      %v4856 = vadd.f32 0.0, %v4855
      %4857 = vmatmul.f32.gmra.mxu0 %v4743
      %v4858 = vpop.f32.mrf.mxu0
      %v4859 = vadd.f32 0.0, %v4858
      %4860 = vmatmul.f32.gmra.mxu0 %v4746
      %v4861 = vpop.f32.mrf.mxu0
      %v4862 = vadd.f32 0.0, %v4861
      %4863 = vmatmul.f32.gmra.mxu0 %v4749
      %v4864 = vpop.f32.mrf.mxu0
      %v4865 = vadd.f32 0.0, %v4864
      %4866 = vmatmul.f32.gmra.mxu0 %v4752
      %v4867 = vpop.f32.mrf.mxu0
      %v4868 = vadd.f32 0.0, %v4867
      %4869 = vmatmul.f32.gmra.mxu0 %v4755
      %v4870 = vpop.f32.mrf.mxu0
      %v4871 = vadd.f32 0.0, %v4870
      %4872 = vdwg.mxu0
      %v4873 = vadd.f32 %v4594, %v4778
      %v4874 = vadd.f32 %v4595, %v4781
      %v4875 = vadd.f32 %v4596, %v4784
      %v4876 = vadd.f32 %v4597, %v4787
      %v4877 = vadd.f32 %v4598, %v4790
      %v4878 = vadd.f32 %v4599, %v4793
      %v4879 = vadd.f32 %v4600, %v4796
      %v4880 = vadd.f32 %v4601, %v4799
      %v4881 = vadd.f32 %v4602, %v4802
      %v4882 = vadd.f32 %v4603, %v4805
      %v4883 = vadd.f32 %v4604, %v4808
      %v4884 = vadd.f32 %v4605, %v4811
      %v4885 = vadd.f32 %v4606, %v4814
      %v4886 = vadd.f32 %v4607, %v4817
      %v4887 = vadd.f32 %v4608, %v4820
      %v4888 = vadd.f32 %v4609, %v4823
      %v4889 = vadd.f32 %v4610, %v4826
      %v4890 = vadd.f32 %v4611, %v4829
      %v4891 = vadd.f32 %v4612, %v4832
      %v4892 = vadd.f32 %v4613, %v4835
      %v4893 = vadd.f32 %v4614, %v4838
      %v4894 = vadd.f32 %v4615, %v4841
      %v4895 = vadd.f32 %v4616, %v4844
      %v4896 = vadd.f32 %v4617, %v4847
      %v4897 = vadd.f32 %v4618, %v4850
      %v4898 = vadd.f32 %v4619, %v4853
      %v4899 = vadd.f32 %v4620, %v4856
      %v4900 = vadd.f32 %v4621, %v4859
      %v4901 = vadd.f32 %v4622, %v4862
      %v4902 = vadd.f32 %v4623, %v4865
      %v4903 = vadd.f32 %v4624, %v4868
      %v4904 = vadd.f32 %v4625, %v4871
      %v4905 = vld [vmem:[%s4626 + $0x2] sm:$0xff]
      %v4906 = vld [vmem:[%s4626 + $0xa] sm:$0xff]
      %v4907 = vld [vmem:[%s4626 + $0x1a] sm:$0xff]
      %v4908 = vld [vmem:[%s4626 + $0x22] sm:$0xff]
      %v4909 = vld [vmem:[%s4626 + $0x32] sm:$0xff]
      %v4910 = vld [vmem:[%s4626 + $0x3a] sm:$0xff]
      %v4911 = vld [vmem:[%s4626 + $0x4a] sm:$0xff]
      %v4912 = vld [vmem:[%s4626 + $0x52] sm:$0xff]
      %v4913 = vld [vmem:[%s4626 + $0x62] sm:$0xff]
      %v4914 = vld [vmem:[%s4626 + $0x6a] sm:$0xff]
      %v4915 = vld [vmem:[%s4626 + $0x7a] sm:$0xff]
      %v4916 = vld [vmem:[%s4626 + $0x82] sm:$0xff]
      %v4917 = vld [vmem:[%s4626 + $0x92] sm:$0xff]
      %v4918 = vld [vmem:[%s4626 + $0x9a] sm:$0xff]
      %v4919 = vld [vmem:[%s4626 + $0xaa] sm:$0xff]
      %v4920 = vld [vmem:[%s4626 + $0xb2] sm:$0xff]
      %v4921 = vld [vmem:[%s4626 + $0xc2] sm:$0xff]
      %v4922 = vld [vmem:[%s4626 + $0xca] sm:$0xff]
      %v4923 = vld [vmem:[%s4626 + $0xda] sm:$0xff]
      %v4924 = vld [vmem:[%s4626 + $0xe2] sm:$0xff]
      %v4925 = vld [vmem:[%s4626 + $0xf2] sm:$0xff]
      %v4926 = vld [vmem:[%s4626 + $0xfa] sm:$0xff]
      %v4927 = vld [vmem:[%s4626 + $0x10a] sm:$0xff]
      %v4928 = vld [vmem:[%s4626 + $0x112] sm:$0xff]
      %v4929 = vld [vmem:[%s4626 + $0x122] sm:$0xff]
      %v4930 = vld [vmem:[%s4626 + $0x12a] sm:$0xff]
      %v4931 = vld [vmem:[%s4626 + $0x13a] sm:$0xff]
      %v4932 = vld [vmem:[%s4626 + $0x142] sm:$0xff]
      %v4933 = vld [vmem:[%s4626 + $0x152] sm:$0xff]
      %v4934 = vld [vmem:[%s4626 + $0x15a] sm:$0xff]
      %v4935 = vld [vmem:[%s4626 + $0x16a] sm:$0xff]
      %v4936 = vld [vmem:[%s4626 + $0x172] sm:$0xff]
      %s4937 = scalar_lea.vmem %s3, 28
      %v4938 = vld [vmem:[%s4937] sm:$0xf]
      %v4940 = vsel %vm225, %v4905, 0
      %v4943 = vsel %vm225, %v4906, 0
      %v4946 = vsel %vm225, %v4907, 0
      %v4949 = vsel %vm225, %v4908, 0
      %v4952 = vsel %vm225, %v4909, 0
      %v4955 = vsel %vm225, %v4910, 0
      %v4958 = vsel %vm225, %v4911, 0
      %v4961 = vsel %vm225, %v4912, 0
      %v4964 = vsel %vm225, %v4913, 0
      %v4967 = vsel %vm225, %v4914, 0
      %v4970 = vsel %vm225, %v4915, 0
      %v4973 = vsel %vm225, %v4916, 0
      %v4976 = vsel %vm225, %v4917, 0
      %v4979 = vsel %vm225, %v4918, 0
      %v4982 = vsel %vm225, %v4919, 0
      %v4985 = vsel %vm225, %v4920, 0
      %v4988 = vsel %vm225, %v4921, 0
      %v4991 = vsel %vm225, %v4922, 0
      %v4994 = vsel %vm225, %v4923, 0
      %v4997 = vsel %vm225, %v4924, 0
      %v5000 = vsel %vm225, %v4925, 0
      %v5003 = vsel %vm225, %v4926, 0
      %v5006 = vsel %vm225, %v4927, 0
      %v5009 = vsel %vm225, %v4928, 0
      %v5012 = vsel %vm225, %v4929, 0
      %v5015 = vsel %vm225, %v4930, 0
      %v5018 = vsel %vm225, %v4931, 0
      %v5021 = vsel %vm225, %v4932, 0
      %v5024 = vsel %vm225, %v4933, 0
      %v5027 = vsel %vm225, %v4934, 0
      %v5030 = vsel %vm225, %v4935, 0
      %v5033 = vsel %vm225, %v4936, 0
      %v5036 = vsel %vm471, %v4938, 0
      %5038 = vmatpush.msra.mxu0 0.0
      %5039 = vmatpush.msra.mxu0 0.0
      %5040 = vmatpush.msra.mxu0 0.0
      %5041 = vmatpush.msra.mxu0 0.0
      %5042 = vmatpush.msra.mxu0 0.0
      %5043 = vmatpush.msra.mxu0 0.0
      %5044 = vmatpush.msra.mxu0 0.0
      %5045 = vmatpush.msra.mxu0 0.0
      %5046 = vmatpush.msra.mxu0 0.0
      %5047 = vmatpush.msra.mxu0 0.0
      %5048 = vmatpush.msra.mxu0 0.0
      %5049 = vmatpush.msra.mxu0 0.0
      %5050 = vmatpush.msra.mxu0 0.0
      %5051 = vmatpush.msra.mxu0 0.0
      %5052 = vmatpush.msra.mxu0 0.0
      %5053 = vmatpush.msra.mxu0 %v5036
      %5054 = vmatmul.f32.gmra.mxu0 %v4940
      %v5055 = vpop.f32.mrf.mxu0
      %v5056 = vadd.f32 0.0, %v5055
      %5057 = vmatmul.f32.gmra.mxu0 %v4943
      %v5058 = vpop.f32.mrf.mxu0
      %v5059 = vadd.f32 0.0, %v5058
      %5060 = vmatmul.f32.gmra.mxu0 %v4946
      %v5061 = vpop.f32.mrf.mxu0
      %v5062 = vadd.f32 0.0, %v5061
      %5063 = vmatmul.f32.gmra.mxu0 %v4949
      %v5064 = vpop.f32.mrf.mxu0
      %v5065 = vadd.f32 0.0, %v5064
      %5066 = vmatmul.f32.gmra.mxu0 %v4952
      %v5067 = vpop.f32.mrf.mxu0
      %v5068 = vadd.f32 0.0, %v5067
      %5069 = vmatmul.f32.gmra.mxu0 %v4955
      %v5070 = vpop.f32.mrf.mxu0
      %v5071 = vadd.f32 0.0, %v5070
      %5072 = vmatmul.f32.gmra.mxu0 %v4958
      %v5073 = vpop.f32.mrf.mxu0
      %v5074 = vadd.f32 0.0, %v5073
      %5075 = vmatmul.f32.gmra.mxu0 %v4961
      %v5076 = vpop.f32.mrf.mxu0
      %v5077 = vadd.f32 0.0, %v5076
      %5078 = vmatmul.f32.gmra.mxu0 %v4964
      %v5079 = vpop.f32.mrf.mxu0
      %v5080 = vadd.f32 0.0, %v5079
      %5081 = vmatmul.f32.gmra.mxu0 %v4967
      %v5082 = vpop.f32.mrf.mxu0
      %v5083 = vadd.f32 0.0, %v5082
      %5084 = vmatmul.f32.gmra.mxu0 %v4970
      %v5085 = vpop.f32.mrf.mxu0
      %v5086 = vadd.f32 0.0, %v5085
      %5087 = vmatmul.f32.gmra.mxu0 %v4973
      %v5088 = vpop.f32.mrf.mxu0
      %v5089 = vadd.f32 0.0, %v5088
      %5090 = vmatmul.f32.gmra.mxu0 %v4976
      %v5091 = vpop.f32.mrf.mxu0
      %v5092 = vadd.f32 0.0, %v5091
      %5093 = vmatmul.f32.gmra.mxu0 %v4979
      %v5094 = vpop.f32.mrf.mxu0
      %v5095 = vadd.f32 0.0, %v5094
      %5096 = vmatmul.f32.gmra.mxu0 %v4982
      %v5097 = vpop.f32.mrf.mxu0
      %v5098 = vadd.f32 0.0, %v5097
      %5099 = vmatmul.f32.gmra.mxu0 %v4985
      %v5100 = vpop.f32.mrf.mxu0
      %v5101 = vadd.f32 0.0, %v5100
      %5102 = vmatmul.f32.gmra.mxu0 %v4988
      %v5103 = vpop.f32.mrf.mxu0
      %v5104 = vadd.f32 0.0, %v5103
      %5105 = vmatmul.f32.gmra.mxu0 %v4991
      %v5106 = vpop.f32.mrf.mxu0
      %v5107 = vadd.f32 0.0, %v5106
      %5108 = vmatmul.f32.gmra.mxu0 %v4994
      %v5109 = vpop.f32.mrf.mxu0
      %v5110 = vadd.f32 0.0, %v5109
      %5111 = vmatmul.f32.gmra.mxu0 %v4997
      %v5112 = vpop.f32.mrf.mxu0
      %v5113 = vadd.f32 0.0, %v5112
      %5114 = vmatmul.f32.gmra.mxu0 %v5000
      %v5115 = vpop.f32.mrf.mxu0
      %v5116 = vadd.f32 0.0, %v5115
      %5117 = vmatmul.f32.gmra.mxu0 %v5003
      %v5118 = vpop.f32.mrf.mxu0
      %v5119 = vadd.f32 0.0, %v5118
      %5120 = vmatmul.f32.gmra.mxu0 %v5006
      %v5121 = vpop.f32.mrf.mxu0
      %v5122 = vadd.f32 0.0, %v5121
      %5123 = vmatmul.f32.gmra.mxu0 %v5009
      %v5124 = vpop.f32.mrf.mxu0
      %v5125 = vadd.f32 0.0, %v5124
      %5126 = vmatmul.f32.gmra.mxu0 %v5012
      %v5127 = vpop.f32.mrf.mxu0
      %v5128 = vadd.f32 0.0, %v5127
      %5129 = vmatmul.f32.gmra.mxu0 %v5015
      %v5130 = vpop.f32.mrf.mxu0
      %v5131 = vadd.f32 0.0, %v5130
      %5132 = vmatmul.f32.gmra.mxu0 %v5018
      %v5133 = vpop.f32.mrf.mxu0
      %v5134 = vadd.f32 0.0, %v5133
      %5135 = vmatmul.f32.gmra.mxu0 %v5021
      %v5136 = vpop.f32.mrf.mxu0
      %v5137 = vadd.f32 0.0, %v5136
      %5138 = vmatmul.f32.gmra.mxu0 %v5024
      %v5139 = vpop.f32.mrf.mxu0
      %v5140 = vadd.f32 0.0, %v5139
      %5141 = vmatmul.f32.gmra.mxu0 %v5027
      %v5142 = vpop.f32.mrf.mxu0
      %v5143 = vadd.f32 0.0, %v5142
      %5144 = vmatmul.f32.gmra.mxu0 %v5030
      %v5145 = vpop.f32.mrf.mxu0
      %v5146 = vadd.f32 0.0, %v5145
      %5147 = vmatmul.f32.gmra.mxu0 %v5033
      %v5148 = vpop.f32.mrf.mxu0
      %v5149 = vadd.f32 0.0, %v5148
      %5150 = vdwg.mxu0
      %v5151 = vadd.f32 %v4873, %v5056
      %v5152 = vadd.f32 %v4874, %v5059
      %v5153 = vadd.f32 %v4875, %v5062
      %v5154 = vadd.f32 %v4876, %v5065
      %v5155 = vadd.f32 %v4877, %v5068
      %v5156 = vadd.f32 %v4878, %v5071
      %v5157 = vadd.f32 %v4879, %v5074
      %v5158 = vadd.f32 %v4880, %v5077
      %v5159 = vadd.f32 %v4881, %v5080
      %v5160 = vadd.f32 %v4882, %v5083
      %v5161 = vadd.f32 %v4883, %v5086
      %v5162 = vadd.f32 %v4884, %v5089
      %v5163 = vadd.f32 %v4885, %v5092
      %v5164 = vadd.f32 %v4886, %v5095
      %v5165 = vadd.f32 %v4887, %v5098
      %v5166 = vadd.f32 %v4888, %v5101
      %v5167 = vadd.f32 %v4889, %v5104
      %v5168 = vadd.f32 %v4890, %v5107
      %v5169 = vadd.f32 %v4891, %v5110
      %v5170 = vadd.f32 %v4892, %v5113
      %v5171 = vadd.f32 %v4893, %v5116
      %v5172 = vadd.f32 %v4894, %v5119
      %v5173 = vadd.f32 %v4895, %v5122
      %v5174 = vadd.f32 %v4896, %v5125
      %v5175 = vadd.f32 %v4897, %v5128
      %v5176 = vadd.f32 %v4898, %v5131
      %v5177 = vadd.f32 %v4899, %v5134
      %v5178 = vadd.f32 %v4900, %v5137
      %v5179 = vadd.f32 %v4901, %v5140
      %v5180 = vadd.f32 %v4902, %v5143
      %v5181 = vadd.f32 %v4903, %v5146
      %v5182 = vadd.f32 %v4904, %v5149
      %v5183 = vld [vmem:[%s4626 + $0x4] sm:$0xff]
      %v5184 = vld [vmem:[%s4626 + $0xc] sm:$0xff]
      %v5185 = vld [vmem:[%s4626 + $0x1c] sm:$0xff]
      %v5186 = vld [vmem:[%s4626 + $0x24] sm:$0xff]
      %v5187 = vld [vmem:[%s4626 + $0x34] sm:$0xff]
      %v5188 = vld [vmem:[%s4626 + $0x3c] sm:$0xff]
      %v5189 = vld [vmem:[%s4626 + $0x4c] sm:$0xff]
      %v5190 = vld [vmem:[%s4626 + $0x54] sm:$0xff]
      %v5191 = vld [vmem:[%s4626 + $0x64] sm:$0xff]
      %v5192 = vld [vmem:[%s4626 + $0x6c] sm:$0xff]
      %v5193 = vld [vmem:[%s4626 + $0x7c] sm:$0xff]
      %v5194 = vld [vmem:[%s4626 + $0x84] sm:$0xff]
      %v5195 = vld [vmem:[%s4626 + $0x94] sm:$0xff]
      %v5196 = vld [vmem:[%s4626 + $0x9c] sm:$0xff]
      %v5197 = vld [vmem:[%s4626 + $0xac] sm:$0xff]
      %v5198 = vld [vmem:[%s4626 + $0xb4] sm:$0xff]
      %v5199 = vld [vmem:[%s4626 + $0xc4] sm:$0xff]
      %v5200 = vld [vmem:[%s4626 + $0xcc] sm:$0xff]
      %v5201 = vld [vmem:[%s4626 + $0xdc] sm:$0xff]
      %v5202 = vld [vmem:[%s4626 + $0xe4] sm:$0xff]
      %v5203 = vld [vmem:[%s4626 + $0xf4] sm:$0xff]
      %v5204 = vld [vmem:[%s4626 + $0xfc] sm:$0xff]
      %v5205 = vld [vmem:[%s4626 + $0x10c] sm:$0xff]
      %v5206 = vld [vmem:[%s4626 + $0x114] sm:$0xff]
      %v5207 = vld [vmem:[%s4626 + $0x124] sm:$0xff]
      %v5208 = vld [vmem:[%s4626 + $0x12c] sm:$0xff]
      %v5209 = vld [vmem:[%s4626 + $0x13c] sm:$0xff]
      %v5210 = vld [vmem:[%s4626 + $0x144] sm:$0xff]
      %v5211 = vld [vmem:[%s4626 + $0x154] sm:$0xff]
      %v5212 = vld [vmem:[%s4626 + $0x15c] sm:$0xff]
      %v5213 = vld [vmem:[%s4626 + $0x16c] sm:$0xff]
      %v5214 = vld [vmem:[%s4626 + $0x174] sm:$0xff]
      %s5215 = scalar_lea.vmem %s3, 32
      %v5216 = vld [vmem:[%s5215] sm:$0xf]
      %v5218 = vsel %vm225, %v5183, 0
      %v5221 = vsel %vm225, %v5184, 0
      %v5224 = vsel %vm225, %v5185, 0
      %v5227 = vsel %vm225, %v5186, 0
      %v5230 = vsel %vm225, %v5187, 0
      %v5233 = vsel %vm225, %v5188, 0
      %v5236 = vsel %vm225, %v5189, 0
      %v5239 = vsel %vm225, %v5190, 0
      %v5242 = vsel %vm225, %v5191, 0
      %v5245 = vsel %vm225, %v5192, 0
      %v5248 = vsel %vm225, %v5193, 0
      %v5251 = vsel %vm225, %v5194, 0
      %v5254 = vsel %vm225, %v5195, 0
      %v5257 = vsel %vm225, %v5196, 0
      %v5260 = vsel %vm225, %v5197, 0
      %v5263 = vsel %vm225, %v5198, 0
      %v5266 = vsel %vm225, %v5199, 0
      %v5269 = vsel %vm225, %v5200, 0
      %v5272 = vsel %vm225, %v5201, 0
      %v5275 = vsel %vm225, %v5202, 0
      %v5278 = vsel %vm225, %v5203, 0
      %v5281 = vsel %vm225, %v5204, 0
      %v5284 = vsel %vm225, %v5205, 0
      %v5287 = vsel %vm225, %v5206, 0
      %v5290 = vsel %vm225, %v5207, 0
      %v5293 = vsel %vm225, %v5208, 0
      %v5296 = vsel %vm225, %v5209, 0
      %v5299 = vsel %vm225, %v5210, 0
      %v5302 = vsel %vm225, %v5211, 0
      %v5305 = vsel %vm225, %v5212, 0
      %v5308 = vsel %vm225, %v5213, 0
      %v5311 = vsel %vm225, %v5214, 0
      %v5314 = vsel %vm471, %v5216, 0
      %5316 = vmatpush.msra.mxu0 0.0
      %5317 = vmatpush.msra.mxu0 0.0
      %5318 = vmatpush.msra.mxu0 0.0
      %5319 = vmatpush.msra.mxu0 0.0
      %5320 = vmatpush.msra.mxu0 0.0
      %5321 = vmatpush.msra.mxu0 0.0
      %5322 = vmatpush.msra.mxu0 0.0
      %5323 = vmatpush.msra.mxu0 0.0
      %5324 = vmatpush.msra.mxu0 0.0
      %5325 = vmatpush.msra.mxu0 0.0
      %5326 = vmatpush.msra.mxu0 0.0
      %5327 = vmatpush.msra.mxu0 0.0
      %5328 = vmatpush.msra.mxu0 0.0
      %5329 = vmatpush.msra.mxu0 0.0
      %5330 = vmatpush.msra.mxu0 0.0
      %5331 = vmatpush.msra.mxu0 %v5314
      %5332 = vmatmul.f32.gmra.mxu0 %v5218
      %v5333 = vpop.f32.mrf.mxu0
      %v5334 = vadd.f32 0.0, %v5333
      %5335 = vmatmul.f32.gmra.mxu0 %v5221
      %v5336 = vpop.f32.mrf.mxu0
      %v5337 = vadd.f32 0.0, %v5336
      %5338 = vmatmul.f32.gmra.mxu0 %v5224
      %v5339 = vpop.f32.mrf.mxu0
      %v5340 = vadd.f32 0.0, %v5339
      %5341 = vmatmul.f32.gmra.mxu0 %v5227
      %v5342 = vpop.f32.mrf.mxu0
      %v5343 = vadd.f32 0.0, %v5342
      %5344 = vmatmul.f32.gmra.mxu0 %v5230
      %v5345 = vpop.f32.mrf.mxu0
      %v5346 = vadd.f32 0.0, %v5345
      %5347 = vmatmul.f32.gmra.mxu0 %v5233
      %v5348 = vpop.f32.mrf.mxu0
      %v5349 = vadd.f32 0.0, %v5348
      %5350 = vmatmul.f32.gmra.mxu0 %v5236
      %v5351 = vpop.f32.mrf.mxu0
      %v5352 = vadd.f32 0.0, %v5351
      %5353 = vmatmul.f32.gmra.mxu0 %v5239
      %v5354 = vpop.f32.mrf.mxu0
      %v5355 = vadd.f32 0.0, %v5354
      %5356 = vmatmul.f32.gmra.mxu0 %v5242
      %v5357 = vpop.f32.mrf.mxu0
      %v5358 = vadd.f32 0.0, %v5357
      %5359 = vmatmul.f32.gmra.mxu0 %v5245
      %v5360 = vpop.f32.mrf.mxu0
      %v5361 = vadd.f32 0.0, %v5360
      %5362 = vmatmul.f32.gmra.mxu0 %v5248
      %v5363 = vpop.f32.mrf.mxu0
      %v5364 = vadd.f32 0.0, %v5363
      %5365 = vmatmul.f32.gmra.mxu0 %v5251
      %v5366 = vpop.f32.mrf.mxu0
      %v5367 = vadd.f32 0.0, %v5366
      %5368 = vmatmul.f32.gmra.mxu0 %v5254
      %v5369 = vpop.f32.mrf.mxu0
      %v5370 = vadd.f32 0.0, %v5369
      %5371 = vmatmul.f32.gmra.mxu0 %v5257
      %v5372 = vpop.f32.mrf.mxu0
      %v5373 = vadd.f32 0.0, %v5372
      %5374 = vmatmul.f32.gmra.mxu0 %v5260
      %v5375 = vpop.f32.mrf.mxu0
      %v5376 = vadd.f32 0.0, %v5375
      %5377 = vmatmul.f32.gmra.mxu0 %v5263
      %v5378 = vpop.f32.mrf.mxu0
      %v5379 = vadd.f32 0.0, %v5378
      %5380 = vmatmul.f32.gmra.mxu0 %v5266
      %v5381 = vpop.f32.mrf.mxu0
      %v5382 = vadd.f32 0.0, %v5381
      %5383 = vmatmul.f32.gmra.mxu0 %v5269
      %v5384 = vpop.f32.mrf.mxu0
      %v5385 = vadd.f32 0.0, %v5384
      %5386 = vmatmul.f32.gmra.mxu0 %v5272
      %v5387 = vpop.f32.mrf.mxu0
      %v5388 = vadd.f32 0.0, %v5387
      %5389 = vmatmul.f32.gmra.mxu0 %v5275
      %v5390 = vpop.f32.mrf.mxu0
      %v5391 = vadd.f32 0.0, %v5390
      %5392 = vmatmul.f32.gmra.mxu0 %v5278
      %v5393 = vpop.f32.mrf.mxu0
      %v5394 = vadd.f32 0.0, %v5393
      %5395 = vmatmul.f32.gmra.mxu0 %v5281
      %v5396 = vpop.f32.mrf.mxu0
      %v5397 = vadd.f32 0.0, %v5396
      %5398 = vmatmul.f32.gmra.mxu0 %v5284
      %v5399 = vpop.f32.mrf.mxu0
      %v5400 = vadd.f32 0.0, %v5399
      %5401 = vmatmul.f32.gmra.mxu0 %v5287
      %v5402 = vpop.f32.mrf.mxu0
      %v5403 = vadd.f32 0.0, %v5402
      %5404 = vmatmul.f32.gmra.mxu0 %v5290
      %v5405 = vpop.f32.mrf.mxu0
      %v5406 = vadd.f32 0.0, %v5405
      %5407 = vmatmul.f32.gmra.mxu0 %v5293
      %v5408 = vpop.f32.mrf.mxu0
      %v5409 = vadd.f32 0.0, %v5408
      %5410 = vmatmul.f32.gmra.mxu0 %v5296
      %v5411 = vpop.f32.mrf.mxu0
      %v5412 = vadd.f32 0.0, %v5411
      %5413 = vmatmul.f32.gmra.mxu0 %v5299
      %v5414 = vpop.f32.mrf.mxu0
      %v5415 = vadd.f32 0.0, %v5414
      %5416 = vmatmul.f32.gmra.mxu0 %v5302
      %v5417 = vpop.f32.mrf.mxu0
      %v5418 = vadd.f32 0.0, %v5417
      %5419 = vmatmul.f32.gmra.mxu0 %v5305
      %v5420 = vpop.f32.mrf.mxu0
      %v5421 = vadd.f32 0.0, %v5420
      %5422 = vmatmul.f32.gmra.mxu0 %v5308
      %v5423 = vpop.f32.mrf.mxu0
      %v5424 = vadd.f32 0.0, %v5423
      %5425 = vmatmul.f32.gmra.mxu0 %v5311
      %v5426 = vpop.f32.mrf.mxu0
      %v5427 = vadd.f32 0.0, %v5426
      %5428 = vdwg.mxu0
      %v5429 = vadd.f32 %v5151, %v5334
      %v5430 = vadd.f32 %v5152, %v5337
      %v5431 = vadd.f32 %v5153, %v5340
      %v5432 = vadd.f32 %v5154, %v5343
      %v5433 = vadd.f32 %v5155, %v5346
      %v5434 = vadd.f32 %v5156, %v5349
      %v5435 = vadd.f32 %v5157, %v5352
      %v5436 = vadd.f32 %v5158, %v5355
      %v5437 = vadd.f32 %v5159, %v5358
      %v5438 = vadd.f32 %v5160, %v5361
      %v5439 = vadd.f32 %v5161, %v5364
      %v5440 = vadd.f32 %v5162, %v5367
      %v5441 = vadd.f32 %v5163, %v5370
      %v5442 = vadd.f32 %v5164, %v5373
      %v5443 = vadd.f32 %v5165, %v5376
      %v5444 = vadd.f32 %v5166, %v5379
      %v5445 = vadd.f32 %v5167, %v5382
      %v5446 = vadd.f32 %v5168, %v5385
      %v5447 = vadd.f32 %v5169, %v5388
      %v5448 = vadd.f32 %v5170, %v5391
      %v5449 = vadd.f32 %v5171, %v5394
      %v5450 = vadd.f32 %v5172, %v5397
      %v5451 = vadd.f32 %v5173, %v5400
      %v5452 = vadd.f32 %v5174, %v5403
      %v5453 = vadd.f32 %v5175, %v5406
      %v5454 = vadd.f32 %v5176, %v5409
      %v5455 = vadd.f32 %v5177, %v5412
      %v5456 = vadd.f32 %v5178, %v5415
      %v5457 = vadd.f32 %v5179, %v5418
      %v5458 = vadd.f32 %v5180, %v5421
      %v5459 = vadd.f32 %v5181, %v5424
      %v5460 = vadd.f32 %v5182, %v5427
      %v5461 = vmax.f32 %v5429, 0.0
      %v5462 = vmax.f32 %v5430, 0.0
      %v5463 = vmax.f32 %v5431, 0.0
      %v5464 = vmax.f32 %v5432, 0.0
      %v5465 = vmax.f32 %v5433, 0.0
      %v5466 = vmax.f32 %v5434, 0.0
      %v5467 = vmax.f32 %v5435, 0.0
      %v5468 = vmax.f32 %v5436, 0.0
      %v5469 = vmax.f32 %v5437, 0.0
      %v5470 = vmax.f32 %v5438, 0.0
      %v5471 = vmax.f32 %v5439, 0.0
      %v5472 = vmax.f32 %v5440, 0.0
      %v5473 = vmax.f32 %v5441, 0.0
      %v5474 = vmax.f32 %v5442, 0.0
      %v5475 = vmax.f32 %v5443, 0.0
      %v5476 = vmax.f32 %v5444, 0.0
      %v5477 = vmax.f32 %v5445, 0.0
      %v5478 = vmax.f32 %v5446, 0.0
      %v5479 = vmax.f32 %v5447, 0.0
      %v5480 = vmax.f32 %v5448, 0.0
      %v5481 = vmax.f32 %v5449, 0.0
      %v5482 = vmax.f32 %v5450, 0.0
      %v5483 = vmax.f32 %v5451, 0.0
      %v5484 = vmax.f32 %v5452, 0.0
      %v5485 = vmax.f32 %v5453, 0.0
      %v5486 = vmax.f32 %v5454, 0.0
      %v5487 = vmax.f32 %v5455, 0.0
      %v5488 = vmax.f32 %v5456, 0.0
      %v5489 = vmax.f32 %v5457, 0.0
      %v5490 = vmax.f32 %v5458, 0.0
      %v5491 = vmax.f32 %v5459, 0.0
      %v5492 = vmax.f32 %v5460, 0.0
      %5493 = vst.msk [vmem:[%s224] sm:$0xff] %vm225, %v5461
      %5494 = vst.msk [vmem:[%s224 + $0x8] sm:$0xff] %vm225, %v5462
      %5495 = vst.msk [vmem:[%s224 + $0x10] sm:$0xff] %vm225, %v5463
      %5496 = vst.msk [vmem:[%s224 + $0x18] sm:$0xff] %vm225, %v5464
      %5497 = vst.msk [vmem:[%s224 + $0x20] sm:$0xff] %vm225, %v5465
      %5498 = vst.msk [vmem:[%s224 + $0x28] sm:$0xff] %vm225, %v5466
      %5499 = vst.msk [vmem:[%s224 + $0x30] sm:$0xff] %vm225, %v5467
      %5500 = vst.msk [vmem:[%s224 + $0x38] sm:$0xff] %vm225, %v5468
      %5501 = vst.msk [vmem:[%s224 + $0x40] sm:$0xff] %vm225, %v5469
      %5502 = vst.msk [vmem:[%s224 + $0x48] sm:$0xff] %vm225, %v5470
      %5503 = vst.msk [vmem:[%s224 + $0x50] sm:$0xff] %vm225, %v5471
      %5504 = vst.msk [vmem:[%s224 + $0x58] sm:$0xff] %vm225, %v5472
      %5505 = vst.msk [vmem:[%s224 + $0x60] sm:$0xff] %vm225, %v5473
      %5506 = vst.msk [vmem:[%s224 + $0x68] sm:$0xff] %vm225, %v5474
      %5507 = vst.msk [vmem:[%s224 + $0x70] sm:$0xff] %vm225, %v5475
      %5508 = vst.msk [vmem:[%s224 + $0x78] sm:$0xff] %vm225, %v5476
      %5509 = vst.msk [vmem:[%s224 + $0x80] sm:$0xff] %vm225, %v5477
      %5510 = vst.msk [vmem:[%s224 + $0x88] sm:$0xff] %vm225, %v5478
      %5511 = vst.msk [vmem:[%s224 + $0x90] sm:$0xff] %vm225, %v5479
      %5512 = vst.msk [vmem:[%s224 + $0x98] sm:$0xff] %vm225, %v5480
      %5513 = vst.msk [vmem:[%s224 + $0xa0] sm:$0xff] %vm225, %v5481
      %5514 = vst.msk [vmem:[%s224 + $0xa8] sm:$0xff] %vm225, %v5482
      %5515 = vst.msk [vmem:[%s224 + $0xb0] sm:$0xff] %vm225, %v5483
      %5516 = vst.msk [vmem:[%s224 + $0xb8] sm:$0xff] %vm225, %v5484
      %5517 = vst.msk [vmem:[%s224 + $0xc0] sm:$0xff] %vm225, %v5485
      %5518 = vst.msk [vmem:[%s224 + $0xc8] sm:$0xff] %vm225, %v5486
      %5519 = vst.msk [vmem:[%s224 + $0xd0] sm:$0xff] %vm225, %v5487
      %5520 = vst.msk [vmem:[%s224 + $0xd8] sm:$0xff] %vm225, %v5488
      %5521 = vst.msk [vmem:[%s224 + $0xe0] sm:$0xff] %vm225, %v5489
      %5522 = vst.msk [vmem:[%s224 + $0xe8] sm:$0xff] %vm225, %v5490
      %5523 = vst.msk [vmem:[%s224 + $0xf0] sm:$0xff] %vm225, %v5491
      %5524 = vst.msk [vmem:[%s224 + $0xf8] sm:$0xff] %vm225, %v5492
      %p5525 = scmp.lt.s32.totalorder %s16, 1
      %s5526 = scalar_select %p5525, %s16, 1
      %s5527 = smul.addr %s5526, 32
      %s5528 = smul.addr %s5527, 8
      %s5529 = scalar_lea.vmem %s5, %s5528
      // Predicated region
      $region41: #{tpu_custom_call.1} parent=39 // pred_check
        %p5530 = pneg %p144
      $region42: #{tpu_custom_call.1} parent=39 // pred_check_branch
        %5532 = sbr.rel (%p5530) target = $region44
      $region43: #{tpu_custom_call.1} parent=39 // pred_region
        _
      $region44: #{tpu_custom_call.1} parent=39 // pred_fallthru
        _
    $region40: #{tpu_custom_call.1} parent=5 // pred_fallthru
      _
    %p5533 = scmp.le.s32.totalorder 2, %s11
    // Predicated region
    $region45: #{tpu_custom_call.1} parent=5 // pred_check
      %p5534 = pneg %p5533
    $region46: #{tpu_custom_call.1} parent=5 // pred_check_branch
      %5536 = sbr.rel (%p5534) target = $region48
    $region47: #{tpu_custom_call.1} parent=5 // pred_region
      %s5537 = ssub.s32 %s11, 2
      // Predicated region
      $region49: #{tpu_custom_call.1} parent=47 // pred_check
        %p5538 = pneg %p150
      $region50: #{tpu_custom_call.1} parent=47 // pred_check_branch
        %5540 = sbr.rel (%p5538) target = $region52
      $region51: #{tpu_custom_call.1} parent=47 // pred_region
        %p5541 = scmp.lt.s32.totalorder %s17, 1
        %s5542 = scalar_select %p5541, %s17, 1
        %s5543 = smul.addr %s5542, 32
        %s5544 = smul.addr %s5543, 8
        %s5545 = scalar_lea.vmem %s5, %s5544
      $region52: #{tpu_custom_call.1} parent=47 // pred_fallthru
        _
    $region48: #{tpu_custom_call.1} parent=5 // pred_fallthru
      _
  $region6: #{tpu_custom_call.1} parent=0 // loop_footer
    %s15 = sadd.s32 1, %s11
  $region7: #{tpu_custom_call.1} parent=0 // loop_footer_branch
    %10 = sbr.rel target = $region3
  $region8: #{tpu_custom_call.1} parent=0 // loop_exit
    _

</llo_original>
